<compile_context>
chip_gen: v6e
topology: v6e:2x2x1
jax: 0.10.0
libtpu: 0.0.40
codegen_flags: <defaults>
</compile_context>

<pallas_src>
import functools
import math

import jax
import jax.numpy as jnp
from jax.experimental import pallas as pl
from jax.experimental.pallas import tpu as pltpu


def _disconv_kernel(adj_in_ref, adj_out_ref, feat_ref,
                    wch_ref, bch_ref,
                    w_e_ref, b_e_ref, b_iah_ref, b_oah_ref,
                    w_ih_ref, b_ih_ref, w_hh_ref, b_hh_ref,
                    w1_ref, b1_ref, w2_ref, b2_ref, w3_ref,
                    out_ref, *, channels, c_dim, n_nodes, iterations, beta):
    """One batch element: channel projection + GRU message passing + alpha-blend."""
    C = c_dim
    N = n_nodes

    feat = feat_ref[0]                    # (N, in_dim) f32
    adj_in = adj_in_ref[0]                # (channels*N, channels*N) block-diag mask
    adj_out = adj_out_ref[0]

    feat_b = feat.astype(jnp.bfloat16)

    # All per-channel projections in one matmul: (N, in_dim) @ (in_dim, channels*C).
    z_all = jnp.dot(feat_b, wch_ref[...],
                    preferred_element_type=jnp.float32) + bch_ref[...]
    # Restack channels along the sublane axis: (N, channels*C) -> (channels*N, C).
    # (Lane-aligned static slices; done once, outside the iteration loop.)
    h = jnp.concatenate([z_all[:, k * C:(k + 1) * C] for k in range(channels)],
                        axis=0)
    # F.normalize(dim=2): L2 over features, eps=1e-12.
    nrm = jnp.sqrt(jnp.sum(h * h, axis=-1, keepdims=True))
    h = h / jnp.maximum(nrm, 1e-12)

    inv_beta = 1.0 / beta
    # TODO(synk): for large `iterations`, switch this unrolled Python loop to
    # lax.fori_loop carrying h to bound vreg pressure / code size.
    for _ in range(iterations):
        hb = h.astype(jnp.bfloat16)
        # Stacked attention: one (channels*N, C) @ (C, channels*N) MXU push.
        # Cross-channel products are zeroed by the block-diagonal adjacency masks
        # (adjacency is nonnegative 0/1, so `* adj` subsumes the torch where(adj>0)).
        attn = jax.lax.dot_general(hb, hb, (((1,), (1,)), ((), ())),
                                   preferred_element_type=jnp.float32)
        att_in = attn * adj_in * inv_beta
        att_out = attn * adj_out * inv_beta
        # L1 normalize over the source-node axis (cross-channel cols are already 0,
        # so the full-row sum equals the per-channel row sum).
        att_in = att_in / jnp.maximum(
            jnp.sum(jnp.abs(att_in), axis=-1, keepdims=True), 1e-12)
        att_out = att_out / jnp.maximum(
            jnp.sum(jnp.abs(att_out), axis=-1, keepdims=True), 1e-12)

        # Fused edge projections: one (channels*N, C) @ (C, 2C) matmul.
        e_cat = jnp.dot(hb, w_e_ref[...],
                        preferred_element_type=jnp.float32) + b_e_ref[...]
        e_in = e_cat[:, :C]
        e_out = e_cat[:, C:]

        inp_in = jnp.dot(att_in.astype(jnp.bfloat16), e_in.astype(jnp.bfloat16),
                         preferred_element_type=jnp.float32) + b_iah_ref[...]
        inp_out = jnp.dot(att_out.astype(jnp.bfloat16), e_out.astype(jnp.bfloat16),
                          preferred_element_type=jnp.float32) + b_oah_ref[...]

        # gi = [inp_in | inp_out] @ w_ih^T + b_ih  -- single (.., 2C) @ (2C, 3C) matmul.
        gi = jnp.dot(jnp.concatenate([inp_in, inp_out], axis=1).astype(jnp.bfloat16),
                     w_ih_ref[...], preferred_element_type=jnp.float32) + b_ih_ref[...]
        gh = jnp.dot(hb, w_hh_ref[...],
                     preferred_element_type=jnp.float32) + b_hh_ref[...]

        i_r, i_i, i_n = gi[:, :C], gi[:, C:2 * C], gi[:, 2 * C:]
        h_r, h_i, h_n = gh[:, :C], gh[:, C:2 * C], gh[:, 2 * C:]
        resetgate = jax.nn.sigmoid(i_r + h_r)     # gate math stays f32 (EUP)
        inputgate = jax.nn.sigmoid(i_i + h_i)
        newgate = jnp.tanh(i_n + resetgate * h_n)
        h = newgate + inputgate * (h - newgate)

    # Restack back to (N, channels*C) == torch.cat(out_features, dim=2).
    chan = jnp.concatenate([h[k * N:(k + 1) * N, :] for k in range(channels)],
                           axis=1)

    # Fused alpha-blend stage (was a second pallas_call + HBM roundtrip before).
    q1 = jnp.dot(feat_b, w1_ref[...],
                 preferred_element_type=jnp.float32) + b1_ref[...]
    q2 = jnp.dot(chan.astype(jnp.bfloat16), w2_ref[...],
                 preferred_element_type=jnp.float32) + b2_ref[...]
    s = jax.nn.sigmoid(q1 + q2)
    alpha = jnp.sum(s * w3_ref[...], axis=-1, keepdims=True)   # linear_3 (no bias)
    out_ref[0] = alpha * feat + (1.0 - alpha) * chan


def disconv_pallas(adj, features, p, *, channels, c_dim, iterations, beta):
    B, N, in_dim = features.shape
    C = c_dim
    D = channels * C
    M = channels * N
    assert in_dim == D, "DisConv requires in_dim == channels * c_dim"

    adj_in = adj[:, :, :N]
    adj_out = adj[:, :, N:]

    # Block-diagonal stacked adjacency masks (B, channels*N, channels*N): channel k's
    # (N, N) adjacency sits on the k-th diagonal block, cross-channel blocks are 0.
    # TODO(synk): for large graphs, tile the attention flash-style over source-node
    # blocks instead of materializing the (channels*N)^2 block-diagonal mask.
    eye_c = jnp.eye(channels, dtype=jnp.float32)
    adj_blk_in = jnp.einsum("kl,bij->bkilj", eye_c, adj_in).reshape(B, M, M)
    adj_blk_out = jnp.einsum("kl,bij->bkilj", eye_c, adj_out).reshape(B, M, M)

    bf = jnp.bfloat16
    # Per-channel projection weights stacked column-wise: (in_dim, channels*C),
    # column block k == wch[k].
    wch_cols = jnp.transpose(p["wch"], (1, 0, 2)).reshape(in_dim, D).astype(bf)
    bch_cols = p["bch"].reshape(1, D)                                   # f32
    w_e_cat_t = jnp.concatenate([p["w_ein"].T, p["w_eout"].T], axis=1).astype(bf)  # (C, 2C)
    b_e_cat = jnp.concatenate([p["b_ein"], p["b_eout"]]).reshape(1, 2 * C)
    b_iah = p["b_iah"].reshape(1, C)
    b_oah = p["b_oah"].reshape(1, C)
    w_ih_t = p["w_ih"].T.astype(bf)                                     # (2C, 3C)
    b_ih = p["b_ih"].reshape(1, 3 * C)
    w_hh_t = p["w_hh"].T.astype(bf)                                     # (C, 3C)
    b_hh = p["b_hh"].reshape(1, 3 * C)
    w1_t = p["w1"].T.astype(bf)                                         # (in_dim, D)
    b1 = p["b1"].reshape(1, D)
    w2_t = p["w2"].T.astype(bf)                                         # (D, D)
    b2 = p["b2"].reshape(1, D)
    w3 = p["w3"].reshape(1, D)                                          # f32 (elementwise)

    def _rep(arr):  # full-array block, replicated across the batch grid
        nd = arr.ndim
        return pl.BlockSpec(arr.shape, lambda b, _nd=nd: (0,) * _nd)

    out = pl.pallas_call(
        functools.partial(_disconv_kernel, channels=channels, c_dim=C,
                          n_nodes=N, iterations=iterations, beta=beta),
        out_shape=jax.ShapeDtypeStruct((B, N, D), jnp.float32),
        grid=(B,),
        in_specs=[
            pl.BlockSpec((1, M, M), lambda b: (b, 0, 0)),        # block-diag adj_in
            pl.BlockSpec((1, M, M), lambda b: (b, 0, 0)),        # block-diag adj_out
            pl.BlockSpec((1, N, in_dim), lambda b: (b, 0, 0)),   # features
            _rep(wch_cols), _rep(bch_cols),
            _rep(w_e_cat_t), _rep(b_e_cat),
            _rep(b_iah), _rep(b_oah),
            _rep(w_ih_t), _rep(b_ih), _rep(w_hh_t), _rep(b_hh),
            _rep(w1_t), _rep(b1), _rep(w2_t), _rep(b2), _rep(w3),
        ],
        out_specs=pl.BlockSpec((1, N, D), lambda b: (b, 0, 0)),  # lane-dense output
        compiler_params=pltpu.CompilerParams(
            dimension_semantics=("parallel",)),
    )(adj_blk_in, adj_blk_out, features, wch_cols, bch_cols,
      w_e_cat_t, b_e_cat, b_iah, b_oah,
      w_ih_t, b_ih, w_hh_t, b_hh, w1_t, b1, w2_t, b2, w3)
    return out


def make_params(key, in_dim, channels, c_dim):
    """Deterministic init, mirroring reset_parameters(): U(-1/sqrt(C), 1/sqrt(C))."""
    C = c_dim
    D = channels * C
    stdv = 1.0 / math.sqrt(C)

    def u(k, shape):
        return jax.random.uniform(k, shape, jnp.float32, minval=-stdv, maxval=stdv)

    ks = jax.random.split(key, 17)
    p = {
        "wch": u(ks[0], (channels, in_dim, C)),   # weight_list (stacked)
        "bch": u(ks[1], (channels, C)),           # bias_list (stacked)
        "w_ih": u(ks[2], (3 * C, 2 * C)),
        "w_hh": u(ks[3], (3 * C, C)),
        "b_ih": u(ks[4], (3 * C,)),
        "b_hh": u(ks[5], (3 * C,)),
        "b_iah": u(ks[6], (C,)),
        "b_oah": u(ks[7], (C,)),
        "w_ein": u(ks[8], (C, C)),
        "b_ein": u(ks[9], (C,)),
        "w_eout": u(ks[10], (C, C)),
        "b_eout": u(ks[11], (C,)),
        "w1": u(ks[12], (D, in_dim)),
        "b1": u(ks[13], (D,)),
        "w2": u(ks[14], (D, D)),
        "b2": u(ks[15], (D,)),
        "w3": u(ks[16], (1, D)),
    }
    # TODO(synk): linear_edge_f exists in __init__ but is unused in forward; omitted.
    return p


def disconv_reference(adj, features, p, *, channels, c_dim, iterations, beta):
    """Pure-JAX f32 reference mirroring the torch forward, for validation."""
    B, N, _ = features.shape
    C = c_dim
    adj_in, adj_out = adj[:, :, :N], adj[:, :, N:]
    outs = []
    for k in range(channels):
        z = features @ p["wch"][k] + p["bch"][k]
        z = z / jnp.maximum(jnp.linalg.norm(z, axis=-1, keepdims=True), 1e-12)
        h = z
        for _ in range(iterations):
            attn = jnp.einsum("bnd,bmd->bnm", h, h)
            ain = jnp.where(adj_in > 0, attn, 0.0) * adj_in / beta
            aout = jnp.where(adj_out > 0, attn, 0.0) * adj_out / beta
            ain = ain / jnp.maximum(jnp.sum(jnp.abs(ain), axis=2, keepdims=True), 1e-12)
            aout = aout / jnp.maximum(jnp.sum(jnp.abs(aout), axis=2, keepdims=True), 1e-12)
            e_in = h @ p["w_ein"].T + p["b_ein"]
            e_out = h @ p["w_eout"].T + p["b_eout"]
            inp_in = jnp.einsum("bnm,bmc->bnc", ain, e_in) + p["b_iah"]
            inp_out = jnp.einsum("bnm,bmc->bnc", aout, e_out) + p["b_oah"]
            cat = jnp.concatenate([inp_in, inp_out], axis=2)
            gi = cat @ p["w_ih"].T + p["b_ih"]
            gh = h @ p["w_hh"].T + p["b_hh"]
            i_r, i_i, i_n = gi[..., :C], gi[..., C:2 * C], gi[..., 2 * C:]
            h_r, h_i, h_n = gh[..., :C], gh[..., C:2 * C], gh[..., 2 * C:]
            r = jax.nn.sigmoid(i_r + h_r)
            u = jax.nn.sigmoid(i_i + h_i)
            n = jnp.tanh(i_n + r * h_n)
            h = n + u * (h - n)
        outs.append(h)
    output = jnp.concatenate(outs, axis=2)
    q1 = features @ p["w1"].T + p["b1"]
    q2 = output @ p["w2"].T + p["b2"]
    alpha = jax.nn.sigmoid(q1 + q2) @ p["w3"].T
    return alpha * features + (1.0 - alpha) * output


if __name__ == "__main__":
    B, N = 2, 8
    channels, c_dim = 4, 128
    in_dim = channels * c_dim          # required: alpha-blend adds features and output
    iterations, beta = 2, 1.0

    key = jax.random.PRNGKey(0)
    k_adj, k_feat, k_par = jax.random.split(key, 3)
    adj = (jax.random.uniform(k_adj, (B, N, 2 * N)) > 0.5).astype(jnp.float32)
    features = jax.random.normal(k_feat, (B, N, in_dim), jnp.float32)
    params = make_params(k_par, in_dim, channels, c_dim)

    out = disconv_pallas(adj, features, params, channels=channels, c_dim=c_dim,
                         iterations=iterations, beta=beta)
    out = jax.block_until_ready(out)

    ref = disconv_reference(adj, features, params, channels=channels, c_dim=c_dim,
                            iterations=iterations, beta=beta)
    assert out.shape == (B, N, in_dim)
    max_err = float(jnp.max(jnp.abs(out - ref)))
    # Tolerance slightly widened vs. the pure-f32 version: kernel matmuls run with
    # bf16 MXU operands (f32 accumulation) while the reference is full f32.
    assert jnp.allclose(out, ref, atol=2e-2, rtol=2e-2), f"max_err={max_err}"
    print("KERNEL_OK")
</pallas_src>

<mosaic_0001>
module attributes {stable_mosaic.version = 11 : i64} {
  func.func @_disconv_kernel(%arg0: i32, %arg1: memref<1x32x32xf32, #tpu.memory_space<vmem>>, %arg2: memref<1x32x32xf32, #tpu.memory_space<vmem>>, %arg3: memref<1x8x512xf32, #tpu.memory_space<vmem>>, %arg4: memref<512x512xbf16, #tpu.memory_space<vmem>>, %arg5: memref<1x512xf32, #tpu.memory_space<vmem>>, %arg6: memref<128x256xbf16, #tpu.memory_space<vmem>>, %arg7: memref<1x256xf32, #tpu.memory_space<vmem>>, %arg8: memref<1x128xf32, #tpu.memory_space<vmem>>, %arg9: memref<1x128xf32, #tpu.memory_space<vmem>>, %arg10: memref<256x384xbf16, #tpu.memory_space<vmem>>, %arg11: memref<1x384xf32, #tpu.memory_space<vmem>>, %arg12: memref<128x384xbf16, #tpu.memory_space<vmem>>, %arg13: memref<1x384xf32, #tpu.memory_space<vmem>>, %arg14: memref<512x512xbf16, #tpu.memory_space<vmem>>, %arg15: memref<1x512xf32, #tpu.memory_space<vmem>>, %arg16: memref<512x512xbf16, #tpu.memory_space<vmem>>, %arg17: memref<1x512xf32, #tpu.memory_space<vmem>>, %arg18: memref<1x512xf32, #tpu.memory_space<vmem>>, %arg19: memref<1x8x512xf32, #tpu.memory_space<vmem>>) attributes {dimension_semantics = [#tpu.dimension_semantics<parallel>], iteration_bounds = array<i64: 2>, scalar_prefetch = 0 : i64, scratch_operands = 0 : i64, tpu.core_type = #tpu.core_type<tc>, window_params = [{transform_indices = @transform_0, window_bounds = array<i64: 1, 32, 32>}, {transform_indices = @transform_1, window_bounds = array<i64: 1, 32, 32>}, {transform_indices = @transform_2, window_bounds = array<i64: 1, 8, 512>}, {pipeline_mode = #tpu.pipeline_mode<synchronous>, transform_indices = @transform_3, window_bounds = array<i64: 512, 512>}, {pipeline_mode = #tpu.pipeline_mode<synchronous>, transform_indices = @transform_4, window_bounds = array<i64: 1, 512>}, {pipeline_mode = #tpu.pipeline_mode<synchronous>, transform_indices = @transform_5, window_bounds = array<i64: 128, 256>}, {pipeline_mode = #tpu.pipeline_mode<synchronous>, transform_indices = @transform_6, window_bounds = array<i64: 1, 256>}, {pipeline_mode = #tpu.pipeline_mode<synchronous>, transform_indices = @transform_7, window_bounds = array<i64: 1, 128>}, {pipeline_mode = #tpu.pipeline_mode<synchronous>, transform_indices = @transform_8, window_bounds = array<i64: 1, 128>}, {pipeline_mode = #tpu.pipeline_mode<synchronous>, transform_indices = @transform_9, window_bounds = array<i64: 256, 384>}, {pipeline_mode = #tpu.pipeline_mode<synchronous>, transform_indices = @transform_10, window_bounds = array<i64: 1, 384>}, {pipeline_mode = #tpu.pipeline_mode<synchronous>, transform_indices = @transform_11, window_bounds = array<i64: 128, 384>}, {pipeline_mode = #tpu.pipeline_mode<synchronous>, transform_indices = @transform_12, window_bounds = array<i64: 1, 384>}, {pipeline_mode = #tpu.pipeline_mode<synchronous>, transform_indices = @transform_13, window_bounds = array<i64: 512, 512>}, {pipeline_mode = #tpu.pipeline_mode<synchronous>, transform_indices = @transform_14, window_bounds = array<i64: 1, 512>}, {pipeline_mode = #tpu.pipeline_mode<synchronous>, transform_indices = @transform_15, window_bounds = array<i64: 512, 512>}, {pipeline_mode = #tpu.pipeline_mode<synchronous>, transform_indices = @transform_16, window_bounds = array<i64: 1, 512>}, {pipeline_mode = #tpu.pipeline_mode<synchronous>, transform_indices = @transform_17, window_bounds = array<i64: 1, 512>}, {transform_indices = @transform_18, window_bounds = array<i64: 1, 8, 512>}]} {
    %c0 = arith.constant 0 : index
    %c0_0 = arith.constant 0 : index
    %c0_1 = arith.constant 0 : index
    %0 = vector.load %arg3[%c0, %c0_0, %c0_1] : memref<1x8x512xf32, #tpu.memory_space<vmem>>, vector<1x8x512xf32>
    %1 = vector.shape_cast %0 : vector<1x8x512xf32> to vector<8x512xf32>
    %c0_2 = arith.constant 0 : index
    %c0_3 = arith.constant 0 : index
    %c0_4 = arith.constant 0 : index
    %2 = vector.load %arg1[%c0_2, %c0_3, %c0_4] : memref<1x32x32xf32, #tpu.memory_space<vmem>>, vector<1x32x32xf32>
    %3 = vector.shape_cast %2 : vector<1x32x32xf32> to vector<32x32xf32>
    %c0_5 = arith.constant 0 : index
    %c0_6 = arith.constant 0 : index
    %c0_7 = arith.constant 0 : index
    %4 = vector.load %arg2[%c0_5, %c0_6, %c0_7] : memref<1x32x32xf32, #tpu.memory_space<vmem>>, vector<1x32x32xf32>
    %5 = vector.shape_cast %4 : vector<1x32x32xf32> to vector<32x32xf32>
    %6 = arith.truncf %1 : vector<8x512xf32> to vector<8x512xbf16>
    %c0_8 = arith.constant 0 : index
    %c0_9 = arith.constant 0 : index
    %7 = vector.load %arg4[%c0_8, %c0_9] : memref<512x512xbf16, #tpu.memory_space<vmem>>, vector<512x512xbf16>
    %cst = arith.constant dense<0.000000e+00> : vector<8x512xf32>
    %8 = tpu.matmul %6, %7, %cst {dimension_numbers = #tpu.dot_dimension_numbers<[1], [0], [0], [1], [0, 0, 1, 1], [], []>} : vector<8x512xbf16>, vector<512x512xbf16>, vector<8x512xf32> -> vector<8x512xf32>
    %c0_10 = arith.constant 0 : index
    %c0_11 = arith.constant 0 : index
    %9 = vector.load %arg5[%c0_10, %c0_11] : memref<1x512xf32, #tpu.memory_space<vmem>>, vector<1x512xf32>
    %10 = vector.broadcast %9 : vector<1x512xf32> to vector<8x512xf32>
    %11 = arith.addf %8, %10 : vector<8x512xf32>
    %12 = vector.extract_strided_slice %11 {offsets = [0, 0], sizes = [8, 128], strides = [1, 1]} : vector<8x512xf32> to vector<8x128xf32>
    %13 = vector.extract_strided_slice %11 {offsets = [0, 128], sizes = [8, 128], strides = [1, 1]} : vector<8x512xf32> to vector<8x128xf32>
    %14 = vector.extract_strided_slice %11 {offsets = [0, 256], sizes = [8, 128], strides = [1, 1]} : vector<8x512xf32> to vector<8x128xf32>
    %15 = vector.extract_strided_slice %11 {offsets = [0, 384], sizes = [8, 128], strides = [1, 1]} : vector<8x512xf32> to vector<8x128xf32>
    %16 = tpu.concatenate %12, %13, %14, %15 in 0 : vector<8x128xf32>, vector<8x128xf32>, vector<8x128xf32>, vector<8x128xf32> -> vector<32x128xf32>
    %17 = arith.mulf %16, %16 : vector<32x128xf32>
    %cst_12 = arith.constant dense<0.000000e+00> : vector<32xf32>
    %18 = vector.multi_reduction <add>, %17, %cst_12 [1] : vector<32x128xf32> to vector<32xf32>
    %19 = vector.shape_cast %18 : vector<32xf32> to vector<32x1xf32>
    %20 = math.sqrt %19 : vector<32x1xf32>
    %cst_13 = arith.constant 9.99999996E-13 : f32
    %21 = vector.broadcast %cst_13 : f32 to vector<32x1xf32>
    %22 = arith.maximumf %20, %21 : vector<32x1xf32>
    %23 = vector.broadcast %22 : vector<32x1xf32> to vector<32x128xf32>
    %24 = arith.divf %16, %23 : vector<32x128xf32>
    %25 = arith.truncf %24 : vector<32x128xf32> to vector<32x128xbf16>
    %cst_14 = arith.constant dense<0.000000e+00> : vector<32x32xf32>
    %26 = tpu.matmul %25, %25, %cst_14 {dimension_numbers = #tpu.dot_dimension_numbers<[1], [1], [0], [0], [0, 0, 1, 0], [], []>} : vector<32x128xbf16>, vector<32x128xbf16>, vector<32x32xf32> -> vector<32x32xf32>
    %27 = arith.mulf %26, %3 : vector<32x32xf32>
    %cst_15 = arith.constant 1.000000e+00 : f32
    %28 = vector.broadcast %cst_15 : f32 to vector<32x32xf32>
    %29 = arith.mulf %27, %28 : vector<32x32xf32>
    %30 = arith.mulf %26, %5 : vector<32x32xf32>
    %cst_16 = arith.constant 1.000000e+00 : f32
    %31 = vector.broadcast %cst_16 : f32 to vector<32x32xf32>
    %32 = arith.mulf %30, %31 : vector<32x32xf32>
    %33 = math.absf %29 : vector<32x32xf32>
    %cst_17 = arith.constant dense<0.000000e+00> : vector<32xf32>
    %34 = vector.multi_reduction <add>, %33, %cst_17 [1] : vector<32x32xf32> to vector<32xf32>
    %35 = vector.shape_cast %34 : vector<32xf32> to vector<32x1xf32>
    %cst_18 = arith.constant 9.99999996E-13 : f32
    %36 = vector.broadcast %cst_18 : f32 to vector<32x1xf32>
    %37 = arith.maximumf %35, %36 : vector<32x1xf32>
    %38 = vector.broadcast %37 : vector<32x1xf32> to vector<32x32xf32>
    %39 = arith.divf %29, %38 : vector<32x32xf32>
    %40 = math.absf %32 : vector<32x32xf32>
    %cst_19 = arith.constant dense<0.000000e+00> : vector<32xf32>
    %41 = vector.multi_reduction <add>, %40, %cst_19 [1] : vector<32x32xf32> to vector<32xf32>
    %42 = vector.shape_cast %41 : vector<32xf32> to vector<32x1xf32>
    %cst_20 = arith.constant 9.99999996E-13 : f32
    %43 = vector.broadcast %cst_20 : f32 to vector<32x1xf32>
    %44 = arith.maximumf %42, %43 : vector<32x1xf32>
    %45 = vector.broadcast %44 : vector<32x1xf32> to vector<32x32xf32>
    %46 = arith.divf %32, %45 : vector<32x32xf32>
    %c0_21 = arith.constant 0 : index
    %c0_22 = arith.constant 0 : index
    %47 = vector.load %arg6[%c0_21, %c0_22] : memref<128x256xbf16, #tpu.memory_space<vmem>>, vector<128x256xbf16>
    %cst_23 = arith.constant dense<0.000000e+00> : vector<32x256xf32>
    %48 = tpu.matmul %25, %47, %cst_23 {dimension_numbers = #tpu.dot_dimension_numbers<[1], [0], [0], [1], [0, 0, 1, 1], [], []>} : vector<32x128xbf16>, vector<128x256xbf16>, vector<32x256xf32> -> vector<32x256xf32>
    %c0_24 = arith.constant 0 : index
    %c0_25 = arith.constant 0 : index
    %49 = vector.load %arg7[%c0_24, %c0_25] : memref<1x256xf32, #tpu.memory_space<vmem>>, vector<1x256xf32>
    %50 = vector.broadcast %49 : vector<1x256xf32> to vector<32x256xf32>
    %51 = arith.addf %48, %50 : vector<32x256xf32>
    %52 = vector.extract_strided_slice %51 {offsets = [0, 0], sizes = [32, 128], strides = [1, 1]} : vector<32x256xf32> to vector<32x128xf32>
    %53 = vector.extract_strided_slice %51 {offsets = [0, 128], sizes = [32, 128], strides = [1, 1]} : vector<32x256xf32> to vector<32x128xf32>
    %54 = arith.truncf %39 : vector<32x32xf32> to vector<32x32xbf16>
    %55 = arith.truncf %52 : vector<32x128xf32> to vector<32x128xbf16>
    %cst_26 = arith.constant dense<0.000000e+00> : vector<32x128xf32>
    %56 = tpu.matmul %54, %55, %cst_26 {dimension_numbers = #tpu.dot_dimension_numbers<[1], [0], [0], [1], [0, 0, 1, 1], [], []>} : vector<32x32xbf16>, vector<32x128xbf16>, vector<32x128xf32> -> vector<32x128xf32>
    %c0_27 = arith.constant 0 : index
    %c0_28 = arith.constant 0 : index
    %57 = vector.load %arg8[%c0_27, %c0_28] : memref<1x128xf32, #tpu.memory_space<vmem>>, vector<1x128xf32>
    %58 = vector.broadcast %57 : vector<1x128xf32> to vector<32x128xf32>
    %59 = arith.addf %56, %58 : vector<32x128xf32>
    %60 = arith.truncf %46 : vector<32x32xf32> to vector<32x32xbf16>
    %61 = arith.truncf %53 : vector<32x128xf32> to vector<32x128xbf16>
    %cst_29 = arith.constant dense<0.000000e+00> : vector<32x128xf32>
    %62 = tpu.matmul %60, %61, %cst_29 {dimension_numbers = #tpu.dot_dimension_numbers<[1], [0], [0], [1], [0, 0, 1, 1], [], []>} : vector<32x32xbf16>, vector<32x128xbf16>, vector<32x128xf32> -> vector<32x128xf32>
    %c0_30 = arith.constant 0 : index
    %c0_31 = arith.constant 0 : index
    %63 = vector.load %arg9[%c0_30, %c0_31] : memref<1x128xf32, #tpu.memory_space<vmem>>, vector<1x128xf32>
    %64 = vector.broadcast %63 : vector<1x128xf32> to vector<32x128xf32>
    %65 = arith.addf %62, %64 : vector<32x128xf32>
    %66 = tpu.concatenate %59, %65 in 1 : vector<32x128xf32>, vector<32x128xf32> -> vector<32x256xf32>
    %67 = arith.truncf %66 : vector<32x256xf32> to vector<32x256xbf16>
    %c0_32 = arith.constant 0 : index
    %c0_33 = arith.constant 0 : index
    %68 = vector.load %arg10[%c0_32, %c0_33] : memref<256x384xbf16, #tpu.memory_space<vmem>>, vector<256x384xbf16>
    %cst_34 = arith.constant dense<0.000000e+00> : vector<32x384xf32>
    %69 = tpu.matmul %67, %68, %cst_34 {dimension_numbers = #tpu.dot_dimension_numbers<[1], [0], [0], [1], [0, 0, 1, 1], [], []>} : vector<32x256xbf16>, vector<256x384xbf16>, vector<32x384xf32> -> vector<32x384xf32>
    %c0_35 = arith.constant 0 : index
    %c0_36 = arith.constant 0 : index
    %70 = vector.load %arg11[%c0_35, %c0_36] : memref<1x384xf32, #tpu.memory_space<vmem>>, vector<1x384xf32>
    %71 = vector.broadcast %70 : vector<1x384xf32> to vector<32x384xf32>
    %72 = arith.addf %69, %71 : vector<32x384xf32>
    %c0_37 = arith.constant 0 : index
    %c0_38 = arith.constant 0 : index
    %73 = vector.load %arg12[%c0_37, %c0_38] : memref<128x384xbf16, #tpu.memory_space<vmem>>, vector<128x384xbf16>
    %cst_39 = arith.constant dense<0.000000e+00> : vector<32x384xf32>
    %74 = tpu.matmul %25, %73, %cst_39 {dimension_numbers = #tpu.dot_dimension_numbers<[1], [0], [0], [1], [0, 0, 1, 1], [], []>} : vector<32x128xbf16>, vector<128x384xbf16>, vector<32x384xf32> -> vector<32x384xf32>
    %c0_40 = arith.constant 0 : index
    %c0_41 = arith.constant 0 : index
    %75 = vector.load %arg13[%c0_40, %c0_41] : memref<1x384xf32, #tpu.memory_space<vmem>>, vector<1x384xf32>
    %76 = vector.broadcast %75 : vector<1x384xf32> to vector<32x384xf32>
    %77 = arith.addf %74, %76 : vector<32x384xf32>
    %78 = vector.extract_strided_slice %72 {offsets = [0, 0], sizes = [32, 128], strides = [1, 1]} : vector<32x384xf32> to vector<32x128xf32>
    %79 = vector.extract_strided_slice %72 {offsets = [0, 128], sizes = [32, 128], strides = [1, 1]} : vector<32x384xf32> to vector<32x128xf32>
    %80 = vector.extract_strided_slice %72 {offsets = [0, 256], sizes = [32, 128], strides = [1, 1]} : vector<32x384xf32> to vector<32x128xf32>
    %81 = vector.extract_strided_slice %77 {offsets = [0, 0], sizes = [32, 128], strides = [1, 1]} : vector<32x384xf32> to vector<32x128xf32>
    %82 = vector.extract_strided_slice %77 {offsets = [0, 128], sizes = [32, 128], strides = [1, 1]} : vector<32x384xf32> to vector<32x128xf32>
    %83 = vector.extract_strided_slice %77 {offsets = [0, 256], sizes = [32, 128], strides = [1, 1]} : vector<32x384xf32> to vector<32x128xf32>
    %84 = arith.addf %78, %81 : vector<32x128xf32>
    %85 = arith.negf %84 : vector<32x128xf32>
    %86 = math.exp %85 : vector<32x128xf32>
    %cst_42 = arith.constant 1.000000e+00 : f32
    %87 = vector.broadcast %cst_42 : f32 to vector<32x128xf32>
    %88 = arith.addf %87, %86 : vector<32x128xf32>
    %89 = arith.divf %87, %88 : vector<32x128xf32>
    %90 = arith.addf %79, %82 : vector<32x128xf32>
    %91 = arith.negf %90 : vector<32x128xf32>
    %92 = math.exp %91 : vector<32x128xf32>
    %cst_43 = arith.constant 1.000000e+00 : f32
    %93 = vector.broadcast %cst_43 : f32 to vector<32x128xf32>
    %94 = arith.addf %93, %92 : vector<32x128xf32>
    %95 = arith.divf %93, %94 : vector<32x128xf32>
    %96 = arith.mulf %89, %83 : vector<32x128xf32>
    %97 = arith.addf %80, %96 : vector<32x128xf32>
    %98 = math.tanh %97 : vector<32x128xf32>
    %99 = arith.subf %24, %98 : vector<32x128xf32>
    %100 = arith.mulf %95, %99 : vector<32x128xf32>
    %101 = arith.addf %98, %100 : vector<32x128xf32>
    %102 = arith.truncf %101 : vector<32x128xf32> to vector<32x128xbf16>
    %cst_44 = arith.constant dense<0.000000e+00> : vector<32x32xf32>
    %103 = tpu.matmul %102, %102, %cst_44 {dimension_numbers = #tpu.dot_dimension_numbers<[1], [1], [0], [0], [0, 0, 1, 0], [], []>} : vector<32x128xbf16>, vector<32x128xbf16>, vector<32x32xf32> -> vector<32x32xf32>
    %104 = arith.mulf %103, %3 : vector<32x32xf32>
    %cst_45 = arith.constant 1.000000e+00 : f32
    %105 = vector.broadcast %cst_45 : f32 to vector<32x32xf32>
    %106 = arith.mulf %104, %105 : vector<32x32xf32>
    %107 = arith.mulf %103, %5 : vector<32x32xf32>
    %cst_46 = arith.constant 1.000000e+00 : f32
    %108 = vector.broadcast %cst_46 : f32 to vector<32x32xf32>
    %109 = arith.mulf %107, %108 : vector<32x32xf32>
    %110 = math.absf %106 : vector<32x32xf32>
    %cst_47 = arith.constant dense<0.000000e+00> : vector<32xf32>
    %111 = vector.multi_reduction <add>, %110, %cst_47 [1] : vector<32x32xf32> to vector<32xf32>
    %112 = vector.shape_cast %111 : vector<32xf32> to vector<32x1xf32>
    %cst_48 = arith.constant 9.99999996E-13 : f32
    %113 = vector.broadcast %cst_48 : f32 to vector<32x1xf32>
    %114 = arith.maximumf %112, %113 : vector<32x1xf32>
    %115 = vector.broadcast %114 : vector<32x1xf32> to vector<32x32xf32>
    %116 = arith.divf %106, %115 : vector<32x32xf32>
    %117 = math.absf %109 : vector<32x32xf32>
    %cst_49 = arith.constant dense<0.000000e+00> : vector<32xf32>
    %118 = vector.multi_reduction <add>, %117, %cst_49 [1] : vector<32x32xf32> to vector<32xf32>
    %119 = vector.shape_cast %118 : vector<32xf32> to vector<32x1xf32>
    %cst_50 = arith.constant 9.99999996E-13 : f32
    %120 = vector.broadcast %cst_50 : f32 to vector<32x1xf32>
    %121 = arith.maximumf %119, %120 : vector<32x1xf32>
    %122 = vector.broadcast %121 : vector<32x1xf32> to vector<32x32xf32>
    %123 = arith.divf %109, %122 : vector<32x32xf32>
    %c0_51 = arith.constant 0 : index
    %c0_52 = arith.constant 0 : index
    %124 = vector.load %arg6[%c0_51, %c0_52] : memref<128x256xbf16, #tpu.memory_space<vmem>>, vector<128x256xbf16>
    %cst_53 = arith.constant dense<0.000000e+00> : vector<32x256xf32>
    %125 = tpu.matmul %102, %124, %cst_53 {dimension_numbers = #tpu.dot_dimension_numbers<[1], [0], [0], [1], [0, 0, 1, 1], [], []>} : vector<32x128xbf16>, vector<128x256xbf16>, vector<32x256xf32> -> vector<32x256xf32>
    %c0_54 = arith.constant 0 : index
    %c0_55 = arith.constant 0 : index
    %126 = vector.load %arg7[%c0_54, %c0_55] : memref<1x256xf32, #tpu.memory_space<vmem>>, vector<1x256xf32>
    %127 = vector.broadcast %126 : vector<1x256xf32> to vector<32x256xf32>
    %128 = arith.addf %125, %127 : vector<32x256xf32>
    %129 = vector.extract_strided_slice %128 {offsets = [0, 0], sizes = [32, 128], strides = [1, 1]} : vector<32x256xf32> to vector<32x128xf32>
    %130 = vector.extract_strided_slice %128 {offsets = [0, 128], sizes = [32, 128], strides = [1, 1]} : vector<32x256xf32> to vector<32x128xf32>
    %131 = arith.truncf %116 : vector<32x32xf32> to vector<32x32xbf16>
    %132 = arith.truncf %129 : vector<32x128xf32> to vector<32x128xbf16>
    %cst_56 = arith.constant dense<0.000000e+00> : vector<32x128xf32>
    %133 = tpu.matmul %131, %132, %cst_56 {dimension_numbers = #tpu.dot_dimension_numbers<[1], [0], [0], [1], [0, 0, 1, 1], [], []>} : vector<32x32xbf16>, vector<32x128xbf16>, vector<32x128xf32> -> vector<32x128xf32>
    %c0_57 = arith.constant 0 : index
    %c0_58 = arith.constant 0 : index
    %134 = vector.load %arg8[%c0_57, %c0_58] : memref<1x128xf32, #tpu.memory_space<vmem>>, vector<1x128xf32>
    %135 = vector.broadcast %134 : vector<1x128xf32> to vector<32x128xf32>
    %136 = arith.addf %133, %135 : vector<32x128xf32>
    %137 = arith.truncf %123 : vector<32x32xf32> to vector<32x32xbf16>
    %138 = arith.truncf %130 : vector<32x128xf32> to vector<32x128xbf16>
    %cst_59 = arith.constant dense<0.000000e+00> : vector<32x128xf32>
    %139 = tpu.matmul %137, %138, %cst_59 {dimension_numbers = #tpu.dot_dimension_numbers<[1], [0], [0], [1], [0, 0, 1, 1], [], []>} : vector<32x32xbf16>, vector<32x128xbf16>, vector<32x128xf32> -> vector<32x128xf32>
    %c0_60 = arith.constant 0 : index
    %c0_61 = arith.constant 0 : index
    %140 = vector.load %arg9[%c0_60, %c0_61] : memref<1x128xf32, #tpu.memory_space<vmem>>, vector<1x128xf32>
    %141 = vector.broadcast %140 : vector<1x128xf32> to vector<32x128xf32>
    %142 = arith.addf %139, %141 : vector<32x128xf32>
    %143 = tpu.concatenate %136, %142 in 1 : vector<32x128xf32>, vector<32x128xf32> -> vector<32x256xf32>
    %144 = arith.truncf %143 : vector<32x256xf32> to vector<32x256xbf16>
    %c0_62 = arith.constant 0 : index
    %c0_63 = arith.constant 0 : index
    %145 = vector.load %arg10[%c0_62, %c0_63] : memref<256x384xbf16, #tpu.memory_space<vmem>>, vector<256x384xbf16>
    %cst_64 = arith.constant dense<0.000000e+00> : vector<32x384xf32>
    %146 = tpu.matmul %144, %145, %cst_64 {dimension_numbers = #tpu.dot_dimension_numbers<[1], [0], [0], [1], [0, 0, 1, 1], [], []>} : vector<32x256xbf16>, vector<256x384xbf16>, vector<32x384xf32> -> vector<32x384xf32>
    %c0_65 = arith.constant 0 : index
    %c0_66 = arith.constant 0 : index
    %147 = vector.load %arg11[%c0_65, %c0_66] : memref<1x384xf32, #tpu.memory_space<vmem>>, vector<1x384xf32>
    %148 = vector.broadcast %147 : vector<1x384xf32> to vector<32x384xf32>
    %149 = arith.addf %146, %148 : vector<32x384xf32>
    %c0_67 = arith.constant 0 : index
    %c0_68 = arith.constant 0 : index
    %150 = vector.load %arg12[%c0_67, %c0_68] : memref<128x384xbf16, #tpu.memory_space<vmem>>, vector<128x384xbf16>
    %cst_69 = arith.constant dense<0.000000e+00> : vector<32x384xf32>
    %151 = tpu.matmul %102, %150, %cst_69 {dimension_numbers = #tpu.dot_dimension_numbers<[1], [0], [0], [1], [0, 0, 1, 1], [], []>} : vector<32x128xbf16>, vector<128x384xbf16>, vector<32x384xf32> -> vector<32x384xf32>
    %c0_70 = arith.constant 0 : index
    %c0_71 = arith.constant 0 : index
    %152 = vector.load %arg13[%c0_70, %c0_71] : memref<1x384xf32, #tpu.memory_space<vmem>>, vector<1x384xf32>
    %153 = vector.broadcast %152 : vector<1x384xf32> to vector<32x384xf32>
    %154 = arith.addf %151, %153 : vector<32x384xf32>
    %155 = vector.extract_strided_slice %149 {offsets = [0, 0], sizes = [32, 128], strides = [1, 1]} : vector<32x384xf32> to vector<32x128xf32>
    %156 = vector.extract_strided_slice %149 {offsets = [0, 128], sizes = [32, 128], strides = [1, 1]} : vector<32x384xf32> to vector<32x128xf32>
    %157 = vector.extract_strided_slice %149 {offsets = [0, 256], sizes = [32, 128], strides = [1, 1]} : vector<32x384xf32> to vector<32x128xf32>
    %158 = vector.extract_strided_slice %154 {offsets = [0, 0], sizes = [32, 128], strides = [1, 1]} : vector<32x384xf32> to vector<32x128xf32>
    %159 = vector.extract_strided_slice %154 {offsets = [0, 128], sizes = [32, 128], strides = [1, 1]} : vector<32x384xf32> to vector<32x128xf32>
    %160 = vector.extract_strided_slice %154 {offsets = [0, 256], sizes = [32, 128], strides = [1, 1]} : vector<32x384xf32> to vector<32x128xf32>
    %161 = arith.addf %155, %158 : vector<32x128xf32>
    %162 = arith.negf %161 : vector<32x128xf32>
    %163 = math.exp %162 : vector<32x128xf32>
    %cst_72 = arith.constant 1.000000e+00 : f32
    %164 = vector.broadcast %cst_72 : f32 to vector<32x128xf32>
    %165 = arith.addf %164, %163 : vector<32x128xf32>
    %166 = arith.divf %164, %165 : vector<32x128xf32>
    %167 = arith.addf %156, %159 : vector<32x128xf32>
    %168 = arith.negf %167 : vector<32x128xf32>
    %169 = math.exp %168 : vector<32x128xf32>
    %cst_73 = arith.constant 1.000000e+00 : f32
    %170 = vector.broadcast %cst_73 : f32 to vector<32x128xf32>
    %171 = arith.addf %170, %169 : vector<32x128xf32>
    %172 = arith.divf %170, %171 : vector<32x128xf32>
    %173 = arith.mulf %166, %160 : vector<32x128xf32>
    %174 = arith.addf %157, %173 : vector<32x128xf32>
    %175 = math.tanh %174 : vector<32x128xf32>
    %176 = arith.subf %101, %175 : vector<32x128xf32>
    %177 = arith.mulf %172, %176 : vector<32x128xf32>
    %178 = arith.addf %175, %177 : vector<32x128xf32>
    %179 = vector.extract_strided_slice %178 {offsets = [0, 0], sizes = [8, 128], strides = [1, 1]} : vector<32x128xf32> to vector<8x128xf32>
    %180 = vector.extract_strided_slice %178 {offsets = [8, 0], sizes = [8, 128], strides = [1, 1]} : vector<32x128xf32> to vector<8x128xf32>
    %181 = vector.extract_strided_slice %178 {offsets = [16, 0], sizes = [8, 128], strides = [1, 1]} : vector<32x128xf32> to vector<8x128xf32>
    %182 = vector.extract_strided_slice %178 {offsets = [24, 0], sizes = [8, 128], strides = [1, 1]} : vector<32x128xf32> to vector<8x128xf32>
    %183 = tpu.concatenate %179, %180, %181, %182 in 1 : vector<8x128xf32>, vector<8x128xf32>, vector<8x128xf32>, vector<8x128xf32> -> vector<8x512xf32>
    %c0_74 = arith.constant 0 : index
    %c0_75 = arith.constant 0 : index
    %184 = vector.load %arg14[%c0_74, %c0_75] : memref<512x512xbf16, #tpu.memory_space<vmem>>, vector<512x512xbf16>
    %cst_76 = arith.constant dense<0.000000e+00> : vector<8x512xf32>
    %185 = tpu.matmul %6, %184, %cst_76 {dimension_numbers = #tpu.dot_dimension_numbers<[1], [0], [0], [1], [0, 0, 1, 1], [], []>} : vector<8x512xbf16>, vector<512x512xbf16>, vector<8x512xf32> -> vector<8x512xf32>
    %c0_77 = arith.constant 0 : index
    %c0_78 = arith.constant 0 : index
    %186 = vector.load %arg15[%c0_77, %c0_78] : memref<1x512xf32, #tpu.memory_space<vmem>>, vector<1x512xf32>
    %187 = vector.broadcast %186 : vector<1x512xf32> to vector<8x512xf32>
    %188 = arith.addf %185, %187 : vector<8x512xf32>
    %189 = arith.truncf %183 : vector<8x512xf32> to vector<8x512xbf16>
    %c0_79 = arith.constant 0 : index
    %c0_80 = arith.constant 0 : index
    %190 = vector.load %arg16[%c0_79, %c0_80] : memref<512x512xbf16, #tpu.memory_space<vmem>>, vector<512x512xbf16>
    %cst_81 = arith.constant dense<0.000000e+00> : vector<8x512xf32>
    %191 = tpu.matmul %189, %190, %cst_81 {dimension_numbers = #tpu.dot_dimension_numbers<[1], [0], [0], [1], [0, 0, 1, 1], [], []>} : vector<8x512xbf16>, vector<512x512xbf16>, vector<8x512xf32> -> vector<8x512xf32>
    %c0_82 = arith.constant 0 : index
    %c0_83 = arith.constant 0 : index
    %192 = vector.load %arg17[%c0_82, %c0_83] : memref<1x512xf32, #tpu.memory_space<vmem>>, vector<1x512xf32>
    %193 = vector.broadcast %192 : vector<1x512xf32> to vector<8x512xf32>
    %194 = arith.addf %191, %193 : vector<8x512xf32>
    %195 = arith.addf %188, %194 : vector<8x512xf32>
    %196 = arith.negf %195 : vector<8x512xf32>
    %197 = math.exp %196 : vector<8x512xf32>
    %cst_84 = arith.constant 1.000000e+00 : f32
    %198 = vector.broadcast %cst_84 : f32 to vector<8x512xf32>
    %199 = arith.addf %198, %197 : vector<8x512xf32>
    %200 = arith.divf %198, %199 : vector<8x512xf32>
    %c0_85 = arith.constant 0 : index
    %c0_86 = arith.constant 0 : index
    %201 = vector.load %arg18[%c0_85, %c0_86] : memref<1x512xf32, #tpu.memory_space<vmem>>, vector<1x512xf32>
    %202 = vector.broadcast %201 : vector<1x512xf32> to vector<8x512xf32>
    %203 = arith.mulf %200, %202 : vector<8x512xf32>
    %cst_87 = arith.constant dense<0.000000e+00> : vector<8xf32>
    %204 = vector.multi_reduction <add>, %203, %cst_87 [1] : vector<8x512xf32> to vector<8xf32>
    %205 = vector.shape_cast %204 : vector<8xf32> to vector<8x1xf32>
    %206 = vector.broadcast %205 : vector<8x1xf32> to vector<8x512xf32>
    %207 = arith.mulf %206, %1 : vector<8x512xf32>
    %cst_88 = arith.constant 1.000000e+00 : f32
    %208 = vector.broadcast %cst_88 : f32 to vector<8x1xf32>
    %209 = arith.subf %208, %205 : vector<8x1xf32>
    %210 = vector.broadcast %209 : vector<8x1xf32> to vector<8x512xf32>
    %211 = arith.mulf %210, %183 : vector<8x512xf32>
    %212 = arith.addf %207, %211 : vector<8x512xf32>
    %c0_89 = arith.constant 0 : index
    %c0_90 = arith.constant 0 : index
    %c0_91 = arith.constant 0 : index
    %213 = vector.load %arg19[%c0_89, %c0_90, %c0_91] : memref<1x8x512xf32, #tpu.memory_space<vmem>>, vector<1x8x512xf32>
    %214 = vector.shape_cast %213 : vector<1x8x512xf32> to vector<8x512xf32>
    %215 = vector.shape_cast %212 : vector<8x512xf32> to vector<1x8x512xf32>
    tpu.vector_store %arg19[%c0_89, %c0_90, %c0_91], %215 {strides = array<i32>} : memref<1x8x512xf32, #tpu.memory_space<vmem>>, vector<1x8x512xf32>,
    return
  }
  func.func @transform_0(%arg0: i32) -> (i32, i32, i32) {
    %c0_i32 = arith.constant 0 : i32
    %c0_i32_0 = arith.constant 0 : i32
    %c0_i32_1 = arith.constant 0 : i32
    return %arg0, %c0_i32, %c0_i32_0 : i32, i32, i32
  }
  func.func @transform_1(%arg0: i32) -> (i32, i32, i32) {
    %c0_i32 = arith.constant 0 : i32
    %c0_i32_0 = arith.constant 0 : i32
    %c0_i32_1 = arith.constant 0 : i32
    return %arg0, %c0_i32, %c0_i32_0 : i32, i32, i32
  }
  func.func @transform_2(%arg0: i32) -> (i32, i32, i32) {
    %c0_i32 = arith.constant 0 : i32
    %c0_i32_0 = arith.constant 0 : i32
    %c0_i32_1 = arith.constant 0 : i32
    return %arg0, %c0_i32, %c0_i32_0 : i32, i32, i32
  }
  func.func @transform_3(%arg0: i32) -> (i32, i32) {
    %c0_i32 = arith.constant 0 : i32
    %c0_i32_0 = arith.constant 0 : i32
    %c0_i32_1 = arith.constant 0 : i32
    return %c0_i32, %c0_i32_0 : i32, i32
  }
  func.func @transform_4(%arg0: i32) -> (i32, i32) {
    %c0_i32 = arith.constant 0 : i32
    %c0_i32_0 = arith.constant 0 : i32
    %c0_i32_1 = arith.constant 0 : i32
    return %c0_i32, %c0_i32_0 : i32, i32
  }
  func.func @transform_5(%arg0: i32) -> (i32, i32) {
    %c0_i32 = arith.constant 0 : i32
    %c0_i32_0 = arith.constant 0 : i32
    %c0_i32_1 = arith.constant 0 : i32
    return %c0_i32, %c0_i32_0 : i32, i32
  }
  func.func @transform_6(%arg0: i32) -> (i32, i32) {
    %c0_i32 = arith.constant 0 : i32
    %c0_i32_0 = arith.constant 0 : i32
    %c0_i32_1 = arith.constant 0 : i32
    return %c0_i32, %c0_i32_0 : i32, i32
  }
  func.func @transform_7(%arg0: i32) -> (i32, i32) {
    %c0_i32 = arith.constant 0 : i32
    %c0_i32_0 = arith.constant 0 : i32
    %c0_i32_1 = arith.constant 0 : i32
    return %c0_i32, %c0_i32_0 : i32, i32
  }
  func.func @transform_8(%arg0: i32) -> (i32, i32) {
    %c0_i32 = arith.constant 0 : i32
    %c0_i32_0 = arith.constant 0 : i32
    %c0_i32_1 = arith.constant 0 : i32
    return %c0_i32, %c0_i32_0 : i32, i32
  }
  func.func @transform_9(%arg0: i32) -> (i32, i32) {
    %c0_i32 = arith.constant 0 : i32
    %c0_i32_0 = arith.constant 0 : i32
    %c0_i32_1 = arith.constant 0 : i32
    return %c0_i32, %c0_i32_0 : i32, i32
  }
  func.func @transform_10(%arg0: i32) -> (i32, i32) {
    %c0_i32 = arith.constant 0 : i32
    %c0_i32_0 = arith.constant 0 : i32
    %c0_i32_1 = arith.constant 0 : i32
    return %c0_i32, %c0_i32_0 : i32, i32
  }
  func.func @transform_11(%arg0: i32) -> (i32, i32) {
    %c0_i32 = arith.constant 0 : i32
    %c0_i32_0 = arith.constant 0 : i32
    %c0_i32_1 = arith.constant 0 : i32
    return %c0_i32, %c0_i32_0 : i32, i32
  }
  func.func @transform_12(%arg0: i32) -> (i32, i32) {
    %c0_i32 = arith.constant 0 : i32
    %c0_i32_0 = arith.constant 0 : i32
    %c0_i32_1 = arith.constant 0 : i32
    return %c0_i32, %c0_i32_0 : i32, i32
  }
  func.func @transform_13(%arg0: i32) -> (i32, i32) {
    %c0_i32 = arith.constant 0 : i32
    %c0_i32_0 = arith.constant 0 : i32
    %c0_i32_1 = arith.constant 0 : i32
    return %c0_i32, %c0_i32_0 : i32, i32
  }
  func.func @transform_14(%arg0: i32) -> (i32, i32) {
    %c0_i32 = arith.constant 0 : i32
    %c0_i32_0 = arith.constant 0 : i32
    %c0_i32_1 = arith.constant 0 : i32
    return %c0_i32, %c0_i32_0 : i32, i32
  }
  func.func @transform_15(%arg0: i32) -> (i32, i32) {
    %c0_i32 = arith.constant 0 : i32
    %c0_i32_0 = arith.constant 0 : i32
    %c0_i32_1 = arith.constant 0 : i32
    return %c0_i32, %c0_i32_0 : i32, i32
  }
  func.func @transform_16(%arg0: i32) -> (i32, i32) {
    %c0_i32 = arith.constant 0 : i32
    %c0_i32_0 = arith.constant 0 : i32
    %c0_i32_1 = arith.constant 0 : i32
    return %c0_i32, %c0_i32_0 : i32, i32
  }
  func.func @transform_17(%arg0: i32) -> (i32, i32) {
    %c0_i32 = arith.constant 0 : i32
    %c0_i32_0 = arith.constant 0 : i32
    %c0_i32_1 = arith.constant 0 : i32
    return %c0_i32, %c0_i32_0 : i32, i32
  }
  func.func @transform_18(%arg0: i32) -> (i32, i32, i32) {
    %c0_i32 = arith.constant 0 : i32
    %c0_i32_0 = arith.constant 0 : i32
    %c0_i32_1 = arith.constant 0 : i32
    return %arg0, %c0_i32, %c0_i32_0 : i32, i32, i32
  }
}

</mosaic_0001>

<llo_original>
// kernel: tpu_custom_call.1
$region0: #{tpu_custom_call.1}
  #allocation0 [shape = 'u32[]', space=smem, size = 0x4, offset = 0x4, fixed_abs, tag = 'smem constant byte address 0x4 - core index']
  #allocation1 [shape = 'u32[144,128]{1,0:T(1,128)}', space=vmem, size = 0x12000, scoped, tag = 'internal scratch']
  %s0 = inlined_call_operand.hbm [shape: f32[2,32,32], index: 0, kind: input, shape index: {}]
  %s1 = inlined_call_operand.hbm [shape: f32[2,32,32], index: 1, kind: input, shape index: {}]
  %s2 = inlined_call_operand.hbm [shape: f32[2,8,512], index: 2, kind: input, shape index: {}]
  %s3 = inlined_call_operand.hbm [shape: bf16[512,512], index: 3, kind: input, shape index: {}]
  %s4 = inlined_call_operand.vmem [shape: f32[1,512], index: 4, kind: input, shape index: {}]
  %s5 = inlined_call_operand.hbm [shape: bf16[128,256], index: 5, kind: input, shape index: {}]
  %s6 = inlined_call_operand.hbm [shape: f32[1,256], index: 6, kind: input, shape index: {}]
  %s7 = inlined_call_operand.hbm [shape: f32[1,128], index: 7, kind: input, shape index: {}]
  %s8 = inlined_call_operand.hbm [shape: f32[1,128], index: 8, kind: input, shape index: {}]
  %s9 = inlined_call_operand.hbm [shape: bf16[256,384], index: 9, kind: input, shape index: {}]
  %s10 = inlined_call_operand.hbm [shape: f32[1,384], index: 10, kind: input, shape index: {}]
  %s11 = inlined_call_operand.hbm [shape: bf16[128,384], index: 11, kind: input, shape index: {}]
  %s12 = inlined_call_operand.vmem [shape: f32[1,384], index: 12, kind: input, shape index: {}]
  %s13 = inlined_call_operand.hbm [shape: bf16[512,512], index: 13, kind: input, shape index: {}]
  %s14 = inlined_call_operand.vmem [shape: f32[1,512], index: 14, kind: input, shape index: {}]
  %s15 = inlined_call_operand.hbm [shape: bf16[512,512], index: 15, kind: input, shape index: {}]
  %s16 = inlined_call_operand.vmem [shape: f32[1,512], index: 16, kind: input, shape index: {}]
  %s17 = inlined_call_operand.vmem [shape: f32[1,512], index: 17, kind: input, shape index: {}]
  %s18 = inlined_call_operand.hbm [shape: f32[2,8,512], index: 18, kind: output, shape index: {}]
  %s19 = sld [smem:[#allocation0]]
  $region157: #{tpu_custom_call.1} parent=0
    _
  %s21 = ssub.s32 1, %s19
  %s22 = scalar_select 0, %s21, %s19
  $region1: #{tpu_custom_call.1} parent=0
    #allocation2 [shape = 'u8[32768]{0}', space=vmem, size = 0x8000, scoped, tag = 'input window, operand 0']
    #allocation3 [shape = 's32[2]{0}', space=sflag, size = 0x8, scoped, tag = 'scoped memory for tpu_custom_call.1']
    #allocation4 [shape = 's32[2]{0}', space=sflag, size = 0x8, scoped, tag = 'scoped memory for tpu_custom_call.1']
    #allocation5 [shape = 'u8[32768]{0}', space=vmem, size = 0x8000, scoped, tag = 'input window, operand 1']
    #allocation6 [shape = 's32[2]{0}', space=sflag, size = 0x8, scoped, tag = 'scoped memory for tpu_custom_call.1']
    #allocation7 [shape = 'u8[32768]{0}', space=vmem, size = 0x8000, scoped, tag = 'input window, operand 2']
    #allocation8 [shape = 'u8[524288]{0}', space=vmem, size = 0x80000, scoped, tag = 'input window, operand 3, single buffered']
    #allocation9 [shape = 's32[1]{0}', space=sflag, size = 0x4, scoped, tag = 'scoped memory for tpu_custom_call.1']
    #allocation10 [shape = 'u8[65536]{0}', space=vmem, size = 0x10000, scoped, tag = 'input window, operand 5, single buffered']
    #allocation11 [shape = 'u8[1024]{0}', space=vmem, size = 0x400, scoped, tag = 'input window, operand 6, single buffered']
    #allocation12 [shape = 's32[1]{0}', space=sflag, size = 0x4, scoped, tag = 'scoped memory for tpu_custom_call.1']
    #allocation13 [shape = 'u8[512]{0}', space=vmem, size = 0x400, scoped, tag = 'input window, operand 7, single buffered']
    #allocation14 [shape = 'u8[512]{0}', space=vmem, size = 0x400, scoped, tag = 'input window, operand 8, single buffered']
    #allocation15 [shape = 's32[1]{0}', space=sflag, size = 0x4, scoped, tag = 'scoped memory for tpu_custom_call.1']
    #allocation16 [shape = 'u8[196608]{0}', space=vmem, size = 0x30000, scoped, tag = 'input window, operand 9, single buffered']
    #allocation17 [shape = 'u8[1536]{0}', space=vmem, size = 0x800, scoped, tag = 'input window, operand 10, single buffered']
    #allocation18 [shape = 's32[1]{0}', space=sflag, size = 0x4, scoped, tag = 'scoped memory for tpu_custom_call.1']
    #allocation19 [shape = 'u8[98304]{0}', space=vmem, size = 0x18000, scoped, tag = 'input window, operand 11, single buffered']
    #allocation20 [shape = 'u8[524288]{0}', space=vmem, size = 0x80000, scoped, tag = 'input window, operand 13, single buffered']
    #allocation21 [shape = 's32[1]{0}', space=sflag, size = 0x4, scoped, tag = 'scoped memory for tpu_custom_call.1']
    #allocation22 [shape = 'u8[524288]{0}', space=vmem, size = 0x80000, scoped, tag = 'input window, operand 15, single buffered']
    #allocation23 [shape = 'u8[32768]{0}', space=vmem, size = 0x8000, scoped, tag = 'output window, operand 0']
    %23 = vsyncpa [#allocation3], 0
    %s24 = scalar_lea.sflag [#allocation3], 1
    %25 = vsyncpa %s24, 0
    %26 = vsyncpa [#allocation6], 0
    %s27 = scalar_lea.sflag [#allocation6], 1
    %28 = vsyncpa %s27, 0
    %29 = vsyncpa [#allocation9], 0
    %30 = vsyncpa [#allocation12], 0
    %31 = vsyncpa [#allocation15], 0
    %32 = vsyncpa [#allocation18], 0
    %33 = vsyncpa [#allocation21], 0
    %34 = vsyncpa [#allocation4], 0
    %s35 = scalar_lea.sflag [#allocation4], 1
    %36 = vsyncpa %s35, 0
    loop: start=0, step=1, limit=4
    $region2: #{tpu_custom_call.1} parent=1 // loop_pre_header
      _
    $region3: #{tpu_custom_call.1} parent=1 // loop_header
      %s38 = sphi 0, %s42
      %p39 = scmp.ge.s32.totalorder %s38, 4
      %s48 = sphi 0, %s50
      %s51 = sphi 0, %s48
      %s52 = sphi 0, %s51
      %s68 = sphi 0, %s52
      %s74 = sphi 0, %s76
      %s77 = sphi 0, %s74
      %s78 = sphi 0, %s77
      %s94 = sphi 0, %s78
      %s100 = sphi 0, %s102
      %s103 = sphi 0, %s100
      %s104 = sphi 0, %s103
      %s120 = sphi 0, %s104
      %s124 = sphi 0, %s124
      %s126 = sphi 0, %s124
      %s127 = sphi 0, %s126
      %s141 = sphi 0, %s127
      %s145 = sphi 0, %s145
      %s147 = sphi 0, %s145
      %s148 = sphi 0, %s147
      %s162 = sphi 0, %s148
      %s166 = sphi 0, %s166
      %s168 = sphi 0, %s166
      %s169 = sphi 0, %s168
      %s183 = sphi 0, %s169
      %s187 = sphi 0, %s187
      %s189 = sphi 0, %s187
      %s190 = sphi 0, %s189
      %s204 = sphi 0, %s190
      %s208 = sphi 0, %s208
      %s210 = sphi 0, %s208
      %s211 = sphi 0, %s210
      %s225 = sphi 0, %s211
      %s229 = sphi 0, %s229
      %s231 = sphi 0, %s229
      %s232 = sphi 0, %s231
      %s246 = sphi 0, %s232
      %s250 = sphi 0, %s250
      %s252 = sphi 0, %s250
      %s253 = sphi 0, %s252
      %s267 = sphi 0, %s253
      %s271 = sphi 0, %s271
      %s273 = sphi 0, %s271
      %s274 = sphi 0, %s273
      %s288 = sphi 0, %s274
      %s292 = sphi 0, %s292
      %s294 = sphi 0, %s292
      %s295 = sphi 0, %s294
      %s309 = sphi 0, %s295
      %s313 = sphi 0, %s313
      %s315 = sphi 0, %s313
      %s316 = sphi 0, %s315
      %s330 = sphi 0, %s316
      %s334 = sphi 0, %s334
      %s336 = sphi 0, %s334
      %s337 = sphi 0, %s336
      %s351 = sphi 0, %s337
      %s355 = sphi 0, %s355
      %s357 = sphi 0, %s355
      %s358 = sphi 0, %s357
      %s372 = sphi 0, %s358
      %s376 = sphi 0, %s376
      %s378 = sphi 0, %s376
      %s379 = sphi 0, %s378
      %s393 = sphi 0, %s379
      %s397 = sphi 0, %s397
      %s399 = sphi 0, %s397
      %s400 = sphi 0, %s399
      %s414 = sphi 0, %s400
      %s418 = sphi 0, %s418
      %s420 = sphi 0, %s418
      %s421 = sphi 0, %s420
      %s435 = sphi 0, %s421
      %s441 = sphi 0, %s443
      %s444 = sphi 0, %s441
      %s445 = sphi 0, %s444
      %s461 = sphi 0, %s445
    $region4: #{tpu_custom_call.1} parent=1 // loop_header_branch
      %41 = sbr.rel (%p39) target = $region8
    $region5: #{tpu_custom_call.1} parent=1 // loop_body
      %s43 = ssub.s32 %s38, 1
      %s44 = ssub.s32 %s38, 2
      %s45 = sadd.s32 %s38, 1
      %s46 = ssub.s32 %s38, %s45
      %p47 = scmp.eq.s32.totalorder %s46, 0
      %s49 = sadd.s32 %s48, 1
      %s50 = scalar_select %p47, %s48, %s49
      %p53 = pneg %p47
      %p54 = scmp.eq.s32.totalorder %s38, 1
      %p55 = por %p53, %p54
      %p56 = scmp.ne.s32.totalorder %s48, %s51
      %p57 = scmp.eq.s32.totalorder %s38, 0
      %p58 = por %p56, %p57
      %p59 = scmp.ne.s32.totalorder %s48, %s51
      %p60 = scmp.eq.s32.totalorder %s43, 1
      %p61 = por %p59, %p60
      %p62 = scmp.ne.s32.totalorder %s51, %s52
      %p63 = scmp.eq.s32.totalorder %s43, 0
      %p64 = por %p62, %p63
      %p65 = scmp.ne.s32.totalorder %s51, %s52
      %p66 = scmp.eq.s32.totalorder %s44, 1
      %p67 = por %p65, %p66
      %p69 = scmp.ne.s32.totalorder %s52, %s68
      %p70 = scmp.eq.s32.totalorder %s44, 0
      %p71 = por %p69, %p70
      %s72 = ssub.s32 %s38, %s45
      %p73 = scmp.eq.s32.totalorder %s72, 0
      %s75 = sadd.s32 %s74, 1
      %s76 = scalar_select %p73, %s74, %s75
      %p79 = pneg %p73
      %p80 = scmp.eq.s32.totalorder %s38, 1
      %p81 = por %p79, %p80
      %p82 = scmp.ne.s32.totalorder %s74, %s77
      %p83 = scmp.eq.s32.totalorder %s38, 0
      %p84 = por %p82, %p83
      %p85 = scmp.ne.s32.totalorder %s74, %s77
      %p86 = scmp.eq.s32.totalorder %s43, 1
      %p87 = por %p85, %p86
      %p88 = scmp.ne.s32.totalorder %s77, %s78
      %p89 = scmp.eq.s32.totalorder %s43, 0
      %p90 = por %p88, %p89
      %p91 = scmp.ne.s32.totalorder %s77, %s78
      %p92 = scmp.eq.s32.totalorder %s44, 1
      %p93 = por %p91, %p92
      %p95 = scmp.ne.s32.totalorder %s78, %s94
      %p96 = scmp.eq.s32.totalorder %s44, 0
      %p97 = por %p95, %p96
      %s98 = ssub.s32 %s38, %s45
      %p99 = scmp.eq.s32.totalorder %s98, 0
      %s101 = sadd.s32 %s100, 1
      %s102 = scalar_select %p99, %s100, %s101
      %p105 = pneg %p99
      %p106 = scmp.eq.s32.totalorder %s38, 1
      %p107 = por %p105, %p106
      %p108 = scmp.ne.s32.totalorder %s100, %s103
      %p109 = scmp.eq.s32.totalorder %s38, 0
      %p110 = por %p108, %p109
      %p111 = scmp.ne.s32.totalorder %s100, %s103
      %p112 = scmp.eq.s32.totalorder %s43, 1
      %p113 = por %p111, %p112
      %p114 = scmp.ne.s32.totalorder %s103, %s104
      %p115 = scmp.eq.s32.totalorder %s43, 0
      %p116 = por %p114, %p115
      %p117 = scmp.ne.s32.totalorder %s103, %s104
      %p118 = scmp.eq.s32.totalorder %s44, 1
      %p119 = por %p117, %p118
      %p121 = scmp.ne.s32.totalorder %s104, %s120
      %p122 = scmp.eq.s32.totalorder %s44, 0
      %p123 = por %p121, %p122
      %s125 = sadd.s32 %s124, 1
      %p128 = scmp.eq.s32.totalorder %s38, 1
      %p129 = scmp.ne.s32.totalorder %s124, %s126
      %p130 = scmp.eq.s32.totalorder %s38, 0
      %p131 = por %p129, %p130
      %p132 = scmp.ne.s32.totalorder %s124, %s126
      %p133 = scmp.eq.s32.totalorder %s43, 1
      %p134 = por %p132, %p133
      %p135 = scmp.ne.s32.totalorder %s126, %s127
      %p136 = scmp.eq.s32.totalorder %s43, 0
      %p137 = por %p135, %p136
      %p138 = scmp.ne.s32.totalorder %s126, %s127
      %p139 = scmp.eq.s32.totalorder %s44, 1
      %p140 = por %p138, %p139
      %p142 = scmp.ne.s32.totalorder %s127, %s141
      %p143 = scmp.eq.s32.totalorder %s44, 0
      %p144 = por %p142, %p143
      %s146 = sadd.s32 %s145, 1
      %p149 = scmp.eq.s32.totalorder %s38, 1
      %p150 = scmp.ne.s32.totalorder %s145, %s147
      %p151 = scmp.eq.s32.totalorder %s38, 0
      %p152 = por %p150, %p151
      %p153 = scmp.ne.s32.totalorder %s145, %s147
      %p154 = scmp.eq.s32.totalorder %s43, 1
      %p155 = por %p153, %p154
      %p156 = scmp.ne.s32.totalorder %s147, %s148
      %p157 = scmp.eq.s32.totalorder %s43, 0
      %p158 = por %p156, %p157
      %p159 = scmp.ne.s32.totalorder %s147, %s148
      %p160 = scmp.eq.s32.totalorder %s44, 1
      %p161 = por %p159, %p160
      %p163 = scmp.ne.s32.totalorder %s148, %s162
      %p164 = scmp.eq.s32.totalorder %s44, 0
      %p165 = por %p163, %p164
      %s167 = sadd.s32 %s166, 1
      %p170 = scmp.eq.s32.totalorder %s38, 1
      %p171 = scmp.ne.s32.totalorder %s166, %s168
      %p172 = scmp.eq.s32.totalorder %s38, 0
      %p173 = por %p171, %p172
      %p174 = scmp.ne.s32.totalorder %s166, %s168
      %p175 = scmp.eq.s32.totalorder %s43, 1
      %p176 = por %p174, %p175
      %p177 = scmp.ne.s32.totalorder %s168, %s169
      %p178 = scmp.eq.s32.totalorder %s43, 0
      %p179 = por %p177, %p178
      %p180 = scmp.ne.s32.totalorder %s168, %s169
      %p181 = scmp.eq.s32.totalorder %s44, 1
      %p182 = por %p180, %p181
      %p184 = scmp.ne.s32.totalorder %s169, %s183
      %p185 = scmp.eq.s32.totalorder %s44, 0
      %p186 = por %p184, %p185
      %s188 = sadd.s32 %s187, 1
      %p191 = scmp.eq.s32.totalorder %s38, 1
      %p192 = scmp.ne.s32.totalorder %s187, %s189
      %p193 = scmp.eq.s32.totalorder %s38, 0
      %p194 = por %p192, %p193
      %p195 = scmp.ne.s32.totalorder %s187, %s189
      %p196 = scmp.eq.s32.totalorder %s43, 1
      %p197 = por %p195, %p196
      %p198 = scmp.ne.s32.totalorder %s189, %s190
      %p199 = scmp.eq.s32.totalorder %s43, 0
      %p200 = por %p198, %p199
      %p201 = scmp.ne.s32.totalorder %s189, %s190
      %p202 = scmp.eq.s32.totalorder %s44, 1
      %p203 = por %p201, %p202
      %p205 = scmp.ne.s32.totalorder %s190, %s204
      %p206 = scmp.eq.s32.totalorder %s44, 0
      %p207 = por %p205, %p206
      %s209 = sadd.s32 %s208, 1
      %p212 = scmp.eq.s32.totalorder %s38, 1
      %p213 = scmp.ne.s32.totalorder %s208, %s210
      %p214 = scmp.eq.s32.totalorder %s38, 0
      %p215 = por %p213, %p214
      %p216 = scmp.ne.s32.totalorder %s208, %s210
      %p217 = scmp.eq.s32.totalorder %s43, 1
      %p218 = por %p216, %p217
      %p219 = scmp.ne.s32.totalorder %s210, %s211
      %p220 = scmp.eq.s32.totalorder %s43, 0
      %p221 = por %p219, %p220
      %p222 = scmp.ne.s32.totalorder %s210, %s211
      %p223 = scmp.eq.s32.totalorder %s44, 1
      %p224 = por %p222, %p223
      %p226 = scmp.ne.s32.totalorder %s211, %s225
      %p227 = scmp.eq.s32.totalorder %s44, 0
      %p228 = por %p226, %p227
      %s230 = sadd.s32 %s229, 1
      %p233 = scmp.eq.s32.totalorder %s38, 1
      %p234 = scmp.ne.s32.totalorder %s229, %s231
      %p235 = scmp.eq.s32.totalorder %s38, 0
      %p236 = por %p234, %p235
      %p237 = scmp.ne.s32.totalorder %s229, %s231
      %p238 = scmp.eq.s32.totalorder %s43, 1
      %p239 = por %p237, %p238
      %p240 = scmp.ne.s32.totalorder %s231, %s232
      %p241 = scmp.eq.s32.totalorder %s43, 0
      %p242 = por %p240, %p241
      %p243 = scmp.ne.s32.totalorder %s231, %s232
      %p244 = scmp.eq.s32.totalorder %s44, 1
      %p245 = por %p243, %p244
      %p247 = scmp.ne.s32.totalorder %s232, %s246
      %p248 = scmp.eq.s32.totalorder %s44, 0
      %p249 = por %p247, %p248
      %s251 = sadd.s32 %s250, 1
      %p254 = scmp.eq.s32.totalorder %s38, 1
      %p255 = scmp.ne.s32.totalorder %s250, %s252
      %p256 = scmp.eq.s32.totalorder %s38, 0
      %p257 = por %p255, %p256
      %p258 = scmp.ne.s32.totalorder %s250, %s252
      %p259 = scmp.eq.s32.totalorder %s43, 1
      %p260 = por %p258, %p259
      %p261 = scmp.ne.s32.totalorder %s252, %s253
      %p262 = scmp.eq.s32.totalorder %s43, 0
      %p263 = por %p261, %p262
      %p264 = scmp.ne.s32.totalorder %s252, %s253
      %p265 = scmp.eq.s32.totalorder %s44, 1
      %p266 = por %p264, %p265
      %p268 = scmp.ne.s32.totalorder %s253, %s267
      %p269 = scmp.eq.s32.totalorder %s44, 0
      %p270 = por %p268, %p269
      %s272 = sadd.s32 %s271, 1
      %p275 = scmp.eq.s32.totalorder %s38, 1
      %p276 = scmp.ne.s32.totalorder %s271, %s273
      %p277 = scmp.eq.s32.totalorder %s38, 0
      %p278 = por %p276, %p277
      %p279 = scmp.ne.s32.totalorder %s271, %s273
      %p280 = scmp.eq.s32.totalorder %s43, 1
      %p281 = por %p279, %p280
      %p282 = scmp.ne.s32.totalorder %s273, %s274
      %p283 = scmp.eq.s32.totalorder %s43, 0
      %p284 = por %p282, %p283
      %p285 = scmp.ne.s32.totalorder %s273, %s274
      %p286 = scmp.eq.s32.totalorder %s44, 1
      %p287 = por %p285, %p286
      %p289 = scmp.ne.s32.totalorder %s274, %s288
      %p290 = scmp.eq.s32.totalorder %s44, 0
      %p291 = por %p289, %p290
      %s293 = sadd.s32 %s292, 1
      %p296 = scmp.eq.s32.totalorder %s38, 1
      %p297 = scmp.ne.s32.totalorder %s292, %s294
      %p298 = scmp.eq.s32.totalorder %s38, 0
      %p299 = por %p297, %p298
      %p300 = scmp.ne.s32.totalorder %s292, %s294
      %p301 = scmp.eq.s32.totalorder %s43, 1
      %p302 = por %p300, %p301
      %p303 = scmp.ne.s32.totalorder %s294, %s295
      %p304 = scmp.eq.s32.totalorder %s43, 0
      %p305 = por %p303, %p304
      %p306 = scmp.ne.s32.totalorder %s294, %s295
      %p307 = scmp.eq.s32.totalorder %s44, 1
      %p308 = por %p306, %p307
      %p310 = scmp.ne.s32.totalorder %s295, %s309
      %p311 = scmp.eq.s32.totalorder %s44, 0
      %p312 = por %p310, %p311
      %s314 = sadd.s32 %s313, 1
      %p317 = scmp.eq.s32.totalorder %s38, 1
      %p318 = scmp.ne.s32.totalorder %s313, %s315
      %p319 = scmp.eq.s32.totalorder %s38, 0
      %p320 = por %p318, %p319
      %p321 = scmp.ne.s32.totalorder %s313, %s315
      %p322 = scmp.eq.s32.totalorder %s43, 1
      %p323 = por %p321, %p322
      %p324 = scmp.ne.s32.totalorder %s315, %s316
      %p325 = scmp.eq.s32.totalorder %s43, 0
      %p326 = por %p324, %p325
      %p327 = scmp.ne.s32.totalorder %s315, %s316
      %p328 = scmp.eq.s32.totalorder %s44, 1
      %p329 = por %p327, %p328
      %p331 = scmp.ne.s32.totalorder %s316, %s330
      %p332 = scmp.eq.s32.totalorder %s44, 0
      %p333 = por %p331, %p332
      %s335 = sadd.s32 %s334, 1
      %p338 = scmp.eq.s32.totalorder %s38, 1
      %p339 = scmp.ne.s32.totalorder %s334, %s336
      %p340 = scmp.eq.s32.totalorder %s38, 0
      %p341 = por %p339, %p340
      %p342 = scmp.ne.s32.totalorder %s334, %s336
      %p343 = scmp.eq.s32.totalorder %s43, 1
      %p344 = por %p342, %p343
      %p345 = scmp.ne.s32.totalorder %s336, %s337
      %p346 = scmp.eq.s32.totalorder %s43, 0
      %p347 = por %p345, %p346
      %p348 = scmp.ne.s32.totalorder %s336, %s337
      %p349 = scmp.eq.s32.totalorder %s44, 1
      %p350 = por %p348, %p349
      %p352 = scmp.ne.s32.totalorder %s337, %s351
      %p353 = scmp.eq.s32.totalorder %s44, 0
      %p354 = por %p352, %p353
      %s356 = sadd.s32 %s355, 1
      %p359 = scmp.eq.s32.totalorder %s38, 1
      %p360 = scmp.ne.s32.totalorder %s355, %s357
      %p361 = scmp.eq.s32.totalorder %s38, 0
      %p362 = por %p360, %p361
      %p363 = scmp.ne.s32.totalorder %s355, %s357
      %p364 = scmp.eq.s32.totalorder %s43, 1
      %p365 = por %p363, %p364
      %p366 = scmp.ne.s32.totalorder %s357, %s358
      %p367 = scmp.eq.s32.totalorder %s43, 0
      %p368 = por %p366, %p367
      %p369 = scmp.ne.s32.totalorder %s357, %s358
      %p370 = scmp.eq.s32.totalorder %s44, 1
      %p371 = por %p369, %p370
      %p373 = scmp.ne.s32.totalorder %s358, %s372
      %p374 = scmp.eq.s32.totalorder %s44, 0
      %p375 = por %p373, %p374
      %s377 = sadd.s32 %s376, 1
      %p380 = scmp.eq.s32.totalorder %s38, 1
      %p381 = scmp.ne.s32.totalorder %s376, %s378
      %p382 = scmp.eq.s32.totalorder %s38, 0
      %p383 = por %p381, %p382
      %p384 = scmp.ne.s32.totalorder %s376, %s378
      %p385 = scmp.eq.s32.totalorder %s43, 1
      %p386 = por %p384, %p385
      %p387 = scmp.ne.s32.totalorder %s378, %s379
      %p388 = scmp.eq.s32.totalorder %s43, 0
      %p389 = por %p387, %p388
      %p390 = scmp.ne.s32.totalorder %s378, %s379
      %p391 = scmp.eq.s32.totalorder %s44, 1
      %p392 = por %p390, %p391
      %p394 = scmp.ne.s32.totalorder %s379, %s393
      %p395 = scmp.eq.s32.totalorder %s44, 0
      %p396 = por %p394, %p395
      %s398 = sadd.s32 %s397, 1
      %p401 = scmp.eq.s32.totalorder %s38, 1
      %p402 = scmp.ne.s32.totalorder %s397, %s399
      %p403 = scmp.eq.s32.totalorder %s38, 0
      %p404 = por %p402, %p403
      %p405 = scmp.ne.s32.totalorder %s397, %s399
      %p406 = scmp.eq.s32.totalorder %s43, 1
      %p407 = por %p405, %p406
      %p408 = scmp.ne.s32.totalorder %s399, %s400
      %p409 = scmp.eq.s32.totalorder %s43, 0
      %p410 = por %p408, %p409
      %p411 = scmp.ne.s32.totalorder %s399, %s400
      %p412 = scmp.eq.s32.totalorder %s44, 1
      %p413 = por %p411, %p412
      %p415 = scmp.ne.s32.totalorder %s400, %s414
      %p416 = scmp.eq.s32.totalorder %s44, 0
      %p417 = por %p415, %p416
      %s419 = sadd.s32 %s418, 1
      %p422 = scmp.eq.s32.totalorder %s38, 1
      %p423 = scmp.ne.s32.totalorder %s418, %s420
      %p424 = scmp.eq.s32.totalorder %s38, 0
      %p425 = por %p423, %p424
      %p426 = scmp.ne.s32.totalorder %s418, %s420
      %p427 = scmp.eq.s32.totalorder %s43, 1
      %p428 = por %p426, %p427
      %p429 = scmp.ne.s32.totalorder %s420, %s421
      %p430 = scmp.eq.s32.totalorder %s43, 0
      %p431 = por %p429, %p430
      %p432 = scmp.ne.s32.totalorder %s420, %s421
      %p433 = scmp.eq.s32.totalorder %s44, 1
      %p434 = por %p432, %p433
      %p436 = scmp.ne.s32.totalorder %s421, %s435
      %p437 = scmp.eq.s32.totalorder %s44, 0
      %p438 = por %p436, %p437
      %s439 = ssub.s32 %s38, %s45
      %p440 = scmp.eq.s32.totalorder %s439, 0
      %s442 = sadd.s32 %s441, 1
      %s443 = scalar_select %p440, %s441, %s442
      %p446 = pneg %p440
      %p447 = scmp.eq.s32.totalorder %s38, 1
      %p448 = por %p446, %p447
      %p449 = scmp.ne.s32.totalorder %s441, %s444
      %p450 = scmp.eq.s32.totalorder %s38, 0
      %p451 = por %p449, %p450
      %p452 = scmp.ne.s32.totalorder %s441, %s444
      %p453 = scmp.eq.s32.totalorder %s43, 1
      %p454 = por %p452, %p453
      %p455 = scmp.ne.s32.totalorder %s444, %s445
      %p456 = scmp.eq.s32.totalorder %s43, 0
      %p457 = por %p455, %p456
      %p458 = scmp.ne.s32.totalorder %s444, %s445
      %p459 = scmp.eq.s32.totalorder %s44, 1
      %p460 = por %p458, %p459
      %p462 = scmp.ne.s32.totalorder %s445, %s461
      %p463 = scmp.eq.s32.totalorder %s44, 0
      %p464 = por %p462, %p463
      %p465 = scmp.le.s32.totalorder 1, %s38
      %p466 = scmp.lt.s32.totalorder %s38, 3
      %p467 = pnand %p465, %p466
      %p468 = pneg %p467
      // Predicated region
      $region9: #{tpu_custom_call.1} parent=5 // pred_check
        _
      $region10: #{tpu_custom_call.1} parent=5 // pred_check_branch
        %470 = sbr.rel (%p467) target = $region12
      $region11: #{tpu_custom_call.1} parent=5 // pred_region
        %s471 = ssub.s32 %s38, 1
        // Predicated region
        $region13: #{tpu_custom_call.1} parent=11 // pred_check
          %p472 = pneg %p137
        $region14: #{tpu_custom_call.1} parent=11 // pred_check_branch
          %474 = sbr.rel (%p472) target = $region16
        $region15: #{tpu_custom_call.1} parent=11 // pred_region
          %s476 = ssub.s32 16384, 16384
          %477 = vsyncadd [#allocation9], %s476
          %s478 = sshll.u32 [#allocation8], 4
          %s479 = int_to_ptr.vmem [resolvable:$true] %s478
          %484 = dma.hbm_to_vmem [thread:$0]  %s3, 16384, %s479, [#allocation9], 256, 256, 16
        $region16: #{tpu_custom_call.1} parent=11 // pred_fallthru
          _
        // Predicated region
        $region17: #{tpu_custom_call.1} parent=11 // pred_check
          %p485 = pneg %p158
        $region18: #{tpu_custom_call.1} parent=11 // pred_check_branch
          %487 = sbr.rel (%p485) target = $region20
        $region19: #{tpu_custom_call.1} parent=11 // pred_region
          _
        $region20: #{tpu_custom_call.1} parent=11 // pred_fallthru
          _
        // Predicated region
        $region21: #{tpu_custom_call.1} parent=11 // pred_check
          %p488 = pneg %p179
        $region22: #{tpu_custom_call.1} parent=11 // pred_check_branch
          %490 = sbr.rel (%p488) target = $region24
        $region23: #{tpu_custom_call.1} parent=11 // pred_region
          %s492 = ssub.s32 2048, 2048
          %493 = vsyncadd [#allocation9], %s492
          %s494 = sshll.u32 [#allocation10], 4
          %s495 = int_to_ptr.vmem [resolvable:$true] %s494
          %500 = dma.hbm_to_vmem [thread:$0]  %s5, 2048, %s495, [#allocation9], 128, 128, 8
        $region24: #{tpu_custom_call.1} parent=11 // pred_fallthru
          _
        // Predicated region
        $region25: #{tpu_custom_call.1} parent=11 // pred_check
          %p501 = pneg %p200
        $region26: #{tpu_custom_call.1} parent=11 // pred_check_branch
          %503 = sbr.rel (%p501) target = $region28
        $region27: #{tpu_custom_call.1} parent=11 // pred_region
          %s505 = ssub.s32 32, 32
          %506 = vsyncadd [#allocation12], %s505
          %s508 = sshll.u32 [#allocation11], 4
          %s509 = int_to_ptr.vmem [resolvable:$true] %s508
          %511 = dma.hbm_to_vmem [thread:$0]  %s6, 32, %s509, [#allocation12]
        $region28: #{tpu_custom_call.1} parent=11 // pred_fallthru
          _
        // Predicated region
        $region29: #{tpu_custom_call.1} parent=11 // pred_check
          %p512 = pneg %p221
        $region30: #{tpu_custom_call.1} parent=11 // pred_check_branch
          %514 = sbr.rel (%p512) target = $region32
        $region31: #{tpu_custom_call.1} parent=11 // pred_region
          %s516 = ssub.s32 16, 16
          %517 = vsyncadd [#allocation12], %s516
          %s519 = sshll.u32 [#allocation13], 4
          %s520 = int_to_ptr.vmem [resolvable:$true] %s519
          %522 = dma.hbm_to_vmem [thread:$0]  %s7, 16, %s520, [#allocation12]
        $region32: #{tpu_custom_call.1} parent=11 // pred_fallthru
          _
        // Predicated region
        $region33: #{tpu_custom_call.1} parent=11 // pred_check
          %p523 = pneg %p242
        $region34: #{tpu_custom_call.1} parent=11 // pred_check_branch
          %525 = sbr.rel (%p523) target = $region36
        $region35: #{tpu_custom_call.1} parent=11 // pred_region
          %s527 = ssub.s32 16, 16
          %528 = vsyncadd [#allocation15], %s527
          %s530 = sshll.u32 [#allocation14], 4
          %s531 = int_to_ptr.vmem [resolvable:$true] %s530
          %533 = dma.hbm_to_vmem [thread:$0]  %s8, 16, %s531, [#allocation15]
        $region36: #{tpu_custom_call.1} parent=11 // pred_fallthru
          _
        // Predicated region
        $region37: #{tpu_custom_call.1} parent=11 // pred_check
          %p534 = pneg %p263
        $region38: #{tpu_custom_call.1} parent=11 // pred_check_branch
          %536 = sbr.rel (%p534) target = $region40
        $region39: #{tpu_custom_call.1} parent=11 // pred_region
          %s538 = ssub.s32 6144, 6144
          %539 = vsyncadd [#allocation15], %s538
          %s540 = sshll.u32 [#allocation16], 4
          %s541 = int_to_ptr.vmem [resolvable:$true] %s540
          %546 = dma.hbm_to_vmem [thread:$0]  %s9, 6144, %s541, [#allocation15], 192, 192, 12
        $region40: #{tpu_custom_call.1} parent=11 // pred_fallthru
          _
        // Predicated region
        $region41: #{tpu_custom_call.1} parent=11 // pred_check
          %p547 = pneg %p284
        $region42: #{tpu_custom_call.1} parent=11 // pred_check_branch
          %549 = sbr.rel (%p547) target = $region44
        $region43: #{tpu_custom_call.1} parent=11 // pred_region
          %s551 = ssub.s32 48, 48
          %552 = vsyncadd [#allocation18], %s551
          %s554 = sshll.u32 [#allocation17], 4
          %s555 = int_to_ptr.vmem [resolvable:$true] %s554
          %557 = dma.hbm_to_vmem [thread:$0]  %s10, 48, %s555, [#allocation18]
        $region44: #{tpu_custom_call.1} parent=11 // pred_fallthru
          _
        // Predicated region
        $region45: #{tpu_custom_call.1} parent=11 // pred_check
          %p558 = pneg %p305
        $region46: #{tpu_custom_call.1} parent=11 // pred_check_branch
          %560 = sbr.rel (%p558) target = $region48
        $region47: #{tpu_custom_call.1} parent=11 // pred_region
          %s562 = ssub.s32 3072, 3072
          %563 = vsyncadd [#allocation18], %s562
          %s564 = sshll.u32 [#allocation19], 4
          %s565 = int_to_ptr.vmem [resolvable:$true] %s564
          %570 = dma.hbm_to_vmem [thread:$0]  %s11, 3072, %s565, [#allocation18], 192, 192, 12
        $region48: #{tpu_custom_call.1} parent=11 // pred_fallthru
          _
        // Predicated region
        $region49: #{tpu_custom_call.1} parent=11 // pred_check
          %p571 = pneg %p326
        $region50: #{tpu_custom_call.1} parent=11 // pred_check_branch
          %573 = sbr.rel (%p571) target = $region52
        $region51: #{tpu_custom_call.1} parent=11 // pred_region
          _
        $region52: #{tpu_custom_call.1} parent=11 // pred_fallthru
          _
        // Predicated region
        $region53: #{tpu_custom_call.1} parent=11 // pred_check
          %p574 = pneg %p347
        $region54: #{tpu_custom_call.1} parent=11 // pred_check_branch
          %576 = sbr.rel (%p574) target = $region56
        $region55: #{tpu_custom_call.1} parent=11 // pred_region
          %s578 = ssub.s32 16384, 16384
          %579 = vsyncadd [#allocation21], %s578
          %s580 = sshll.u32 [#allocation20], 4
          %s581 = int_to_ptr.vmem [resolvable:$true] %s580
          %586 = dma.hbm_to_vmem [thread:$0]  %s13, 16384, %s581, [#allocation21], 256, 256, 16
        $region56: #{tpu_custom_call.1} parent=11 // pred_fallthru
          _
        // Predicated region
        $region57: #{tpu_custom_call.1} parent=11 // pred_check
          %p587 = pneg %p368
        $region58: #{tpu_custom_call.1} parent=11 // pred_check_branch
          %589 = sbr.rel (%p587) target = $region60
        $region59: #{tpu_custom_call.1} parent=11 // pred_region
          _
        $region60: #{tpu_custom_call.1} parent=11 // pred_fallthru
          _
        // Predicated region
        $region61: #{tpu_custom_call.1} parent=11 // pred_check
          %p590 = pneg %p389
        $region62: #{tpu_custom_call.1} parent=11 // pred_check_branch
          %592 = sbr.rel (%p590) target = $region64
        $region63: #{tpu_custom_call.1} parent=11 // pred_region
          %s594 = ssub.s32 16384, 16384
          %595 = vsyncadd [#allocation21], %s594
          %s596 = sshll.u32 [#allocation22], 4
          %s597 = int_to_ptr.vmem [resolvable:$true] %s596
          %602 = dma.hbm_to_vmem [thread:$0]  %s15, 16384, %s597, [#allocation21], 256, 256, 16
        $region64: #{tpu_custom_call.1} parent=11 // pred_fallthru
          _
        // Predicated region
        $region65: #{tpu_custom_call.1} parent=11 // pred_check
          %p603 = pneg %p410
        $region66: #{tpu_custom_call.1} parent=11 // pred_check_branch
          %605 = sbr.rel (%p603) target = $region68
        $region67: #{tpu_custom_call.1} parent=11 // pred_region
          _
        $region68: #{tpu_custom_call.1} parent=11 // pred_fallthru
          _
        // Predicated region
        $region69: #{tpu_custom_call.1} parent=11 // pred_check
          %p606 = pneg %p431
        $region70: #{tpu_custom_call.1} parent=11 // pred_check_branch
          %608 = sbr.rel (%p606) target = $region72
        $region71: #{tpu_custom_call.1} parent=11 // pred_region
          _
        $region72: #{tpu_custom_call.1} parent=11 // pred_fallthru
          _
      $region12: #{tpu_custom_call.1} parent=5 // pred_fallthru
        _
      %p609 = scmp.lt.s32.totalorder %s38, 2
      // Predicated region
      $region73: #{tpu_custom_call.1} parent=5 // pred_check
        %p610 = pneg %p609
      $region74: #{tpu_custom_call.1} parent=5 // pred_check_branch
        %612 = sbr.rel (%p610) target = $region76
      $region75: #{tpu_custom_call.1} parent=5 // pred_region
        // Predicated region
        $region77: #{tpu_custom_call.1} parent=75 // pred_check
          %p613 = pneg %p58
        $region78: #{tpu_custom_call.1} parent=75 // pred_check_branch
          %615 = sbr.rel (%p613) target = $region80
        $region79: #{tpu_custom_call.1} parent=75 // pred_region
          %s616 = sand.u32 %s48, 1
          %s617 = scalar_lea.sflag [#allocation3], %s616
          %s618 = sand.u32 %s48, 1
          %s619 = smul.addr %s618, 32
          %s620 = scalar_lea.vmem [#allocation2], %s619
          %s622 = ssub.s32 512, 512
          %623 = vsyncadd %s617, %s622
          %s624 = smul.addr %s38, 4
          %s625 = smul.addr %s624, 128
          %s626 = scalar_lea.hbm %s0, %s625
          %s627 = sshll.u32 %s620, 4
          %s628 = int_to_ptr.vmem [resolvable:$true] %s627
          %633 = dma.hbm_to_vmem [thread:$0]  %s626, 512, %s628, %s617, 128, 128, 8
        $region80: #{tpu_custom_call.1} parent=75 // pred_fallthru
          _
        // Predicated region
        $region81: #{tpu_custom_call.1} parent=75 // pred_check
          %p634 = pneg %p84
        $region82: #{tpu_custom_call.1} parent=75 // pred_check_branch
          %636 = sbr.rel (%p634) target = $region84
        $region83: #{tpu_custom_call.1} parent=75 // pred_region
          %s637 = sand.u32 %s38, 1
          %s638 = scalar_lea.sflag [#allocation6], %s637
          %s639 = sand.u32 %s74, 1
          %s640 = smul.addr %s639, 32
          %s641 = scalar_lea.vmem [#allocation5], %s640
          %s643 = ssub.s32 512, 512
          %644 = vsyncadd %s638, %s643
          %s645 = smul.addr %s38, 4
          %s646 = smul.addr %s645, 128
          %s647 = scalar_lea.hbm %s1, %s646
          %s648 = sshll.u32 %s641, 4
          %s649 = int_to_ptr.vmem [resolvable:$true] %s648
          %654 = dma.hbm_to_vmem [thread:$0]  %s647, 512, %s649, %s638, 128, 128, 8
        $region84: #{tpu_custom_call.1} parent=75 // pred_fallthru
          _
        // Predicated region
        $region85: #{tpu_custom_call.1} parent=75 // pred_check
          %p655 = pneg %p110
        $region86: #{tpu_custom_call.1} parent=75 // pred_check_branch
          %657 = sbr.rel (%p655) target = $region88
        $region87: #{tpu_custom_call.1} parent=75 // pred_region
          %s658 = sand.u32 %s38, 1
          %s659 = scalar_lea.sflag [#allocation6], %s658
          %s660 = sand.u32 %s100, 1
          %s661 = smul.addr %s660, 32
          %s662 = scalar_lea.vmem [#allocation7], %s661
          %s664 = ssub.s32 512, 512
          %665 = vsyncadd %s659, %s664
          %s666 = smul.addr %s38, 4
          %s667 = smul.addr %s666, 128
          %s668 = scalar_lea.hbm %s2, %s667
          %s670 = sshll.u32 %s662, 4
          %s671 = int_to_ptr.vmem [resolvable:$true] %s670
          %673 = dma.hbm_to_vmem [thread:$0]  %s668, 512, %s671, %s659
        $region88: #{tpu_custom_call.1} parent=75 // pred_fallthru
          _
      $region76: #{tpu_custom_call.1} parent=5 // pred_fallthru
        _
      %p674 = scmp.le.s32.totalorder 1, %s38
      %p675 = scmp.lt.s32.totalorder %s38, 3
      %p676 = pnand %p674, %p675
      %p677 = pneg %p676
      // Predicated region
      $region89: #{tpu_custom_call.1} parent=5 // pred_check
        _
      $region90: #{tpu_custom_call.1} parent=5 // pred_check_branch
        %679 = sbr.rel (%p676) target = $region92
      $region91: #{tpu_custom_call.1} parent=5 // pred_region
        %s680 = ssub.s32 %s38, 1
        %s681 = sand.u32 %s51, 1
        %s682 = scalar_lea.sflag [#allocation3], %s681
        %s683 = sand.u32 %s51, 1
        %s684 = smul.addr %s683, 32
        %s685 = scalar_lea.vmem [#allocation2], %s684
        // Predicated region
        $region93: #{tpu_custom_call.1} parent=91 // pred_check
          %p686 = pneg %p64
        $region94: #{tpu_custom_call.1} parent=91 // pred_check_branch
          %688 = sbr.rel (%p686) target = $region96
        $region95: #{tpu_custom_call.1} parent=91 // pred_region
          %689 = dma.done %s682, 512
        $region96: #{tpu_custom_call.1} parent=91 // pred_fallthru
          _
        %s690 = sand.u32 %s43, 1
        %s691 = scalar_lea.sflag [#allocation6], %s690
        %s692 = sand.u32 %s77, 1
        %s693 = smul.addr %s692, 32
        %s694 = scalar_lea.vmem [#allocation5], %s693
        // Predicated region
        $region97: #{tpu_custom_call.1} parent=91 // pred_check
          %p695 = pneg %p90
        $region98: #{tpu_custom_call.1} parent=91 // pred_check_branch
          %697 = sbr.rel (%p695) target = $region100
        $region99: #{tpu_custom_call.1} parent=91 // pred_region
          %698 = dma.done %s691, 512
        $region100: #{tpu_custom_call.1} parent=91 // pred_fallthru
          _
        %s699 = sand.u32 %s43, 1
        %s700 = scalar_lea.sflag [#allocation6], %s699
        %s701 = sand.u32 %s103, 1
        %s702 = smul.addr %s701, 32
        %s703 = scalar_lea.vmem [#allocation7], %s702
        // Predicated region
        $region101: #{tpu_custom_call.1} parent=91 // pred_check
          %p704 = pneg %p116
        $region102: #{tpu_custom_call.1} parent=91 // pred_check_branch
          %706 = sbr.rel (%p704) target = $region104
        $region103: #{tpu_custom_call.1} parent=91 // pred_region
          %707 = dma.done %s700, 512
        $region104: #{tpu_custom_call.1} parent=91 // pred_fallthru
          _
        // Predicated region
        $region105: #{tpu_custom_call.1} parent=91 // pred_check
          %p708 = pneg %p137
        $region106: #{tpu_custom_call.1} parent=91 // pred_check_branch
          %710 = sbr.rel (%p708) target = $region108
        $region107: #{tpu_custom_call.1} parent=91 // pred_region
          %711 = dma.done [#allocation9], 16384
        $region108: #{tpu_custom_call.1} parent=91 // pred_fallthru
          _
        // Predicated region
        $region109: #{tpu_custom_call.1} parent=91 // pred_check
          %p712 = pneg %p179
        $region110: #{tpu_custom_call.1} parent=91 // pred_check_branch
          %714 = sbr.rel (%p712) target = $region112
        $region111: #{tpu_custom_call.1} parent=91 // pred_region
          %715 = dma.done [#allocation9], 2048
        $region112: #{tpu_custom_call.1} parent=91 // pred_fallthru
          _
        // Predicated region
        $region113: #{tpu_custom_call.1} parent=91 // pred_check
          %p716 = pneg %p200
        $region114: #{tpu_custom_call.1} parent=91 // pred_check_branch
          %718 = sbr.rel (%p716) target = $region116
        $region115: #{tpu_custom_call.1} parent=91 // pred_region
          %719 = dma.done [#allocation12], 32
        $region116: #{tpu_custom_call.1} parent=91 // pred_fallthru
          _
        // Predicated region
        $region117: #{tpu_custom_call.1} parent=91 // pred_check
          %p720 = pneg %p221
        $region118: #{tpu_custom_call.1} parent=91 // pred_check_branch
          %722 = sbr.rel (%p720) target = $region120
        $region119: #{tpu_custom_call.1} parent=91 // pred_region
          %723 = dma.done [#allocation12], 16
        $region120: #{tpu_custom_call.1} parent=91 // pred_fallthru
          _
        // Predicated region
        $region121: #{tpu_custom_call.1} parent=91 // pred_check
          %p724 = pneg %p242
        $region122: #{tpu_custom_call.1} parent=91 // pred_check_branch
          %726 = sbr.rel (%p724) target = $region124
        $region123: #{tpu_custom_call.1} parent=91 // pred_region
          %727 = dma.done [#allocation15], 16
        $region124: #{tpu_custom_call.1} parent=91 // pred_fallthru
          _
        // Predicated region
        $region125: #{tpu_custom_call.1} parent=91 // pred_check
          %p728 = pneg %p263
        $region126: #{tpu_custom_call.1} parent=91 // pred_check_branch
          %730 = sbr.rel (%p728) target = $region128
        $region127: #{tpu_custom_call.1} parent=91 // pred_region
          %731 = dma.done [#allocation15], 6144
        $region128: #{tpu_custom_call.1} parent=91 // pred_fallthru
          _
        // Predicated region
        $region129: #{tpu_custom_call.1} parent=91 // pred_check
          %p732 = pneg %p284
        $region130: #{tpu_custom_call.1} parent=91 // pred_check_branch
          %734 = sbr.rel (%p732) target = $region132
        $region131: #{tpu_custom_call.1} parent=91 // pred_region
          %735 = dma.done [#allocation18], 48
        $region132: #{tpu_custom_call.1} parent=91 // pred_fallthru
          _
        // Predicated region
        $region133: #{tpu_custom_call.1} parent=91 // pred_check
          %p736 = pneg %p305
        $region134: #{tpu_custom_call.1} parent=91 // pred_check_branch
          %738 = sbr.rel (%p736) target = $region136
        $region135: #{tpu_custom_call.1} parent=91 // pred_region
          %739 = dma.done [#allocation18], 3072
        $region136: #{tpu_custom_call.1} parent=91 // pred_fallthru
          _
        // Predicated region
        $region137: #{tpu_custom_call.1} parent=91 // pred_check
          %p740 = pneg %p347
        $region138: #{tpu_custom_call.1} parent=91 // pred_check_branch
          %742 = sbr.rel (%p740) target = $region140
        $region139: #{tpu_custom_call.1} parent=91 // pred_region
          %743 = dma.done [#allocation21], 16384
        $region140: #{tpu_custom_call.1} parent=91 // pred_fallthru
          _
        // Predicated region
        $region141: #{tpu_custom_call.1} parent=91 // pred_check
          %p744 = pneg %p389
        $region142: #{tpu_custom_call.1} parent=91 // pred_check_branch
          %746 = sbr.rel (%p744) target = $region144
        $region143: #{tpu_custom_call.1} parent=91 // pred_region
          %747 = dma.done [#allocation21], 16384
        $region144: #{tpu_custom_call.1} parent=91 // pred_fallthru
          _
        %s748 = sand.u32 %s51, 1
        %s749 = scalar_lea.sflag [#allocation3], %s748
        %s750 = sand.u32 %s51, 1
        %s751 = smul.addr %s750, 32
        %s752 = scalar_lea.vmem [#allocation2], %s751
        %p753 = pneg %p64
        %p754 = pneg %p61
        %s755 = sand.u32 %s43, 1
        %s756 = scalar_lea.sflag [#allocation6], %s755
        %s757 = sand.u32 %s77, 1
        %s758 = smul.addr %s757, 32
        %s759 = scalar_lea.vmem [#allocation5], %s758
        %p760 = pneg %p90
        %p761 = pneg %p87
        %s762 = sand.u32 %s43, 1
        %s763 = scalar_lea.sflag [#allocation6], %s762
        %s764 = sand.u32 %s103, 1
        %s765 = smul.addr %s764, 32
        %s766 = scalar_lea.vmem [#allocation7], %s765
        %p767 = pneg %p116
        %p768 = pneg %p113
        %p769 = pneg %p137
        %p770 = pneg %p134
        %p771 = pneg %p158
        %p772 = pneg %p155
        %p773 = pneg %p179
        %p774 = pneg %p176
        %p775 = pneg %p200
        %p776 = pneg %p197
        %p777 = pneg %p221
        %p778 = pneg %p218
        %p779 = pneg %p242
        %p780 = pneg %p239
        %p781 = pneg %p263
        %p782 = pneg %p260
        %p783 = pneg %p284
        %p784 = pneg %p281
        %p785 = pneg %p305
        %p786 = pneg %p302
        %p787 = pneg %p326
        %p788 = pneg %p323
        %p789 = pneg %p347
        %p790 = pneg %p344
        %p791 = pneg %p368
        %p792 = pneg %p365
        %p793 = pneg %p389
        %p794 = pneg %p386
        %p795 = pneg %p410
        %p796 = pneg %p407
        %p797 = pneg %p431
        %p798 = pneg %p428
        %p799 = pneg %p457
        %p800 = pneg %p454
        %s801 = sand.u32 %s444, 1
        %s802 = scalar_lea.sflag [#allocation4], %s801
        %s803 = sand.u32 %s444, 1
        %s804 = smul.addr %s803, 32
        %s805 = scalar_lea.vmem [#allocation23], %s804
        %v807 = vld [vmem:[%s703] sm:$0xff]
        %v808 = vld [vmem:[%s703 + $0x8] sm:$0xff]
        %v809 = vld [vmem:[%s703 + $0x10] sm:$0xff]
        %v810 = vld [vmem:[%s703 + $0x18] sm:$0xff]
        %v811 = vld [vmem:[%s685] sm:$0xff]
        %v812 = vld [vmem:[%s685 + $0x8] sm:$0xff]
        %v813 = vld [vmem:[%s685 + $0x10] sm:$0xff]
        %v814 = vld [vmem:[%s685 + $0x18] sm:$0xff]
        %v815 = vld [vmem:[%s694] sm:$0xff]
        %v816 = vld [vmem:[%s694 + $0x8] sm:$0xff]
        %v817 = vld [vmem:[%s694 + $0x10] sm:$0xff]
        %v818 = vld [vmem:[%s694 + $0x18] sm:$0xff]
        %v819 = vpack.c.bf16 %v807, %v807
        %v820 = vpack.c.bf16 %v808, %v808
        %v821 = vpack.c.bf16 %v809, %v809
        %v822 = vpack.c.bf16 %v810, %v810
        %v823 = vld [vmem:[#allocation8] sm:$0xff]
        %v824 = vld [vmem:[#allocation8 + $0x8] sm:$0xff]
        %v825 = vld [vmem:[#allocation8 + $0x10] sm:$0xff]
        %v826 = vld [vmem:[#allocation8 + $0x18] sm:$0xff]
        %v827 = vld [vmem:[#allocation8 + $0x20] sm:$0xff]
        %v828 = vld [vmem:[#allocation8 + $0x28] sm:$0xff]
        %v829 = vld [vmem:[#allocation8 + $0x30] sm:$0xff]
        %v830 = vld [vmem:[#allocation8 + $0x38] sm:$0xff]
        %v831 = vld [vmem:[#allocation8 + $0x40] sm:$0xff]
        %v832 = vld [vmem:[#allocation8 + $0x48] sm:$0xff]
        %v833 = vld [vmem:[#allocation8 + $0x50] sm:$0xff]
        %v834 = vld [vmem:[#allocation8 + $0x58] sm:$0xff]
        %v835 = vld [vmem:[#allocation8 + $0x60] sm:$0xff]
        %v836 = vld [vmem:[#allocation8 + $0x68] sm:$0xff]
        %v837 = vld [vmem:[#allocation8 + $0x70] sm:$0xff]
        %v838 = vld [vmem:[#allocation8 + $0x78] sm:$0xff]
        %v839 = vld [vmem:[#allocation8 + $0x80] sm:$0xff]
        %v840 = vld [vmem:[#allocation8 + $0x88] sm:$0xff]
        %v841 = vld [vmem:[#allocation8 + $0x90] sm:$0xff]
        %v842 = vld [vmem:[#allocation8 + $0x98] sm:$0xff]
        %v843 = vld [vmem:[#allocation8 + $0xa0] sm:$0xff]
        %v844 = vld [vmem:[#allocation8 + $0xa8] sm:$0xff]
        %v845 = vld [vmem:[#allocation8 + $0xb0] sm:$0xff]
        %v846 = vld [vmem:[#allocation8 + $0xb8] sm:$0xff]
        %v847 = vld [vmem:[#allocation8 + $0xc0] sm:$0xff]
        %v848 = vld [vmem:[#allocation8 + $0xc8] sm:$0xff]
        %v849 = vld [vmem:[#allocation8 + $0xd0] sm:$0xff]
        %v850 = vld [vmem:[#allocation8 + $0xd8] sm:$0xff]
        %v851 = vld [vmem:[#allocation8 + $0xe0] sm:$0xff]
        %v852 = vld [vmem:[#allocation8 + $0xe8] sm:$0xff]
        %v853 = vld [vmem:[#allocation8 + $0xf0] sm:$0xff]
        %v854 = vld [vmem:[#allocation8 + $0xf8] sm:$0xff]
        %v855 = vld [vmem:[#allocation8 + $0x100] sm:$0xff]
        %v856 = vld [vmem:[#allocation8 + $0x108] sm:$0xff]
        %v857 = vld [vmem:[#allocation8 + $0x110] sm:$0xff]
        %v858 = vld [vmem:[#allocation8 + $0x118] sm:$0xff]
        %v859 = vld [vmem:[#allocation8 + $0x120] sm:$0xff]
        %v860 = vld [vmem:[#allocation8 + $0x128] sm:$0xff]
        %v861 = vld [vmem:[#allocation8 + $0x130] sm:$0xff]
        %v862 = vld [vmem:[#allocation8 + $0x138] sm:$0xff]
        %v863 = vld [vmem:[#allocation8 + $0x140] sm:$0xff]
        %v864 = vld [vmem:[#allocation8 + $0x148] sm:$0xff]
        %v865 = vld [vmem:[#allocation8 + $0x150] sm:$0xff]
        %v866 = vld [vmem:[#allocation8 + $0x158] sm:$0xff]
        %v867 = vld [vmem:[#allocation8 + $0x160] sm:$0xff]
        %v868 = vld [vmem:[#allocation8 + $0x168] sm:$0xff]
        %v869 = vld [vmem:[#allocation8 + $0x170] sm:$0xff]
        %v870 = vld [vmem:[#allocation8 + $0x178] sm:$0xff]
        %v871 = vld [vmem:[#allocation8 + $0x180] sm:$0xff]
        %v872 = vld [vmem:[#allocation8 + $0x188] sm:$0xff]
        %v873 = vld [vmem:[#allocation8 + $0x190] sm:$0xff]
        %v874 = vld [vmem:[#allocation8 + $0x198] sm:$0xff]
        %v875 = vld [vmem:[#allocation8 + $0x1a0] sm:$0xff]
        %v876 = vld [vmem:[#allocation8 + $0x1a8] sm:$0xff]
        %v877 = vld [vmem:[#allocation8 + $0x1b0] sm:$0xff]
        %v878 = vld [vmem:[#allocation8 + $0x1b8] sm:$0xff]
        %v879 = vld [vmem:[#allocation8 + $0x1c0] sm:$0xff]
        %v880 = vld [vmem:[#allocation8 + $0x1c8] sm:$0xff]
        %v881 = vld [vmem:[#allocation8 + $0x1d0] sm:$0xff]
        %v882 = vld [vmem:[#allocation8 + $0x1d8] sm:$0xff]
        %v883 = vld [vmem:[#allocation8 + $0x1e0] sm:$0xff]
        %v884 = vld [vmem:[#allocation8 + $0x1e8] sm:$0xff]
        %v885 = vld [vmem:[#allocation8 + $0x1f0] sm:$0xff]
        %v886 = vld [vmem:[#allocation8 + $0x1f8] sm:$0xff]
        %v887 = vld [vmem:[#allocation8 + $0x200] sm:$0xff]
        %v888 = vld [vmem:[#allocation8 + $0x208] sm:$0xff]
        %v889 = vld [vmem:[#allocation8 + $0x210] sm:$0xff]
        %v890 = vld [vmem:[#allocation8 + $0x218] sm:$0xff]
        %v891 = vld [vmem:[#allocation8 + $0x220] sm:$0xff]
        %v892 = vld [vmem:[#allocation8 + $0x228] sm:$0xff]
        %v893 = vld [vmem:[#allocation8 + $0x230] sm:$0xff]
        %v894 = vld [vmem:[#allocation8 + $0x238] sm:$0xff]
        %v895 = vld [vmem:[#allocation8 + $0x240] sm:$0xff]
        %v896 = vld [vmem:[#allocation8 + $0x248] sm:$0xff]
        %v897 = vld [vmem:[#allocation8 + $0x250] sm:$0xff]
        %v898 = vld [vmem:[#allocation8 + $0x258] sm:$0xff]
        %v899 = vld [vmem:[#allocation8 + $0x260] sm:$0xff]
        %v900 = vld [vmem:[#allocation8 + $0x268] sm:$0xff]
        %v901 = vld [vmem:[#allocation8 + $0x270] sm:$0xff]
        %v902 = vld [vmem:[#allocation8 + $0x278] sm:$0xff]
        %v903 = vld [vmem:[#allocation8 + $0x280] sm:$0xff]
        %v904 = vld [vmem:[#allocation8 + $0x288] sm:$0xff]
        %v905 = vld [vmem:[#allocation8 + $0x290] sm:$0xff]
        %v906 = vld [vmem:[#allocation8 + $0x298] sm:$0xff]
        %v907 = vld [vmem:[#allocation8 + $0x2a0] sm:$0xff]
        %v908 = vld [vmem:[#allocation8 + $0x2a8] sm:$0xff]
        %v909 = vld [vmem:[#allocation8 + $0x2b0] sm:$0xff]
        %v910 = vld [vmem:[#allocation8 + $0x2b8] sm:$0xff]
        %v911 = vld [vmem:[#allocation8 + $0x2c0] sm:$0xff]
        %v912 = vld [vmem:[#allocation8 + $0x2c8] sm:$0xff]
        %v913 = vld [vmem:[#allocation8 + $0x2d0] sm:$0xff]
        %v914 = vld [vmem:[#allocation8 + $0x2d8] sm:$0xff]
        %v915 = vld [vmem:[#allocation8 + $0x2e0] sm:$0xff]
        %v916 = vld [vmem:[#allocation8 + $0x2e8] sm:$0xff]
        %v917 = vld [vmem:[#allocation8 + $0x2f0] sm:$0xff]
        %v918 = vld [vmem:[#allocation8 + $0x2f8] sm:$0xff]
        %v919 = vld [vmem:[#allocation8 + $0x300] sm:$0xff]
        %v920 = vld [vmem:[#allocation8 + $0x308] sm:$0xff]
        %v921 = vld [vmem:[#allocation8 + $0x310] sm:$0xff]
        %v922 = vld [vmem:[#allocation8 + $0x318] sm:$0xff]
        %v923 = vld [vmem:[#allocation8 + $0x320] sm:$0xff]
        %v924 = vld [vmem:[#allocation8 + $0x328] sm:$0xff]
        %v925 = vld [vmem:[#allocation8 + $0x330] sm:$0xff]
        %v926 = vld [vmem:[#allocation8 + $0x338] sm:$0xff]
        %v927 = vld [vmem:[#allocation8 + $0x340] sm:$0xff]
        %v928 = vld [vmem:[#allocation8 + $0x348] sm:$0xff]
        %v929 = vld [vmem:[#allocation8 + $0x350] sm:$0xff]
        %v930 = vld [vmem:[#allocation8 + $0x358] sm:$0xff]
        %v931 = vld [vmem:[#allocation8 + $0x360] sm:$0xff]
        %v932 = vld [vmem:[#allocation8 + $0x368] sm:$0xff]
        %v933 = vld [vmem:[#allocation8 + $0x370] sm:$0xff]
        %v934 = vld [vmem:[#allocation8 + $0x378] sm:$0xff]
        %v935 = vld [vmem:[#allocation8 + $0x380] sm:$0xff]
        %v936 = vld [vmem:[#allocation8 + $0x388] sm:$0xff]
        %v937 = vld [vmem:[#allocation8 + $0x390] sm:$0xff]
        %v938 = vld [vmem:[#allocation8 + $0x398] sm:$0xff]
        %v939 = vld [vmem:[#allocation8 + $0x3a0] sm:$0xff]
        %v940 = vld [vmem:[#allocation8 + $0x3a8] sm:$0xff]
        %v941 = vld [vmem:[#allocation8 + $0x3b0] sm:$0xff]
        %v942 = vld [vmem:[#allocation8 + $0x3b8] sm:$0xff]
        %v943 = vld [vmem:[#allocation8 + $0x3c0] sm:$0xff]
        %v944 = vld [vmem:[#allocation8 + $0x3c8] sm:$0xff]
        %v945 = vld [vmem:[#allocation8 + $0x3d0] sm:$0xff]
        %v946 = vld [vmem:[#allocation8 + $0x3d8] sm:$0xff]
        %v947 = vld [vmem:[#allocation8 + $0x3e0] sm:$0xff]
        %v948 = vld [vmem:[#allocation8 + $0x3e8] sm:$0xff]
        %v949 = vld [vmem:[#allocation8 + $0x3f0] sm:$0xff]
        %v950 = vld [vmem:[#allocation8 + $0x3f8] sm:$0xff]
        %v951 = vld [vmem:[%s4] sm:$0xf]
        %v953 = vlaneseq
        %v954 = vshrl.u32 %v953, 7
        %v955 = vsub.s32 0, %v954
        %v956 = vrot.slane %v951, %v955
        %v957 = vlaneseq
        %v958 = vshrl.u32 %v957, 7
        %v959 = vsub.s32 1, %v958
        %v960 = vrot.slane %v951, %v959
        %v961 = vlaneseq
        %v962 = vshrl.u32 %v961, 7
        %v963 = vsub.s32 2, %v962
        %v964 = vrot.slane %v951, %v963
        %v965 = vlaneseq
        %v966 = vshrl.u32 %v965, 7
        %v967 = vsub.s32 3, %v966
        %v968 = vrot.slane %v951, %v967
        %v1101 = vunpack.c.l.b16 %v823
        %v1102 = vunpack.c.h.b16 %v823
        %v1103 = vunpack.c.l.b16 %v824
        %v1104 = vunpack.c.h.b16 %v824
        %v1105 = vunpack.c.l.b16 %v825
        %v1106 = vunpack.c.h.b16 %v825
        %v1107 = vunpack.c.l.b16 %v826
        %v1108 = vunpack.c.h.b16 %v826
        %v1109 = vunpack.c.l.b16 %v827
        %v1110 = vunpack.c.h.b16 %v827
        %v1111 = vunpack.c.l.b16 %v828
        %v1112 = vunpack.c.h.b16 %v828
        %v1113 = vunpack.c.l.b16 %v829
        %v1114 = vunpack.c.h.b16 %v829
        %v1115 = vunpack.c.l.b16 %v830
        %v1116 = vunpack.c.h.b16 %v830
        %v1117 = vunpack.c.l.b16 %v831
        %v1118 = vunpack.c.h.b16 %v831
        %v1119 = vunpack.c.l.b16 %v832
        %v1120 = vunpack.c.h.b16 %v832
        %v1121 = vunpack.c.l.b16 %v833
        %v1122 = vunpack.c.h.b16 %v833
        %v1123 = vunpack.c.l.b16 %v834
        %v1124 = vunpack.c.h.b16 %v834
        %v1125 = vunpack.c.l.b16 %v835
        %v1126 = vunpack.c.h.b16 %v835
        %v1127 = vunpack.c.l.b16 %v836
        %v1128 = vunpack.c.h.b16 %v836
        %v1129 = vunpack.c.l.b16 %v837
        %v1130 = vunpack.c.h.b16 %v837
        %v1131 = vunpack.c.l.b16 %v838
        %v1132 = vunpack.c.h.b16 %v838
        %v1133 = vunpack.c.l.b16 %v839
        %v1134 = vunpack.c.h.b16 %v839
        %v1135 = vunpack.c.l.b16 %v840
        %v1136 = vunpack.c.h.b16 %v840
        %v1137 = vunpack.c.l.b16 %v841
        %v1138 = vunpack.c.h.b16 %v841
        %v1139 = vunpack.c.l.b16 %v842
        %v1140 = vunpack.c.h.b16 %v842
        %v1141 = vunpack.c.l.b16 %v843
        %v1142 = vunpack.c.h.b16 %v843
        %v1143 = vunpack.c.l.b16 %v844
        %v1144 = vunpack.c.h.b16 %v844
        %v1145 = vunpack.c.l.b16 %v845
        %v1146 = vunpack.c.h.b16 %v845
        %v1147 = vunpack.c.l.b16 %v846
        %v1148 = vunpack.c.h.b16 %v846
        %v1149 = vunpack.c.l.b16 %v847
        %v1150 = vunpack.c.h.b16 %v847
        %v1151 = vunpack.c.l.b16 %v848
        %v1152 = vunpack.c.h.b16 %v848
        %v1153 = vunpack.c.l.b16 %v849
        %v1154 = vunpack.c.h.b16 %v849
        %v1155 = vunpack.c.l.b16 %v850
        %v1156 = vunpack.c.h.b16 %v850
        %v1157 = vunpack.c.l.b16 %v851
        %v1158 = vunpack.c.h.b16 %v851
        %v1159 = vunpack.c.l.b16 %v852
        %v1160 = vunpack.c.h.b16 %v852
        %v1161 = vunpack.c.l.b16 %v853
        %v1162 = vunpack.c.h.b16 %v853
        %v1163 = vunpack.c.l.b16 %v854
        %v1164 = vunpack.c.h.b16 %v854
        %v1165 = vunpack.c.l.b16 %v855
        %v1166 = vunpack.c.h.b16 %v855
        %v1167 = vunpack.c.l.b16 %v856
        %v1168 = vunpack.c.h.b16 %v856
        %v1169 = vunpack.c.l.b16 %v857
        %v1170 = vunpack.c.h.b16 %v857
        %v1171 = vunpack.c.l.b16 %v858
        %v1172 = vunpack.c.h.b16 %v858
        %v1173 = vunpack.c.l.b16 %v859
        %v1174 = vunpack.c.h.b16 %v859
        %v1175 = vunpack.c.l.b16 %v860
        %v1176 = vunpack.c.h.b16 %v860
        %v1177 = vunpack.c.l.b16 %v861
        %v1178 = vunpack.c.h.b16 %v861
        %v1179 = vunpack.c.l.b16 %v862
        %v1180 = vunpack.c.h.b16 %v862
        %v1181 = vunpack.c.l.b16 %v863
        %v1182 = vunpack.c.h.b16 %v863
        %v1183 = vunpack.c.l.b16 %v864
        %v1184 = vunpack.c.h.b16 %v864
        %v1185 = vunpack.c.l.b16 %v865
        %v1186 = vunpack.c.h.b16 %v865
        %v1187 = vunpack.c.l.b16 %v866
        %v1188 = vunpack.c.h.b16 %v866
        %v1189 = vunpack.c.l.b16 %v867
        %v1190 = vunpack.c.h.b16 %v867
        %v1191 = vunpack.c.l.b16 %v868
        %v1192 = vunpack.c.h.b16 %v868
        %v1193 = vunpack.c.l.b16 %v869
        %v1194 = vunpack.c.h.b16 %v869
        %v1195 = vunpack.c.l.b16 %v870
        %v1196 = vunpack.c.h.b16 %v870
        %v1197 = vunpack.c.l.b16 %v871
        %v1198 = vunpack.c.h.b16 %v871
        %v1199 = vunpack.c.l.b16 %v872
        %v1200 = vunpack.c.h.b16 %v872
        %v1201 = vunpack.c.l.b16 %v873
        %v1202 = vunpack.c.h.b16 %v873
        %v1203 = vunpack.c.l.b16 %v874
        %v1204 = vunpack.c.h.b16 %v874
        %v1205 = vunpack.c.l.b16 %v875
        %v1206 = vunpack.c.h.b16 %v875
        %v1207 = vunpack.c.l.b16 %v876
        %v1208 = vunpack.c.h.b16 %v876
        %v1209 = vunpack.c.l.b16 %v877
        %v1210 = vunpack.c.h.b16 %v877
        %v1211 = vunpack.c.l.b16 %v878
        %v1212 = vunpack.c.h.b16 %v878
        %v1213 = vunpack.c.l.b16 %v879
        %v1214 = vunpack.c.h.b16 %v879
        %v1215 = vunpack.c.l.b16 %v880
        %v1216 = vunpack.c.h.b16 %v880
        %v1217 = vunpack.c.l.b16 %v881
        %v1218 = vunpack.c.h.b16 %v881
        %v1219 = vunpack.c.l.b16 %v882
        %v1220 = vunpack.c.h.b16 %v882
        %v1221 = vunpack.c.l.b16 %v883
        %v1222 = vunpack.c.h.b16 %v883
        %v1223 = vunpack.c.l.b16 %v884
        %v1224 = vunpack.c.h.b16 %v884
        %v1225 = vunpack.c.l.b16 %v885
        %v1226 = vunpack.c.h.b16 %v885
        %v1227 = vunpack.c.l.b16 %v886
        %v1228 = vunpack.c.h.b16 %v886
        %v1229 = vunpack.c.l.b16 %v887
        %v1230 = vunpack.c.h.b16 %v887
        %v1231 = vunpack.c.l.b16 %v888
        %v1232 = vunpack.c.h.b16 %v888
        %v1233 = vunpack.c.l.b16 %v889
        %v1234 = vunpack.c.h.b16 %v889
        %v1235 = vunpack.c.l.b16 %v890
        %v1236 = vunpack.c.h.b16 %v890
        %v1237 = vunpack.c.l.b16 %v891
        %v1238 = vunpack.c.h.b16 %v891
        %v1239 = vunpack.c.l.b16 %v892
        %v1240 = vunpack.c.h.b16 %v892
        %v1241 = vunpack.c.l.b16 %v893
        %v1242 = vunpack.c.h.b16 %v893
        %v1243 = vunpack.c.l.b16 %v894
        %v1244 = vunpack.c.h.b16 %v894
        %v1245 = vunpack.c.l.b16 %v895
        %v1246 = vunpack.c.h.b16 %v895
        %v1247 = vunpack.c.l.b16 %v896
        %v1248 = vunpack.c.h.b16 %v896
        %v1249 = vunpack.c.l.b16 %v897
        %v1250 = vunpack.c.h.b16 %v897
        %v1251 = vunpack.c.l.b16 %v898
        %v1252 = vunpack.c.h.b16 %v898
        %v1253 = vunpack.c.l.b16 %v899
        %v1254 = vunpack.c.h.b16 %v899
        %v1255 = vunpack.c.l.b16 %v900
        %v1256 = vunpack.c.h.b16 %v900
        %v1257 = vunpack.c.l.b16 %v901
        %v1258 = vunpack.c.h.b16 %v901
        %v1259 = vunpack.c.l.b16 %v902
        %v1260 = vunpack.c.h.b16 %v902
        %v1261 = vunpack.c.l.b16 %v903
        %v1262 = vunpack.c.h.b16 %v903
        %v1263 = vunpack.c.l.b16 %v904
        %v1264 = vunpack.c.h.b16 %v904
        %v1265 = vunpack.c.l.b16 %v905
        %v1266 = vunpack.c.h.b16 %v905
        %v1267 = vunpack.c.l.b16 %v906
        %v1268 = vunpack.c.h.b16 %v906
        %v1269 = vunpack.c.l.b16 %v907
        %v1270 = vunpack.c.h.b16 %v907
        %v1271 = vunpack.c.l.b16 %v908
        %v1272 = vunpack.c.h.b16 %v908
        %v1273 = vunpack.c.l.b16 %v909
        %v1274 = vunpack.c.h.b16 %v909
        %v1275 = vunpack.c.l.b16 %v910
        %v1276 = vunpack.c.h.b16 %v910
        %v1277 = vunpack.c.l.b16 %v911
        %v1278 = vunpack.c.h.b16 %v911
        %v1279 = vunpack.c.l.b16 %v912
        %v1280 = vunpack.c.h.b16 %v912
        %v1281 = vunpack.c.l.b16 %v913
        %v1282 = vunpack.c.h.b16 %v913
        %v1283 = vunpack.c.l.b16 %v914
        %v1284 = vunpack.c.h.b16 %v914
        %v1285 = vunpack.c.l.b16 %v915
        %v1286 = vunpack.c.h.b16 %v915
        %v1287 = vunpack.c.l.b16 %v916
        %v1288 = vunpack.c.h.b16 %v916
        %v1289 = vunpack.c.l.b16 %v917
        %v1290 = vunpack.c.h.b16 %v917
        %v1291 = vunpack.c.l.b16 %v918
        %v1292 = vunpack.c.h.b16 %v918
        %v1293 = vunpack.c.l.b16 %v919
        %v1294 = vunpack.c.h.b16 %v919
        %v1295 = vunpack.c.l.b16 %v920
        %v1296 = vunpack.c.h.b16 %v920
        %v1297 = vunpack.c.l.b16 %v921
        %v1298 = vunpack.c.h.b16 %v921
        %v1299 = vunpack.c.l.b16 %v922
        %v1300 = vunpack.c.h.b16 %v922
        %v1301 = vunpack.c.l.b16 %v923
        %v1302 = vunpack.c.h.b16 %v923
        %v1303 = vunpack.c.l.b16 %v924
        %v1304 = vunpack.c.h.b16 %v924
        %v1305 = vunpack.c.l.b16 %v925
        %v1306 = vunpack.c.h.b16 %v925
        %v1307 = vunpack.c.l.b16 %v926
        %v1308 = vunpack.c.h.b16 %v926
        %v1309 = vunpack.c.l.b16 %v927
        %v1310 = vunpack.c.h.b16 %v927
        %v1311 = vunpack.c.l.b16 %v928
        %v1312 = vunpack.c.h.b16 %v928
        %v1313 = vunpack.c.l.b16 %v929
        %v1314 = vunpack.c.h.b16 %v929
        %v1315 = vunpack.c.l.b16 %v930
        %v1316 = vunpack.c.h.b16 %v930
        %v1317 = vunpack.c.l.b16 %v931
        %v1318 = vunpack.c.h.b16 %v931
        %v1319 = vunpack.c.l.b16 %v932
        %v1320 = vunpack.c.h.b16 %v932
        %v1321 = vunpack.c.l.b16 %v933
        %v1322 = vunpack.c.h.b16 %v933
        %v1323 = vunpack.c.l.b16 %v934
        %v1324 = vunpack.c.h.b16 %v934
        %v1325 = vunpack.c.l.b16 %v935
        %v1326 = vunpack.c.h.b16 %v935
        %v1327 = vunpack.c.l.b16 %v936
        %v1328 = vunpack.c.h.b16 %v936
        %v1329 = vunpack.c.l.b16 %v937
        %v1330 = vunpack.c.h.b16 %v937
        %v1331 = vunpack.c.l.b16 %v938
        %v1332 = vunpack.c.h.b16 %v938
        %v1333 = vunpack.c.l.b16 %v939
        %v1334 = vunpack.c.h.b16 %v939
        %v1335 = vunpack.c.l.b16 %v940
        %v1336 = vunpack.c.h.b16 %v940
        %v1337 = vunpack.c.l.b16 %v941
        %v1338 = vunpack.c.h.b16 %v941
        %v1339 = vunpack.c.l.b16 %v942
        %v1340 = vunpack.c.h.b16 %v942
        %v1341 = vunpack.c.l.b16 %v943
        %v1342 = vunpack.c.h.b16 %v943
        %v1343 = vunpack.c.l.b16 %v944
        %v1344 = vunpack.c.h.b16 %v944
        %v1345 = vunpack.c.l.b16 %v945
        %v1346 = vunpack.c.h.b16 %v945
        %v1347 = vunpack.c.l.b16 %v946
        %v1348 = vunpack.c.h.b16 %v946
        %v1349 = vunpack.c.l.b16 %v947
        %v1350 = vunpack.c.h.b16 %v947
        %v1351 = vunpack.c.l.b16 %v948
        %v1352 = vunpack.c.h.b16 %v948
        %v1353 = vunpack.c.l.b16 %v949
        %v1354 = vunpack.c.h.b16 %v949
        %v1355 = vunpack.c.l.b16 %v950
        %v1356 = vunpack.c.h.b16 %v950
        %v1357 = vpack.c.b16 %v1105, %v1101
        %v1358 = vpack.c.b16 %v1106, %v1102
        %v1359 = vpack.c.b16 %v1107, %v1103
        %v1360 = vpack.c.b16 %v1108, %v1104
        %v1361 = vpack.c.b16 %v1113, %v1109
        %v1362 = vpack.c.b16 %v1114, %v1110
        %v1363 = vpack.c.b16 %v1115, %v1111
        %v1364 = vpack.c.b16 %v1116, %v1112
        %v1365 = vpack.c.b16 %v1121, %v1117
        %v1366 = vpack.c.b16 %v1122, %v1118
        %v1367 = vpack.c.b16 %v1123, %v1119
        %v1368 = vpack.c.b16 %v1124, %v1120
        %v1369 = vpack.c.b16 %v1129, %v1125
        %v1370 = vpack.c.b16 %v1130, %v1126
        %v1371 = vpack.c.b16 %v1131, %v1127
        %v1372 = vpack.c.b16 %v1132, %v1128
        %v1373 = vpack.c.b16 %v1137, %v1133
        %v1374 = vpack.c.b16 %v1138, %v1134
        %v1375 = vpack.c.b16 %v1139, %v1135
        %v1376 = vpack.c.b16 %v1140, %v1136
        %v1377 = vpack.c.b16 %v1145, %v1141
        %v1378 = vpack.c.b16 %v1146, %v1142
        %v1379 = vpack.c.b16 %v1147, %v1143
        %v1380 = vpack.c.b16 %v1148, %v1144
        %v1381 = vpack.c.b16 %v1153, %v1149
        %v1382 = vpack.c.b16 %v1154, %v1150
        %v1383 = vpack.c.b16 %v1155, %v1151
        %v1384 = vpack.c.b16 %v1156, %v1152
        %v1385 = vpack.c.b16 %v1161, %v1157
        %v1386 = vpack.c.b16 %v1162, %v1158
        %v1387 = vpack.c.b16 %v1163, %v1159
        %v1388 = vpack.c.b16 %v1164, %v1160
        %v1389 = vpack.c.b16 %v1169, %v1165
        %v1390 = vpack.c.b16 %v1170, %v1166
        %v1391 = vpack.c.b16 %v1171, %v1167
        %v1392 = vpack.c.b16 %v1172, %v1168
        %v1393 = vpack.c.b16 %v1177, %v1173
        %v1394 = vpack.c.b16 %v1178, %v1174
        %v1395 = vpack.c.b16 %v1179, %v1175
        %v1396 = vpack.c.b16 %v1180, %v1176
        %v1397 = vpack.c.b16 %v1185, %v1181
        %v1398 = vpack.c.b16 %v1186, %v1182
        %v1399 = vpack.c.b16 %v1187, %v1183
        %v1400 = vpack.c.b16 %v1188, %v1184
        %v1401 = vpack.c.b16 %v1193, %v1189
        %v1402 = vpack.c.b16 %v1194, %v1190
        %v1403 = vpack.c.b16 %v1195, %v1191
        %v1404 = vpack.c.b16 %v1196, %v1192
        %v1405 = vpack.c.b16 %v1201, %v1197
        %v1406 = vpack.c.b16 %v1202, %v1198
        %v1407 = vpack.c.b16 %v1203, %v1199
        %v1408 = vpack.c.b16 %v1204, %v1200
        %v1409 = vpack.c.b16 %v1209, %v1205
        %v1410 = vpack.c.b16 %v1210, %v1206
        %v1411 = vpack.c.b16 %v1211, %v1207
        %v1412 = vpack.c.b16 %v1212, %v1208
        %v1413 = vpack.c.b16 %v1217, %v1213
        %v1414 = vpack.c.b16 %v1218, %v1214
        %v1415 = vpack.c.b16 %v1219, %v1215
        %v1416 = vpack.c.b16 %v1220, %v1216
        %v1417 = vpack.c.b16 %v1225, %v1221
        %v1418 = vpack.c.b16 %v1226, %v1222
        %v1419 = vpack.c.b16 %v1227, %v1223
        %v1420 = vpack.c.b16 %v1228, %v1224
        %v1421 = vpack.c.b16 %v1233, %v1229
        %v1422 = vpack.c.b16 %v1234, %v1230
        %v1423 = vpack.c.b16 %v1235, %v1231
        %v1424 = vpack.c.b16 %v1236, %v1232
        %v1425 = vpack.c.b16 %v1241, %v1237
        %v1426 = vpack.c.b16 %v1242, %v1238
        %v1427 = vpack.c.b16 %v1243, %v1239
        %v1428 = vpack.c.b16 %v1244, %v1240
        %v1429 = vpack.c.b16 %v1249, %v1245
        %v1430 = vpack.c.b16 %v1250, %v1246
        %v1431 = vpack.c.b16 %v1251, %v1247
        %v1432 = vpack.c.b16 %v1252, %v1248
        %v1433 = vpack.c.b16 %v1257, %v1253
        %v1434 = vpack.c.b16 %v1258, %v1254
        %v1435 = vpack.c.b16 %v1259, %v1255
        %v1436 = vpack.c.b16 %v1260, %v1256
        %v1437 = vpack.c.b16 %v1265, %v1261
        %v1438 = vpack.c.b16 %v1266, %v1262
        %v1439 = vpack.c.b16 %v1267, %v1263
        %v1440 = vpack.c.b16 %v1268, %v1264
        %v1441 = vpack.c.b16 %v1273, %v1269
        %v1442 = vpack.c.b16 %v1274, %v1270
        %v1443 = vpack.c.b16 %v1275, %v1271
        %v1444 = vpack.c.b16 %v1276, %v1272
        %v1445 = vpack.c.b16 %v1281, %v1277
        %v1446 = vpack.c.b16 %v1282, %v1278
        %v1447 = vpack.c.b16 %v1283, %v1279
        %v1448 = vpack.c.b16 %v1284, %v1280
        %v1449 = vpack.c.b16 %v1289, %v1285
        %v1450 = vpack.c.b16 %v1290, %v1286
        %v1451 = vpack.c.b16 %v1291, %v1287
        %v1452 = vpack.c.b16 %v1292, %v1288
        %v1453 = vpack.c.b16 %v1297, %v1293
        %v1454 = vpack.c.b16 %v1298, %v1294
        %v1455 = vpack.c.b16 %v1299, %v1295
        %v1456 = vpack.c.b16 %v1300, %v1296
        %v1457 = vpack.c.b16 %v1305, %v1301
        %v1458 = vpack.c.b16 %v1306, %v1302
        %v1459 = vpack.c.b16 %v1307, %v1303
        %v1460 = vpack.c.b16 %v1308, %v1304
        %v1461 = vpack.c.b16 %v1313, %v1309
        %v1462 = vpack.c.b16 %v1314, %v1310
        %v1463 = vpack.c.b16 %v1315, %v1311
        %v1464 = vpack.c.b16 %v1316, %v1312
        %v1465 = vpack.c.b16 %v1321, %v1317
        %v1466 = vpack.c.b16 %v1322, %v1318
        %v1467 = vpack.c.b16 %v1323, %v1319
        %v1468 = vpack.c.b16 %v1324, %v1320
        %v1469 = vpack.c.b16 %v1329, %v1325
        %v1470 = vpack.c.b16 %v1330, %v1326
        %v1471 = vpack.c.b16 %v1331, %v1327
        %v1472 = vpack.c.b16 %v1332, %v1328
        %v1473 = vpack.c.b16 %v1337, %v1333
        %v1474 = vpack.c.b16 %v1338, %v1334
        %v1475 = vpack.c.b16 %v1339, %v1335
        %v1476 = vpack.c.b16 %v1340, %v1336
        %v1477 = vpack.c.b16 %v1345, %v1341
        %v1478 = vpack.c.b16 %v1346, %v1342
        %v1479 = vpack.c.b16 %v1347, %v1343
        %v1480 = vpack.c.b16 %v1348, %v1344
        %v1481 = vpack.c.b16 %v1353, %v1349
        %v1482 = vpack.c.b16 %v1354, %v1350
        %v1483 = vpack.c.b16 %v1355, %v1351
        %v1484 = vpack.c.b16 %v1356, %v1352
        %1613 = vmatprep.subr.bf16.mxu0 %v1386
        %1614 = vmatpush1.bf16.msra.mxu0 %v1385
        %1615 = vmatprep.subr.bf16.mxu0 %v1382
        %1616 = vmatpush1.bf16.msra.mxu0 %v1381
        %1617 = vmatprep.subr.bf16.mxu0 %v1378
        %1618 = vmatpush1.bf16.msra.mxu0 %v1377
        %1619 = vmatprep.subr.bf16.mxu0 %v1374
        %1620 = vmatpush1.bf16.msra.mxu0 %v1373
        %1621 = vmatprep.subr.bf16.mxu0 %v1370
        %1622 = vmatpush1.bf16.msra.mxu0 %v1369
        %1623 = vmatprep.subr.bf16.mxu0 %v1366
        %1624 = vmatpush1.bf16.msra.mxu0 %v1365
        %1625 = vmatprep.subr.bf16.mxu0 %v1362
        %1626 = vmatpush1.bf16.msra.mxu0 %v1361
        %1627 = vmatprep.subr.bf16.mxu0 %v1358
        %1628 = vmatpush1.bf16.msra.mxu0 %v1357
        %1629 = vmatprep.subr.bf16.mxu0 %v1418
        %1630 = vmatpush2.bf16.msra.mxu0 %v1417
        %1631 = vmatprep.subr.bf16.mxu0 %v1414
        %1632 = vmatpush2.bf16.msra.mxu0 %v1413
        %1633 = vmatprep.subr.bf16.mxu0 %v1410
        %1634 = vmatpush2.bf16.msra.mxu0 %v1409
        %1635 = vmatprep.subr.bf16.mxu0 %v1406
        %1636 = vmatpush2.bf16.msra.mxu0 %v1405
        %1637 = vmatprep.subr.bf16.mxu0 %v1402
        %1638 = vmatpush2.bf16.msra.mxu0 %v1401
        %1639 = vmatprep.subr.bf16.mxu0 %v1398
        %1640 = vmatpush2.bf16.msra.mxu0 %v1397
        %1641 = vmatprep.subr.bf16.mxu0 %v1394
        %1642 = vmatpush2.bf16.msra.mxu0 %v1393
        %1643 = vmatprep.subr.bf16.mxu0 %v1390
        %1644 = vmatpush2.bf16.msra.mxu0 %v1389
        %1645 = vmatprep.mubr.bf16.mxu0 %v820
        %1646 = vmatmul.mubr.bf16.gmra.mxu0 %v819
        %v1647 = vpop.f32.mrf.mxu0
        %v1648 = vadd.f32 %v956, %v1647
        %v1649 = vpop.f32.mrf.mxu0
        %v1650 = vadd.f32 %v960, %v1649
        %v1651 = vpop.f32.mrf.mxu0
        %v1652 = vpop.f32.mrf.mxu0
        %1653 = vdwg.mxu0
        %1654 = vmatprep.subr.bf16.mxu0 %v1450
        %1655 = vmatpush1.bf16.msra.mxu0 %v1449
        %1656 = vmatprep.subr.bf16.mxu0 %v1446
        %1657 = vmatpush1.bf16.msra.mxu0 %v1445
        %1658 = vmatprep.subr.bf16.mxu0 %v1442
        %1659 = vmatpush1.bf16.msra.mxu0 %v1441
        %1660 = vmatprep.subr.bf16.mxu0 %v1438
        %1661 = vmatpush1.bf16.msra.mxu0 %v1437
        %1662 = vmatprep.subr.bf16.mxu0 %v1434
        %1663 = vmatpush1.bf16.msra.mxu0 %v1433
        %1664 = vmatprep.subr.bf16.mxu0 %v1430
        %1665 = vmatpush1.bf16.msra.mxu0 %v1429
        %1666 = vmatprep.subr.bf16.mxu0 %v1426
        %1667 = vmatpush1.bf16.msra.mxu0 %v1425
        %1668 = vmatprep.subr.bf16.mxu0 %v1422
        %1669 = vmatpush1.bf16.msra.mxu0 %v1421
        %1670 = vmatprep.subr.bf16.mxu0 %v1482
        %1671 = vmatpush2.bf16.msra.mxu0 %v1481
        %1672 = vmatprep.subr.bf16.mxu0 %v1478
        %1673 = vmatpush2.bf16.msra.mxu0 %v1477
        %1674 = vmatprep.subr.bf16.mxu0 %v1474
        %1675 = vmatpush2.bf16.msra.mxu0 %v1473
        %1676 = vmatprep.subr.bf16.mxu0 %v1470
        %1677 = vmatpush2.bf16.msra.mxu0 %v1469
        %1678 = vmatprep.subr.bf16.mxu0 %v1466
        %1679 = vmatpush2.bf16.msra.mxu0 %v1465
        %1680 = vmatprep.subr.bf16.mxu0 %v1462
        %1681 = vmatpush2.bf16.msra.mxu0 %v1461
        %1682 = vmatprep.subr.bf16.mxu0 %v1458
        %1683 = vmatpush2.bf16.msra.mxu0 %v1457
        %1684 = vmatprep.subr.bf16.mxu0 %v1454
        %1685 = vmatpush2.bf16.msra.mxu0 %v1453
        %1686 = vmatprep.mubr.bf16.mxu0 %v822
        %1687 = vmatmul.mubr.bf16.gmra.mxu0 %v821
        %v1688 = vpop.f32.mrf.mxu0
        %v1689 = vadd.f32 %v1648, %v1688
        %v1690 = vpop.f32.mrf.mxu0
        %v1691 = vadd.f32 %v1650, %v1690
        %v1692 = vpop.f32.mrf.mxu0
        %v1693 = vpop.f32.mrf.mxu0
        %1694 = vdwg.mxu0
        %1695 = vmatprep.subr.bf16.mxu0 %v1388
        %1696 = vmatpush1.bf16.msra.mxu0 %v1387
        %1697 = vmatprep.subr.bf16.mxu0 %v1384
        %1698 = vmatpush1.bf16.msra.mxu0 %v1383
        %1699 = vmatprep.subr.bf16.mxu0 %v1380
        %1700 = vmatpush1.bf16.msra.mxu0 %v1379
        %1701 = vmatprep.subr.bf16.mxu0 %v1376
        %1702 = vmatpush1.bf16.msra.mxu0 %v1375
        %1703 = vmatprep.subr.bf16.mxu0 %v1372
        %1704 = vmatpush1.bf16.msra.mxu0 %v1371
        %1705 = vmatprep.subr.bf16.mxu0 %v1368
        %1706 = vmatpush1.bf16.msra.mxu0 %v1367
        %1707 = vmatprep.subr.bf16.mxu0 %v1364
        %1708 = vmatpush1.bf16.msra.mxu0 %v1363
        %1709 = vmatprep.subr.bf16.mxu0 %v1360
        %1710 = vmatpush1.bf16.msra.mxu0 %v1359
        %1711 = vmatprep.subr.bf16.mxu0 %v1420
        %1712 = vmatpush2.bf16.msra.mxu0 %v1419
        %1713 = vmatprep.subr.bf16.mxu0 %v1416
        %1714 = vmatpush2.bf16.msra.mxu0 %v1415
        %1715 = vmatprep.subr.bf16.mxu0 %v1412
        %1716 = vmatpush2.bf16.msra.mxu0 %v1411
        %1717 = vmatprep.subr.bf16.mxu0 %v1408
        %1718 = vmatpush2.bf16.msra.mxu0 %v1407
        %1719 = vmatprep.subr.bf16.mxu0 %v1404
        %1720 = vmatpush2.bf16.msra.mxu0 %v1403
        %1721 = vmatprep.subr.bf16.mxu0 %v1400
        %1722 = vmatpush2.bf16.msra.mxu0 %v1399
        %1723 = vmatprep.subr.bf16.mxu0 %v1396
        %1724 = vmatpush2.bf16.msra.mxu0 %v1395
        %1725 = vmatprep.subr.bf16.mxu0 %v1392
        %1726 = vmatpush2.bf16.msra.mxu0 %v1391
        %1727 = vmatprep.mubr.bf16.mxu0 %v820
        %1728 = vmatmul.mubr.bf16.gmra.mxu0 %v819
        %v1729 = vpop.f32.mrf.mxu0
        %v1730 = vadd.f32 %v964, %v1729
        %v1731 = vpop.f32.mrf.mxu0
        %v1732 = vadd.f32 %v968, %v1731
        %v1733 = vpop.f32.mrf.mxu0
        %v1734 = vpop.f32.mrf.mxu0
        %1735 = vdwg.mxu0
        %1736 = vmatprep.subr.bf16.mxu0 %v1452
        %1737 = vmatpush1.bf16.msra.mxu0 %v1451
        %1738 = vmatprep.subr.bf16.mxu0 %v1448
        %1739 = vmatpush1.bf16.msra.mxu0 %v1447
        %1740 = vmatprep.subr.bf16.mxu0 %v1444
        %1741 = vmatpush1.bf16.msra.mxu0 %v1443
        %1742 = vmatprep.subr.bf16.mxu0 %v1440
        %1743 = vmatpush1.bf16.msra.mxu0 %v1439
        %1744 = vmatprep.subr.bf16.mxu0 %v1436
        %1745 = vmatpush1.bf16.msra.mxu0 %v1435
        %1746 = vmatprep.subr.bf16.mxu0 %v1432
        %1747 = vmatpush1.bf16.msra.mxu0 %v1431
        %1748 = vmatprep.subr.bf16.mxu0 %v1428
        %1749 = vmatpush1.bf16.msra.mxu0 %v1427
        %1750 = vmatprep.subr.bf16.mxu0 %v1424
        %1751 = vmatpush1.bf16.msra.mxu0 %v1423
        %1752 = vmatprep.subr.bf16.mxu0 %v1484
        %1753 = vmatpush2.bf16.msra.mxu0 %v1483
        %1754 = vmatprep.subr.bf16.mxu0 %v1480
        %1755 = vmatpush2.bf16.msra.mxu0 %v1479
        %1756 = vmatprep.subr.bf16.mxu0 %v1476
        %1757 = vmatpush2.bf16.msra.mxu0 %v1475
        %1758 = vmatprep.subr.bf16.mxu0 %v1472
        %1759 = vmatpush2.bf16.msra.mxu0 %v1471
        %1760 = vmatprep.subr.bf16.mxu0 %v1468
        %1761 = vmatpush2.bf16.msra.mxu0 %v1467
        %1762 = vmatprep.subr.bf16.mxu0 %v1464
        %1763 = vmatpush2.bf16.msra.mxu0 %v1463
        %1764 = vmatprep.subr.bf16.mxu0 %v1460
        %1765 = vmatpush2.bf16.msra.mxu0 %v1459
        %1766 = vmatprep.subr.bf16.mxu0 %v1456
        %1767 = vmatpush2.bf16.msra.mxu0 %v1455
        %1768 = vmatprep.mubr.bf16.mxu0 %v822
        %1769 = vmatmul.mubr.bf16.gmra.mxu0 %v821
        %v1770 = vpop.f32.mrf.mxu0
        %v1771 = vadd.f32 %v1730, %v1770
        %v1772 = vpop.f32.mrf.mxu0
        %v1773 = vadd.f32 %v1732, %v1772
        %v1774 = vpop.f32.mrf.mxu0
        %v1775 = vpop.f32.mrf.mxu0
        %1776 = vdwg.mxu0
        %v1777 = vmul.f32 %v1689, %v1689
        %v1778 = vmul.f32 %v1691, %v1691
        %v1779 = vmul.f32 %v1771, %v1771
        %v1780 = vmul.f32 %v1773, %v1773
        %1781 = vadd.xlane.f32.xlu0 %v1777
        %v1782 = vpop.xlane.xlu0 %1781
        %1783 = vadd.xlane.f32.xlu0 %v1778
        %v1784 = vpop.xlane.xlu0 %1783
        %1785 = vadd.xlane.f32.xlu0 %v1779
        %v1786 = vpop.xlane.xlu0 %1785
        %1787 = vadd.xlane.f32.xlu0 %v1780
        %v1788 = vpop.xlane.xlu0 %1787
        %v1789 = vrsqrt.pop %v1782
        %v1790 = vmul.f32 %v1782, %v1789
        %vm1791 = vcmp.eq.f32.partialorder %v1782, inf
        %v1792 = vsel %vm1791, %v1782, %v1790
        %vm1793 = vcmp.eq.f32.partialorder %v1782, 0.0
        %v1794 = vand.u32 %v1782, 2147483648
        %v1795 = vsel %vm1793, %v1794, %v1792
        %v1796 = vrsqrt.pop %v1784
        %v1797 = vmul.f32 %v1784, %v1796
        %vm1798 = vcmp.eq.f32.partialorder %v1784, inf
        %v1799 = vsel %vm1798, %v1784, %v1797
        %vm1800 = vcmp.eq.f32.partialorder %v1784, 0.0
        %v1801 = vand.u32 %v1784, 2147483648
        %v1802 = vsel %vm1800, %v1801, %v1799
        %v1803 = vrsqrt.pop %v1786
        %v1804 = vmul.f32 %v1786, %v1803
        %vm1805 = vcmp.eq.f32.partialorder %v1786, inf
        %v1806 = vsel %vm1805, %v1786, %v1804
        %vm1807 = vcmp.eq.f32.partialorder %v1786, 0.0
        %v1808 = vand.u32 %v1786, 2147483648
        %v1809 = vsel %vm1807, %v1808, %v1806
        %v1810 = vrsqrt.pop %v1788
        %v1811 = vmul.f32 %v1788, %v1810
        %vm1812 = vcmp.eq.f32.partialorder %v1788, inf
        %v1813 = vsel %vm1812, %v1788, %v1811
        %vm1814 = vcmp.eq.f32.partialorder %v1788, 0.0
        %v1815 = vand.u32 %v1788, 2147483648
        %v1816 = vsel %vm1814, %v1815, %v1813
        %v1817 = vmax.f32 %v1795, 1e-12
        %v1818 = vmax.f32 %v1802, 1e-12
        %v1819 = vmax.f32 %v1809, 1e-12
        %v1820 = vmax.f32 %v1816, 1e-12
        %v1821 = vrcp.pop %v1817
        %v1822 = vmul.f32 %v1689, %v1821
        %v1823 = vrcp.pop %v1818
        %v1824 = vmul.f32 %v1691, %v1823
        %v1825 = vrcp.pop %v1819
        %v1826 = vmul.f32 %v1771, %v1825
        %v1827 = vrcp.pop %v1820
        %v1828 = vmul.f32 %v1773, %v1827
        %v1829 = vpack.c.bf16 %v1824, %v1822
        %v1830 = vpack.c.bf16 %v1828, %v1826
        %1831 = vmatprep.subr.bf16.mxu0 0
        %1832 = vmatpush1.bf16.xpose.msra.mxu0 0
        %1833 = vmatprep.subr.bf16.mxu0 0
        %1834 = vmatpush1.bf16.xpose.msra.mxu0 0
        %1835 = vmatprep.subr.bf16.mxu0 0
        %1836 = vmatpush1.bf16.xpose.msra.mxu0 0
        %1837 = vmatprep.subr.bf16.mxu0 0
        %1838 = vmatpush1.bf16.xpose.msra.mxu0 0
        %1839 = vmatprep.subr.bf16.mxu0 0
        %1840 = vmatpush1.bf16.xpose.msra.mxu0 0
        %1841 = vmatprep.subr.bf16.mxu0 0
        %1842 = vmatpush1.bf16.xpose.msra.mxu0 0
        %1843 = vmatprep.subr.bf16.mxu0 0
        %1844 = vmatpush1.bf16.xpose.msra.mxu0 %v1830
        %1845 = vmatprep.subr.bf16.mxu0 0
        %1846 = vmatpush1.bf16.xpose.msra.mxu0 %v1829
        %1847 = vmatprep.subr.bf16.mxu0 0
        %1848 = vmatpush2.bf16.xpose.msra.mxu0 0
        %1849 = vmatprep.subr.bf16.mxu0 0
        %1850 = vmatpush2.bf16.xpose.msra.mxu0 0
        %1851 = vmatprep.subr.bf16.mxu0 0
        %1852 = vmatpush2.bf16.xpose.msra.mxu0 0
        %1853 = vmatprep.subr.bf16.mxu0 0
        %1854 = vmatpush2.bf16.xpose.msra.mxu0 0
        %1855 = vmatprep.subr.bf16.mxu0 0
        %1856 = vmatpush2.bf16.xpose.msra.mxu0 0
        %1857 = vmatprep.subr.bf16.mxu0 0
        %1858 = vmatpush2.bf16.xpose.msra.mxu0 0
        %1859 = vmatprep.subr.bf16.mxu0 0
        %1860 = vmatpush2.bf16.xpose.msra.mxu0 0
        %1861 = vmatprep.subr.bf16.mxu0 0
        %1862 = vmatpush2.bf16.xpose.msra.mxu0 0
        %1863 = vmatprep.mubr.bf16.mxu0 0
        %1864 = vmatmul.mubr.bf16.gmra.mxu0 %v1829
        %v1865 = vpop.f32.mrf.mxu0
        %v1866 = vadd.f32 0.0, %v1865
        %v1867 = vpop.f32.mrf.mxu0
        %v1868 = vpop.f32.mrf.mxu0
        %v1869 = vadd.f32 0.0, %v1868
        %v1870 = vpop.f32.mrf.mxu0
        %1871 = vmatprep.mubr.bf16.mxu0 0
        %1872 = vmatmul.mubr.bf16.gmra.mxu0 %v1830
        %v1873 = vpop.f32.mrf.mxu0
        %v1874 = vadd.f32 0.0, %v1873
        %v1875 = vpop.f32.mrf.mxu0
        %v1876 = vpop.f32.mrf.mxu0
        %v1877 = vadd.f32 0.0, %v1876
        %v1878 = vpop.f32.mrf.mxu0
        %1879 = vdwg.mxu0
        %v1880 = vmul.f32 %v1866, %v811
        %v1881 = vmul.f32 %v1869, %v812
        %v1882 = vmul.f32 %v1874, %v813
        %v1883 = vmul.f32 %v1877, %v814
        %v1884 = vmul.f32 %v1866, %v815
        %v1885 = vmul.f32 %v1869, %v816
        %v1886 = vmul.f32 %v1874, %v817
        %v1887 = vmul.f32 %v1877, %v818
        %v1888 = vand.u32 2147483647, %v1880
        %v1889 = vand.u32 2147483647, %v1881
        %v1890 = vand.u32 2147483647, %v1882
        %v1891 = vand.u32 2147483647, %v1883
        %vm1892 = vcmask 261120
        %v1893 = vsel %vm1892, %v1888, 0.0
        %1894 = vadd.xlane.f32.xlu0 %v1893
        %v1895 = vpop.xlane.xlu0 %1894
        %v1896 = vsel %vm1892, %v1889, 0.0
        %1897 = vadd.xlane.f32.xlu0 %v1896
        %v1898 = vpop.xlane.xlu0 %1897
        %v1899 = vsel %vm1892, %v1890, 0.0
        %1900 = vadd.xlane.f32.xlu0 %v1899
        %v1901 = vpop.xlane.xlu0 %1900
        %v1902 = vsel %vm1892, %v1891, 0.0
        %1903 = vadd.xlane.f32.xlu0 %v1902
        %v1904 = vpop.xlane.xlu0 %1903
        %v1905 = vmax.f32 %v1895, 1e-12
        %v1906 = vmax.f32 %v1898, 1e-12
        %v1907 = vmax.f32 %v1901, 1e-12
        %v1908 = vmax.f32 %v1904, 1e-12
        %v1909 = vrcp.pop %v1905
        %v1910 = vmul.f32 %v1880, %v1909
        %v1911 = vrcp.pop %v1906
        %v1912 = vmul.f32 %v1881, %v1911
        %v1913 = vrcp.pop %v1907
        %v1914 = vmul.f32 %v1882, %v1913
        %v1915 = vrcp.pop %v1908
        %v1916 = vmul.f32 %v1883, %v1915
        %v1917 = vand.u32 2147483647, %v1884
        %v1918 = vand.u32 2147483647, %v1885
        %v1919 = vand.u32 2147483647, %v1886
        %v1920 = vand.u32 2147483647, %v1887
        %v1921 = vsel %vm1892, %v1917, 0.0
        %1922 = vadd.xlane.f32.xlu0 %v1921
        %v1923 = vpop.xlane.xlu0 %1922
        %v1924 = vsel %vm1892, %v1918, 0.0
        %1925 = vadd.xlane.f32.xlu0 %v1924
        %v1926 = vpop.xlane.xlu0 %1925
        %v1927 = vsel %vm1892, %v1919, 0.0
        %1928 = vadd.xlane.f32.xlu0 %v1927
        %v1929 = vpop.xlane.xlu0 %1928
        %v1930 = vsel %vm1892, %v1920, 0.0
        %1931 = vadd.xlane.f32.xlu0 %v1930
        %v1932 = vpop.xlane.xlu0 %1931
        %v1933 = vmax.f32 %v1923, 1e-12
        %v1934 = vmax.f32 %v1926, 1e-12
        %v1935 = vmax.f32 %v1929, 1e-12
        %v1936 = vmax.f32 %v1932, 1e-12
        %v1937 = vrcp.pop %v1933
        %v1938 = vmul.f32 %v1884, %v1937
        %v1939 = vrcp.pop %v1934
        %v1940 = vmul.f32 %v1885, %v1939
        %v1941 = vrcp.pop %v1935
        %v1942 = vmul.f32 %v1886, %v1941
        %v1943 = vrcp.pop %v1936
        %v1944 = vmul.f32 %v1887, %v1943
        %v1945 = vld [vmem:[#allocation10] sm:$0xff]
        %v1946 = vld [vmem:[#allocation10 + $0x8] sm:$0xff]
        %v1947 = vld [vmem:[#allocation10 + $0x10] sm:$0xff]
        %v1948 = vld [vmem:[#allocation10 + $0x18] sm:$0xff]
        %v1949 = vld [vmem:[#allocation10 + $0x20] sm:$0xff]
        %v1950 = vld [vmem:[#allocation10 + $0x28] sm:$0xff]
        %v1951 = vld [vmem:[#allocation10 + $0x30] sm:$0xff]
        %v1952 = vld [vmem:[#allocation10 + $0x38] sm:$0xff]
        %v1953 = vld [vmem:[#allocation10 + $0x40] sm:$0xff]
        %v1954 = vld [vmem:[#allocation10 + $0x48] sm:$0xff]
        %v1955 = vld [vmem:[#allocation10 + $0x50] sm:$0xff]
        %v1956 = vld [vmem:[#allocation10 + $0x58] sm:$0xff]
        %v1957 = vld [vmem:[#allocation10 + $0x60] sm:$0xff]
        %v1958 = vld [vmem:[#allocation10 + $0x68] sm:$0xff]
        %v1959 = vld [vmem:[#allocation10 + $0x70] sm:$0xff]
        %v1960 = vld [vmem:[#allocation10 + $0x78] sm:$0xff]
        %v1961 = vld [vmem:[#allocation11] sm:$0x3]
        %v1963 = vlaneseq
        %v1964 = vshrl.u32 %v1963, 7
        %v1965 = vsub.s32 0, %v1964
        %v1966 = vrot.slane %v1961, %v1965
        %v1967 = vlaneseq
        %v1968 = vshrl.u32 %v1967, 7
        %v1969 = vsub.s32 1, %v1968
        %v1970 = vrot.slane %v1961, %v1969
        %v1989 = vunpack.c.l.b16 %v1945
        %v1990 = vunpack.c.h.b16 %v1945
        %v1991 = vunpack.c.l.b16 %v1946
        %v1992 = vunpack.c.h.b16 %v1946
        %v1993 = vunpack.c.l.b16 %v1947
        %v1994 = vunpack.c.h.b16 %v1947
        %v1995 = vunpack.c.l.b16 %v1948
        %v1996 = vunpack.c.h.b16 %v1948
        %v1997 = vunpack.c.l.b16 %v1949
        %v1998 = vunpack.c.h.b16 %v1949
        %v1999 = vunpack.c.l.b16 %v1950
        %v2000 = vunpack.c.h.b16 %v1950
        %v2001 = vunpack.c.l.b16 %v1951
        %v2002 = vunpack.c.h.b16 %v1951
        %v2003 = vunpack.c.l.b16 %v1952
        %v2004 = vunpack.c.h.b16 %v1952
        %v2005 = vunpack.c.l.b16 %v1953
        %v2006 = vunpack.c.h.b16 %v1953
        %v2007 = vunpack.c.l.b16 %v1954
        %v2008 = vunpack.c.h.b16 %v1954
        %v2009 = vunpack.c.l.b16 %v1955
        %v2010 = vunpack.c.h.b16 %v1955
        %v2011 = vunpack.c.l.b16 %v1956
        %v2012 = vunpack.c.h.b16 %v1956
        %v2013 = vunpack.c.l.b16 %v1957
        %v2014 = vunpack.c.h.b16 %v1957
        %v2015 = vunpack.c.l.b16 %v1958
        %v2016 = vunpack.c.h.b16 %v1958
        %v2017 = vunpack.c.l.b16 %v1959
        %v2018 = vunpack.c.h.b16 %v1959
        %v2019 = vunpack.c.l.b16 %v1960
        %v2020 = vunpack.c.h.b16 %v1960
        %v2021 = vpack.c.b16 %v1991, %v1989
        %v2022 = vpack.c.b16 %v1992, %v1990
        %v2023 = vpack.c.b16 %v1995, %v1993
        %v2024 = vpack.c.b16 %v1996, %v1994
        %v2025 = vpack.c.b16 %v1999, %v1997
        %v2026 = vpack.c.b16 %v2000, %v1998
        %v2027 = vpack.c.b16 %v2003, %v2001
        %v2028 = vpack.c.b16 %v2004, %v2002
        %v2029 = vpack.c.b16 %v2007, %v2005
        %v2030 = vpack.c.b16 %v2008, %v2006
        %v2031 = vpack.c.b16 %v2011, %v2009
        %v2032 = vpack.c.b16 %v2012, %v2010
        %v2033 = vpack.c.b16 %v2015, %v2013
        %v2034 = vpack.c.b16 %v2016, %v2014
        %v2035 = vpack.c.b16 %v2019, %v2017
        %v2036 = vpack.c.b16 %v2020, %v2018
        %2053 = vmatprep.subr.bf16.mxu0 %v2036
        %2054 = vmatpush1.bf16.msra.mxu0 %v2035
        %2055 = vmatprep.subr.bf16.mxu0 %v2034
        %2056 = vmatpush1.bf16.msra.mxu0 %v2033
        %2057 = vmatprep.subr.bf16.mxu0 %v2032
        %2058 = vmatpush1.bf16.msra.mxu0 %v2031
        %2059 = vmatprep.subr.bf16.mxu0 %v2030
        %2060 = vmatpush1.bf16.msra.mxu0 %v2029
        %2061 = vmatprep.subr.bf16.mxu0 %v2028
        %2062 = vmatpush1.bf16.msra.mxu0 %v2027
        %2063 = vmatprep.subr.bf16.mxu0 %v2026
        %2064 = vmatpush1.bf16.msra.mxu0 %v2025
        %2065 = vmatprep.subr.bf16.mxu0 %v2024
        %2066 = vmatpush1.bf16.msra.mxu0 %v2023
        %2067 = vmatprep.subr.bf16.mxu0 %v2022
        %2068 = vmatpush1.bf16.msra.mxu0 %v2021
        %2069 = vmatprep.subr.bf16.mxu0 0
        %2070 = vmatpush2.bf16.msra.mxu0 0
        %2071 = vmatprep.subr.bf16.mxu0 0
        %2072 = vmatpush2.bf16.msra.mxu0 0
        %2073 = vmatprep.subr.bf16.mxu0 0
        %2074 = vmatpush2.bf16.msra.mxu0 0
        %2075 = vmatprep.subr.bf16.mxu0 0
        %2076 = vmatpush2.bf16.msra.mxu0 0
        %2077 = vmatprep.subr.bf16.mxu0 0
        %2078 = vmatpush2.bf16.msra.mxu0 0
        %2079 = vmatprep.subr.bf16.mxu0 0
        %2080 = vmatpush2.bf16.msra.mxu0 0
        %2081 = vmatprep.subr.bf16.mxu0 0
        %2082 = vmatpush2.bf16.msra.mxu0 0
        %2083 = vmatprep.subr.bf16.mxu0 0
        %2084 = vmatpush2.bf16.msra.mxu0 0
        %2085 = vmatprep.mubr.bf16.mxu0 0
        %2086 = vmatmul.mubr.bf16.gmra.mxu0 %v1829
        %v2087 = vpop.f32.mrf.mxu0
        %v2088 = vadd.f32 %v1966, %v2087
        %v2089 = vpop.f32.mrf.mxu0
        %v2090 = vadd.f32 %v1970, %v2089
        %v2091 = vpop.f32.mrf.mxu0
        %v2092 = vadd.f32 %v1966, %v2091
        %v2093 = vpop.f32.mrf.mxu0
        %v2094 = vadd.f32 %v1970, %v2093
        %2095 = vmatprep.mubr.bf16.mxu0 0
        %2096 = vmatmul.mubr.bf16.gmra.mxu0 %v1830
        %v2097 = vpop.f32.mrf.mxu0
        %v2098 = vadd.f32 %v1966, %v2097
        %v2099 = vpop.f32.mrf.mxu0
        %v2100 = vadd.f32 %v1970, %v2099
        %v2101 = vpop.f32.mrf.mxu0
        %v2102 = vadd.f32 %v1966, %v2101
        %v2103 = vpop.f32.mrf.mxu0
        %v2104 = vadd.f32 %v1970, %v2103
        %2105 = vdwg.mxu0
        %v2106 = vpack.c.bf16 %v1912, %v1910
        %v2107 = vpack.c.bf16 %v1916, %v1914
        %v2108 = vpack.c.bf16 %v2092, %v2088
        %v2109 = vpack.c.bf16 %v2102, %v2098
        %v2110 = vld [vmem:[#allocation13] sm:$0x1]
        %v2112 = vlaneseq
        %v2113 = vshrl.u32 %v2112, 7
        %v2114 = vsub.s32 0, %v2113
        %v2115 = vrot.slane %v2110, %v2114
        %v2118 = vsel %vm1892, %v2106, 0
        %v2121 = vsel %vm1892, %v2107, 0
        %2123 = vmatprep.subr.bf16.mxu0 0
        %2124 = vmatpush1.bf16.msra.mxu0 0
        %2125 = vmatprep.subr.bf16.mxu0 0
        %2126 = vmatpush1.bf16.msra.mxu0 0
        %2127 = vmatprep.subr.bf16.mxu0 0
        %2128 = vmatpush1.bf16.msra.mxu0 0
        %2129 = vmatprep.subr.bf16.mxu0 0
        %2130 = vmatpush1.bf16.msra.mxu0 0
        %2131 = vmatprep.subr.bf16.mxu0 0
        %2132 = vmatpush1.bf16.msra.mxu0 0
        %2133 = vmatprep.subr.bf16.mxu0 0
        %2134 = vmatpush1.bf16.msra.mxu0 0
        %2135 = vmatprep.subr.bf16.mxu0 0
        %2136 = vmatpush1.bf16.msra.mxu0 %v2109
        %2137 = vmatprep.subr.bf16.mxu0 0
        %2138 = vmatpush1.bf16.msra.mxu0 %v2108
        %2139 = vmatprep.subr.bf16.mxu0 0
        %2140 = vmatpush2.bf16.msra.mxu0 0
        %2141 = vmatprep.subr.bf16.mxu0 0
        %2142 = vmatpush2.bf16.msra.mxu0 0
        %2143 = vmatprep.subr.bf16.mxu0 0
        %2144 = vmatpush2.bf16.msra.mxu0 0
        %2145 = vmatprep.subr.bf16.mxu0 0
        %2146 = vmatpush2.bf16.msra.mxu0 0
        %2147 = vmatprep.subr.bf16.mxu0 0
        %2148 = vmatpush2.bf16.msra.mxu0 0
        %2149 = vmatprep.subr.bf16.mxu0 0
        %2150 = vmatpush2.bf16.msra.mxu0 0
        %2151 = vmatprep.subr.bf16.mxu0 0
        %2152 = vmatpush2.bf16.msra.mxu0 0
        %2153 = vmatprep.subr.bf16.mxu0 0
        %2154 = vmatpush2.bf16.msra.mxu0 0
        %2155 = vmatprep.mubr.bf16.mxu0 0
        %2156 = vmatmul.mubr.bf16.gmra.mxu0 %v2118
        %v2157 = vpop.f32.mrf.mxu0
        %v2158 = vadd.f32 %v2115, %v2157
        %v2159 = vpop.f32.mrf.mxu0
        %v2160 = vpop.f32.mrf.mxu0
        %v2161 = vadd.f32 %v2115, %v2160
        %v2162 = vpop.f32.mrf.mxu0
        %2163 = vmatprep.mubr.bf16.mxu0 0
        %2164 = vmatmul.mubr.bf16.gmra.mxu0 %v2121
        %v2165 = vpop.f32.mrf.mxu0
        %v2166 = vadd.f32 %v2115, %v2165
        %v2167 = vpop.f32.mrf.mxu0
        %v2168 = vpop.f32.mrf.mxu0
        %v2169 = vadd.f32 %v2115, %v2168
        %v2170 = vpop.f32.mrf.mxu0
        %2171 = vdwg.mxu0
        %v2172 = vpack.c.bf16 %v1940, %v1938
        %v2173 = vpack.c.bf16 %v1944, %v1942
        %v2174 = vpack.c.bf16 %v2094, %v2090
        %v2175 = vpack.c.bf16 %v2104, %v2100
        %v2176 = vld [vmem:[#allocation14] sm:$0x1]
        %v2178 = vlaneseq
        %v2179 = vshrl.u32 %v2178, 7
        %v2180 = vsub.s32 0, %v2179
        %v2181 = vrot.slane %v2176, %v2180
        %v2184 = vsel %vm1892, %v2172, 0
        %v2187 = vsel %vm1892, %v2173, 0
        %2189 = vmatprep.subr.bf16.mxu0 0
        %2190 = vmatpush1.bf16.msra.mxu0 0
        %2191 = vmatprep.subr.bf16.mxu0 0
        %2192 = vmatpush1.bf16.msra.mxu0 0
        %2193 = vmatprep.subr.bf16.mxu0 0
        %2194 = vmatpush1.bf16.msra.mxu0 0
        %2195 = vmatprep.subr.bf16.mxu0 0
        %2196 = vmatpush1.bf16.msra.mxu0 0
        %2197 = vmatprep.subr.bf16.mxu0 0
        %2198 = vmatpush1.bf16.msra.mxu0 0
        %2199 = vmatprep.subr.bf16.mxu0 0
        %2200 = vmatpush1.bf16.msra.mxu0 0
        %2201 = vmatprep.subr.bf16.mxu0 0
        %2202 = vmatpush1.bf16.msra.mxu0 %v2175
        %2203 = vmatprep.subr.bf16.mxu0 0
        %2204 = vmatpush1.bf16.msra.mxu0 %v2174
        %2205 = vmatprep.subr.bf16.mxu0 0
        %2206 = vmatpush2.bf16.msra.mxu0 0
        %2207 = vmatprep.subr.bf16.mxu0 0
        %2208 = vmatpush2.bf16.msra.mxu0 0
        %2209 = vmatprep.subr.bf16.mxu0 0
        %2210 = vmatpush2.bf16.msra.mxu0 0
        %2211 = vmatprep.subr.bf16.mxu0 0
        %2212 = vmatpush2.bf16.msra.mxu0 0
        %2213 = vmatprep.subr.bf16.mxu0 0
        %2214 = vmatpush2.bf16.msra.mxu0 0
        %2215 = vmatprep.subr.bf16.mxu0 0
        %2216 = vmatpush2.bf16.msra.mxu0 0
        %2217 = vmatprep.subr.bf16.mxu0 0
        %2218 = vmatpush2.bf16.msra.mxu0 0
        %2219 = vmatprep.subr.bf16.mxu0 0
        %2220 = vmatpush2.bf16.msra.mxu0 0
        %2221 = vmatprep.mubr.bf16.mxu0 0
        %2222 = vmatmul.mubr.bf16.gmra.mxu0 %v2184
        %v2223 = vpop.f32.mrf.mxu0
        %v2224 = vadd.f32 %v2181, %v2223
        %v2225 = vpop.f32.mrf.mxu0
        %v2226 = vpop.f32.mrf.mxu0
        %v2227 = vadd.f32 %v2181, %v2226
        %v2228 = vpop.f32.mrf.mxu0
        %2229 = vmatprep.mubr.bf16.mxu0 0
        %2230 = vmatmul.mubr.bf16.gmra.mxu0 %v2187
        %v2231 = vpop.f32.mrf.mxu0
        %v2232 = vadd.f32 %v2181, %v2231
        %v2233 = vpop.f32.mrf.mxu0
        %v2234 = vpop.f32.mrf.mxu0
        %v2235 = vadd.f32 %v2181, %v2234
        %v2236 = vpop.f32.mrf.mxu0
        %2237 = vdwg.mxu0
        %v2238 = vpack.c.bf16 %v2161, %v2158
        %v2239 = vpack.c.bf16 %v2227, %v2224
        %v2240 = vpack.c.bf16 %v2169, %v2166
        %v2241 = vpack.c.bf16 %v2235, %v2232
        %v2242 = vld [vmem:[#allocation16] sm:$0xff]
        %v2243 = vld [vmem:[#allocation16 + $0x8] sm:$0xf]
        %v2244 = vld [vmem:[#allocation16 + $0xc] sm:$0xff]
        %v2245 = vld [vmem:[#allocation16 + $0x14] sm:$0xf]
        %v2246 = vld [vmem:[#allocation16 + $0x18] sm:$0xff]
        %v2247 = vld [vmem:[#allocation16 + $0x20] sm:$0xf]
        %v2248 = vld [vmem:[#allocation16 + $0x24] sm:$0xff]
        %v2249 = vld [vmem:[#allocation16 + $0x2c] sm:$0xf]
        %v2250 = vld [vmem:[#allocation16 + $0x30] sm:$0xff]
        %v2251 = vld [vmem:[#allocation16 + $0x38] sm:$0xf]
        %v2252 = vld [vmem:[#allocation16 + $0x3c] sm:$0xff]
        %v2253 = vld [vmem:[#allocation16 + $0x44] sm:$0xf]
        %v2254 = vld [vmem:[#allocation16 + $0x48] sm:$0xff]
        %v2255 = vld [vmem:[#allocation16 + $0x50] sm:$0xf]
        %v2256 = vld [vmem:[#allocation16 + $0x54] sm:$0xff]
        %v2257 = vld [vmem:[#allocation16 + $0x5c] sm:$0xf]
        %v2258 = vld [vmem:[#allocation16 + $0x60] sm:$0xff]
        %v2259 = vld [vmem:[#allocation16 + $0x68] sm:$0xf]
        %v2260 = vld [vmem:[#allocation16 + $0x6c] sm:$0xff]
        %v2261 = vld [vmem:[#allocation16 + $0x74] sm:$0xf]
        %v2262 = vld [vmem:[#allocation16 + $0x78] sm:$0xff]
        %v2263 = vld [vmem:[#allocation16 + $0x80] sm:$0xf]
        %v2264 = vld [vmem:[#allocation16 + $0x84] sm:$0xff]
        %v2265 = vld [vmem:[#allocation16 + $0x8c] sm:$0xf]
        %v2266 = vld [vmem:[#allocation16 + $0x90] sm:$0xff]
        %v2267 = vld [vmem:[#allocation16 + $0x98] sm:$0xf]
        %v2268 = vld [vmem:[#allocation16 + $0x9c] sm:$0xff]
        %v2269 = vld [vmem:[#allocation16 + $0xa4] sm:$0xf]
        %v2270 = vld [vmem:[#allocation16 + $0xa8] sm:$0xff]
        %v2271 = vld [vmem:[#allocation16 + $0xb0] sm:$0xf]
        %v2272 = vld [vmem:[#allocation16 + $0xb4] sm:$0xff]
        %v2273 = vld [vmem:[#allocation16 + $0xbc] sm:$0xf]
        %v2274 = vld [vmem:[#allocation16 + $0xc0] sm:$0xff]
        %v2275 = vld [vmem:[#allocation16 + $0xc8] sm:$0xf]
        %v2276 = vld [vmem:[#allocation16 + $0xcc] sm:$0xff]
        %v2277 = vld [vmem:[#allocation16 + $0xd4] sm:$0xf]
        %v2278 = vld [vmem:[#allocation16 + $0xd8] sm:$0xff]
        %v2279 = vld [vmem:[#allocation16 + $0xe0] sm:$0xf]
        %v2280 = vld [vmem:[#allocation16 + $0xe4] sm:$0xff]
        %v2281 = vld [vmem:[#allocation16 + $0xec] sm:$0xf]
        %v2282 = vld [vmem:[#allocation16 + $0xf0] sm:$0xff]
        %v2283 = vld [vmem:[#allocation16 + $0xf8] sm:$0xf]
        %v2284 = vld [vmem:[#allocation16 + $0xfc] sm:$0xff]
        %v2285 = vld [vmem:[#allocation16 + $0x104] sm:$0xf]
        %v2286 = vld [vmem:[#allocation16 + $0x108] sm:$0xff]
        %v2287 = vld [vmem:[#allocation16 + $0x110] sm:$0xf]
        %v2288 = vld [vmem:[#allocation16 + $0x114] sm:$0xff]
        %v2289 = vld [vmem:[#allocation16 + $0x11c] sm:$0xf]
        %v2290 = vld [vmem:[#allocation16 + $0x120] sm:$0xff]
        %v2291 = vld [vmem:[#allocation16 + $0x128] sm:$0xf]
        %v2292 = vld [vmem:[#allocation16 + $0x12c] sm:$0xff]
        %v2293 = vld [vmem:[#allocation16 + $0x134] sm:$0xf]
        %v2294 = vld [vmem:[#allocation16 + $0x138] sm:$0xff]
        %v2295 = vld [vmem:[#allocation16 + $0x140] sm:$0xf]
        %v2296 = vld [vmem:[#allocation16 + $0x144] sm:$0xff]
        %v2297 = vld [vmem:[#allocation16 + $0x14c] sm:$0xf]
        %v2298 = vld [vmem:[#allocation16 + $0x150] sm:$0xff]
        %v2299 = vld [vmem:[#allocation16 + $0x158] sm:$0xf]
        %v2300 = vld [vmem:[#allocation16 + $0x15c] sm:$0xff]
        %v2301 = vld [vmem:[#allocation16 + $0x164] sm:$0xf]
        %v2302 = vld [vmem:[#allocation16 + $0x168] sm:$0xff]
        %v2303 = vld [vmem:[#allocation16 + $0x170] sm:$0xf]
        %v2304 = vld [vmem:[#allocation16 + $0x174] sm:$0xff]
        %v2305 = vld [vmem:[#allocation16 + $0x17c] sm:$0xf]
        %v2306 = vld [vmem:[#allocation17] sm:$0x7]
        %v2308 = vlaneseq
        %v2309 = vshrl.u32 %v2308, 7
        %v2310 = vsub.s32 0, %v2309
        %v2311 = vrot.slane %v2306, %v2310
        %v2312 = vlaneseq
        %v2313 = vshrl.u32 %v2312, 7
        %v2314 = vsub.s32 1, %v2313
        %v2315 = vrot.slane %v2306, %v2314
        %v2316 = vlaneseq
        %v2317 = vshrl.u32 %v2316, 7
        %v2318 = vsub.s32 2, %v2317
        %v2319 = vrot.slane %v2306, %v2318
        %v2387 = vunpack.c.l.b16 %v2242
        %v2388 = vunpack.c.h.b16 %v2242
        %v2389 = vunpack.c.l.b16 %v2243
        %v2390 = vunpack.c.l.b16 %v2244
        %v2391 = vunpack.c.h.b16 %v2244
        %v2392 = vunpack.c.l.b16 %v2245
        %v2393 = vunpack.c.l.b16 %v2246
        %v2394 = vunpack.c.h.b16 %v2246
        %v2395 = vunpack.c.l.b16 %v2247
        %v2396 = vunpack.c.l.b16 %v2248
        %v2397 = vunpack.c.h.b16 %v2248
        %v2398 = vunpack.c.l.b16 %v2249
        %v2399 = vunpack.c.l.b16 %v2250
        %v2400 = vunpack.c.h.b16 %v2250
        %v2401 = vunpack.c.l.b16 %v2251
        %v2402 = vunpack.c.l.b16 %v2252
        %v2403 = vunpack.c.h.b16 %v2252
        %v2404 = vunpack.c.l.b16 %v2253
        %v2405 = vunpack.c.l.b16 %v2254
        %v2406 = vunpack.c.h.b16 %v2254
        %v2407 = vunpack.c.l.b16 %v2255
        %v2408 = vunpack.c.l.b16 %v2256
        %v2409 = vunpack.c.h.b16 %v2256
        %v2410 = vunpack.c.l.b16 %v2257
        %v2411 = vunpack.c.l.b16 %v2258
        %v2412 = vunpack.c.h.b16 %v2258
        %v2413 = vunpack.c.l.b16 %v2259
        %v2414 = vunpack.c.l.b16 %v2260
        %v2415 = vunpack.c.h.b16 %v2260
        %v2416 = vunpack.c.l.b16 %v2261
        %v2417 = vunpack.c.l.b16 %v2262
        %v2418 = vunpack.c.h.b16 %v2262
        %v2419 = vunpack.c.l.b16 %v2263
        %v2420 = vunpack.c.l.b16 %v2264
        %v2421 = vunpack.c.h.b16 %v2264
        %v2422 = vunpack.c.l.b16 %v2265
        %v2423 = vunpack.c.l.b16 %v2266
        %v2424 = vunpack.c.h.b16 %v2266
        %v2425 = vunpack.c.l.b16 %v2267
        %v2426 = vunpack.c.l.b16 %v2268
        %v2427 = vunpack.c.h.b16 %v2268
        %v2428 = vunpack.c.l.b16 %v2269
        %v2429 = vunpack.c.l.b16 %v2270
        %v2430 = vunpack.c.h.b16 %v2270
        %v2431 = vunpack.c.l.b16 %v2271
        %v2432 = vunpack.c.l.b16 %v2272
        %v2433 = vunpack.c.h.b16 %v2272
        %v2434 = vunpack.c.l.b16 %v2273
        %v2435 = vunpack.c.l.b16 %v2274
        %v2436 = vunpack.c.h.b16 %v2274
        %v2437 = vunpack.c.l.b16 %v2275
        %v2438 = vunpack.c.l.b16 %v2276
        %v2439 = vunpack.c.h.b16 %v2276
        %v2440 = vunpack.c.l.b16 %v2277
        %v2441 = vunpack.c.l.b16 %v2278
        %v2442 = vunpack.c.h.b16 %v2278
        %v2443 = vunpack.c.l.b16 %v2279
        %v2444 = vunpack.c.l.b16 %v2280
        %v2445 = vunpack.c.h.b16 %v2280
        %v2446 = vunpack.c.l.b16 %v2281
        %v2447 = vunpack.c.l.b16 %v2282
        %v2448 = vunpack.c.h.b16 %v2282
        %v2449 = vunpack.c.l.b16 %v2283
        %v2450 = vunpack.c.l.b16 %v2284
        %v2451 = vunpack.c.h.b16 %v2284
        %v2452 = vunpack.c.l.b16 %v2285
        %v2453 = vunpack.c.l.b16 %v2286
        %v2454 = vunpack.c.h.b16 %v2286
        %v2455 = vunpack.c.l.b16 %v2287
        %v2456 = vunpack.c.l.b16 %v2288
        %v2457 = vunpack.c.h.b16 %v2288
        %v2458 = vunpack.c.l.b16 %v2289
        %v2459 = vunpack.c.l.b16 %v2290
        %v2460 = vunpack.c.h.b16 %v2290
        %v2461 = vunpack.c.l.b16 %v2291
        %v2462 = vunpack.c.l.b16 %v2292
        %v2463 = vunpack.c.h.b16 %v2292
        %v2464 = vunpack.c.l.b16 %v2293
        %v2465 = vunpack.c.l.b16 %v2294
        %v2466 = vunpack.c.h.b16 %v2294
        %v2467 = vunpack.c.l.b16 %v2295
        %v2468 = vunpack.c.l.b16 %v2296
        %v2469 = vunpack.c.h.b16 %v2296
        %v2470 = vunpack.c.l.b16 %v2297
        %v2471 = vunpack.c.l.b16 %v2298
        %v2472 = vunpack.c.h.b16 %v2298
        %v2473 = vunpack.c.l.b16 %v2299
        %v2474 = vunpack.c.l.b16 %v2300
        %v2475 = vunpack.c.h.b16 %v2300
        %v2476 = vunpack.c.l.b16 %v2301
        %v2477 = vunpack.c.l.b16 %v2302
        %v2478 = vunpack.c.h.b16 %v2302
        %v2479 = vunpack.c.l.b16 %v2303
        %v2480 = vunpack.c.l.b16 %v2304
        %v2481 = vunpack.c.h.b16 %v2304
        %v2482 = vunpack.c.l.b16 %v2305
        %v2483 = vpack.c.b16 %v2390, %v2387
        %v2484 = vpack.c.b16 %v2391, %v2388
        %v2485 = vpack.c.b16 %v2392, %v2389
        %v2486 = vpack.c.b16 %v2396, %v2393
        %v2487 = vpack.c.b16 %v2397, %v2394
        %v2488 = vpack.c.b16 %v2398, %v2395
        %v2489 = vpack.c.b16 %v2402, %v2399
        %v2490 = vpack.c.b16 %v2403, %v2400
        %v2491 = vpack.c.b16 %v2404, %v2401
        %v2492 = vpack.c.b16 %v2408, %v2405
        %v2493 = vpack.c.b16 %v2409, %v2406
        %v2494 = vpack.c.b16 %v2410, %v2407
        %v2495 = vpack.c.b16 %v2414, %v2411
        %v2496 = vpack.c.b16 %v2415, %v2412
        %v2497 = vpack.c.b16 %v2416, %v2413
        %v2498 = vpack.c.b16 %v2420, %v2417
        %v2499 = vpack.c.b16 %v2421, %v2418
        %v2500 = vpack.c.b16 %v2422, %v2419
        %v2501 = vpack.c.b16 %v2426, %v2423
        %v2502 = vpack.c.b16 %v2427, %v2424
        %v2503 = vpack.c.b16 %v2428, %v2425
        %v2504 = vpack.c.b16 %v2432, %v2429
        %v2505 = vpack.c.b16 %v2433, %v2430
        %v2506 = vpack.c.b16 %v2434, %v2431
        %v2507 = vpack.c.b16 %v2438, %v2435
        %v2508 = vpack.c.b16 %v2439, %v2436
        %v2509 = vpack.c.b16 %v2440, %v2437
        %v2510 = vpack.c.b16 %v2444, %v2441
        %v2511 = vpack.c.b16 %v2445, %v2442
        %v2512 = vpack.c.b16 %v2446, %v2443
        %v2513 = vpack.c.b16 %v2450, %v2447
        %v2514 = vpack.c.b16 %v2451, %v2448
        %v2515 = vpack.c.b16 %v2452, %v2449
        %v2516 = vpack.c.b16 %v2456, %v2453
        %v2517 = vpack.c.b16 %v2457, %v2454
        %v2518 = vpack.c.b16 %v2458, %v2455
        %v2519 = vpack.c.b16 %v2462, %v2459
        %v2520 = vpack.c.b16 %v2463, %v2460
        %v2521 = vpack.c.b16 %v2464, %v2461
        %v2522 = vpack.c.b16 %v2468, %v2465
        %v2523 = vpack.c.b16 %v2469, %v2466
        %v2524 = vpack.c.b16 %v2470, %v2467
        %v2525 = vpack.c.b16 %v2474, %v2471
        %v2526 = vpack.c.b16 %v2475, %v2472
        %v2527 = vpack.c.b16 %v2476, %v2473
        %v2528 = vpack.c.b16 %v2480, %v2477
        %v2529 = vpack.c.b16 %v2481, %v2478
        %v2530 = vpack.c.b16 %v2482, %v2479
        %2579 = vmatprep.subr.bf16.mxu0 %v2505
        %2580 = vmatpush1.bf16.msra.mxu0 %v2504
        %2581 = vmatprep.subr.bf16.mxu0 %v2502
        %2582 = vmatpush1.bf16.msra.mxu0 %v2501
        %2583 = vmatprep.subr.bf16.mxu0 %v2499
        %2584 = vmatpush1.bf16.msra.mxu0 %v2498
        %2585 = vmatprep.subr.bf16.mxu0 %v2496
        %2586 = vmatpush1.bf16.msra.mxu0 %v2495
        %2587 = vmatprep.subr.bf16.mxu0 %v2493
        %2588 = vmatpush1.bf16.msra.mxu0 %v2492
        %2589 = vmatprep.subr.bf16.mxu0 %v2490
        %2590 = vmatpush1.bf16.msra.mxu0 %v2489
        %2591 = vmatprep.subr.bf16.mxu0 %v2487
        %2592 = vmatpush1.bf16.msra.mxu0 %v2486
        %2593 = vmatprep.subr.bf16.mxu0 %v2484
        %2594 = vmatpush1.bf16.msra.mxu0 %v2483
        %2595 = vmatprep.subr.bf16.mxu0 %v2529
        %2596 = vmatpush2.bf16.msra.mxu0 %v2528
        %2597 = vmatprep.subr.bf16.mxu0 %v2526
        %2598 = vmatpush2.bf16.msra.mxu0 %v2525
        %2599 = vmatprep.subr.bf16.mxu0 %v2523
        %2600 = vmatpush2.bf16.msra.mxu0 %v2522
        %2601 = vmatprep.subr.bf16.mxu0 %v2520
        %2602 = vmatpush2.bf16.msra.mxu0 %v2519
        %2603 = vmatprep.subr.bf16.mxu0 %v2517
        %2604 = vmatpush2.bf16.msra.mxu0 %v2516
        %2605 = vmatprep.subr.bf16.mxu0 %v2514
        %2606 = vmatpush2.bf16.msra.mxu0 %v2513
        %2607 = vmatprep.subr.bf16.mxu0 %v2511
        %2608 = vmatpush2.bf16.msra.mxu0 %v2510
        %2609 = vmatprep.subr.bf16.mxu0 %v2508
        %2610 = vmatpush2.bf16.msra.mxu0 %v2507
        %2611 = vmatprep.mubr.bf16.mxu0 %v2239
        %2612 = vmatmul.mubr.bf16.gmra.mxu0 %v2238
        %v2613 = vpop.f32.mrf.mxu0
        %v2614 = vadd.f32 %v2311, %v2613
        %v2615 = vpop.f32.mrf.mxu0
        %v2616 = vadd.f32 %v2315, %v2615
        %v2617 = vpop.f32.mrf.mxu0
        %v2618 = vadd.f32 %v2311, %v2617
        %v2619 = vpop.f32.mrf.mxu0
        %v2620 = vadd.f32 %v2315, %v2619
        %2621 = vmatprep.mubr.bf16.mxu0 %v2241
        %2622 = vmatmul.mubr.bf16.gmra.mxu0 %v2240
        %v2623 = vpop.f32.mrf.mxu0
        %v2624 = vadd.f32 %v2311, %v2623
        %v2625 = vpop.f32.mrf.mxu0
        %v2626 = vadd.f32 %v2315, %v2625
        %v2627 = vpop.f32.mrf.mxu0
        %v2628 = vadd.f32 %v2311, %v2627
        %v2629 = vpop.f32.mrf.mxu0
        %v2630 = vadd.f32 %v2315, %v2629
        %2631 = vdwg.mxu0
        %2632 = vmatprep.subr.bf16.mxu0 0
        %2633 = vmatpush1.bf16.msra.mxu0 %v2506
        %2634 = vmatprep.subr.bf16.mxu0 0
        %2635 = vmatpush1.bf16.msra.mxu0 %v2503
        %2636 = vmatprep.subr.bf16.mxu0 0
        %2637 = vmatpush1.bf16.msra.mxu0 %v2500
        %2638 = vmatprep.subr.bf16.mxu0 0
        %2639 = vmatpush1.bf16.msra.mxu0 %v2497
        %2640 = vmatprep.subr.bf16.mxu0 0
        %2641 = vmatpush1.bf16.msra.mxu0 %v2494
        %2642 = vmatprep.subr.bf16.mxu0 0
        %2643 = vmatpush1.bf16.msra.mxu0 %v2491
        %2644 = vmatprep.subr.bf16.mxu0 0
        %2645 = vmatpush1.bf16.msra.mxu0 %v2488
        %2646 = vmatprep.subr.bf16.mxu0 0
        %2647 = vmatpush1.bf16.msra.mxu0 %v2485
        %2648 = vmatprep.subr.bf16.mxu0 0
        %2649 = vmatpush2.bf16.msra.mxu0 %v2530
        %2650 = vmatprep.subr.bf16.mxu0 0
        %2651 = vmatpush2.bf16.msra.mxu0 %v2527
        %2652 = vmatprep.subr.bf16.mxu0 0
        %2653 = vmatpush2.bf16.msra.mxu0 %v2524
        %2654 = vmatprep.subr.bf16.mxu0 0
        %2655 = vmatpush2.bf16.msra.mxu0 %v2521
        %2656 = vmatprep.subr.bf16.mxu0 0
        %2657 = vmatpush2.bf16.msra.mxu0 %v2518
        %2658 = vmatprep.subr.bf16.mxu0 0
        %2659 = vmatpush2.bf16.msra.mxu0 %v2515
        %2660 = vmatprep.subr.bf16.mxu0 0
        %2661 = vmatpush2.bf16.msra.mxu0 %v2512
        %2662 = vmatprep.subr.bf16.mxu0 0
        %2663 = vmatpush2.bf16.msra.mxu0 %v2509
        %2664 = vmatprep.mubr.bf16.mxu0 %v2239
        %2665 = vmatmul.mubr.bf16.gmra.mxu0 %v2238
        %v2666 = vpop.f32.mrf.mxu0
        %v2667 = vadd.f32 %v2319, %v2666
        %v2668 = vpop.f32.mrf.mxu0
        %v2669 = vpop.f32.mrf.mxu0
        %v2670 = vadd.f32 %v2319, %v2669
        %v2671 = vpop.f32.mrf.mxu0
        %2672 = vmatprep.mubr.bf16.mxu0 %v2241
        %2673 = vmatmul.mubr.bf16.gmra.mxu0 %v2240
        %v2674 = vpop.f32.mrf.mxu0
        %v2675 = vadd.f32 %v2319, %v2674
        %v2676 = vpop.f32.mrf.mxu0
        %v2677 = vpop.f32.mrf.mxu0
        %v2678 = vadd.f32 %v2319, %v2677
        %v2679 = vpop.f32.mrf.mxu0
        %2680 = vdwg.mxu0
        %v2681 = vld [vmem:[#allocation19] sm:$0xff]
        %v2682 = vld [vmem:[#allocation19 + $0x8] sm:$0xf]
        %v2683 = vld [vmem:[#allocation19 + $0xc] sm:$0xff]
        %v2684 = vld [vmem:[#allocation19 + $0x14] sm:$0xf]
        %v2685 = vld [vmem:[#allocation19 + $0x18] sm:$0xff]
        %v2686 = vld [vmem:[#allocation19 + $0x20] sm:$0xf]
        %v2687 = vld [vmem:[#allocation19 + $0x24] sm:$0xff]
        %v2688 = vld [vmem:[#allocation19 + $0x2c] sm:$0xf]
        %v2689 = vld [vmem:[#allocation19 + $0x30] sm:$0xff]
        %v2690 = vld [vmem:[#allocation19 + $0x38] sm:$0xf]
        %v2691 = vld [vmem:[#allocation19 + $0x3c] sm:$0xff]
        %v2692 = vld [vmem:[#allocation19 + $0x44] sm:$0xf]
        %v2693 = vld [vmem:[#allocation19 + $0x48] sm:$0xff]
        %v2694 = vld [vmem:[#allocation19 + $0x50] sm:$0xf]
        %v2695 = vld [vmem:[#allocation19 + $0x54] sm:$0xff]
        %v2696 = vld [vmem:[#allocation19 + $0x5c] sm:$0xf]
        %v2697 = vld [vmem:[#allocation19 + $0x60] sm:$0xff]
        %v2698 = vld [vmem:[#allocation19 + $0x68] sm:$0xf]
        %v2699 = vld [vmem:[#allocation19 + $0x6c] sm:$0xff]
        %v2700 = vld [vmem:[#allocation19 + $0x74] sm:$0xf]
        %v2701 = vld [vmem:[#allocation19 + $0x78] sm:$0xff]
        %v2702 = vld [vmem:[#allocation19 + $0x80] sm:$0xf]
        %v2703 = vld [vmem:[#allocation19 + $0x84] sm:$0xff]
        %v2704 = vld [vmem:[#allocation19 + $0x8c] sm:$0xf]
        %v2705 = vld [vmem:[#allocation19 + $0x90] sm:$0xff]
        %v2706 = vld [vmem:[#allocation19 + $0x98] sm:$0xf]
        %v2707 = vld [vmem:[#allocation19 + $0x9c] sm:$0xff]
        %v2708 = vld [vmem:[#allocation19 + $0xa4] sm:$0xf]
        %v2709 = vld [vmem:[#allocation19 + $0xa8] sm:$0xff]
        %v2710 = vld [vmem:[#allocation19 + $0xb0] sm:$0xf]
        %v2711 = vld [vmem:[#allocation19 + $0xb4] sm:$0xff]
        %v2712 = vld [vmem:[#allocation19 + $0xbc] sm:$0xf]
        %v2713 = vld [vmem:[%s12] sm:$0x7]
        %v2715 = vlaneseq
        %v2716 = vshrl.u32 %v2715, 7
        %v2717 = vsub.s32 0, %v2716
        %v2718 = vrot.slane %v2713, %v2717
        %v2719 = vlaneseq
        %v2720 = vshrl.u32 %v2719, 7
        %v2721 = vsub.s32 1, %v2720
        %v2722 = vrot.slane %v2713, %v2721
        %v2723 = vlaneseq
        %v2724 = vshrl.u32 %v2723, 7
        %v2725 = vsub.s32 2, %v2724
        %v2726 = vrot.slane %v2713, %v2725
        %v2762 = vunpack.c.l.b16 %v2681
        %v2763 = vunpack.c.h.b16 %v2681
        %v2764 = vunpack.c.l.b16 %v2682
        %v2765 = vunpack.c.l.b16 %v2683
        %v2766 = vunpack.c.h.b16 %v2683
        %v2767 = vunpack.c.l.b16 %v2684
        %v2768 = vunpack.c.l.b16 %v2685
        %v2769 = vunpack.c.h.b16 %v2685
        %v2770 = vunpack.c.l.b16 %v2686
        %v2771 = vunpack.c.l.b16 %v2687
        %v2772 = vunpack.c.h.b16 %v2687
        %v2773 = vunpack.c.l.b16 %v2688
        %v2774 = vunpack.c.l.b16 %v2689
        %v2775 = vunpack.c.h.b16 %v2689
        %v2776 = vunpack.c.l.b16 %v2690
        %v2777 = vunpack.c.l.b16 %v2691
        %v2778 = vunpack.c.h.b16 %v2691
        %v2779 = vunpack.c.l.b16 %v2692
        %v2780 = vunpack.c.l.b16 %v2693
        %v2781 = vunpack.c.h.b16 %v2693
        %v2782 = vunpack.c.l.b16 %v2694
        %v2783 = vunpack.c.l.b16 %v2695
        %v2784 = vunpack.c.h.b16 %v2695
        %v2785 = vunpack.c.l.b16 %v2696
        %v2786 = vunpack.c.l.b16 %v2697
        %v2787 = vunpack.c.h.b16 %v2697
        %v2788 = vunpack.c.l.b16 %v2698
        %v2789 = vunpack.c.l.b16 %v2699
        %v2790 = vunpack.c.h.b16 %v2699
        %v2791 = vunpack.c.l.b16 %v2700
        %v2792 = vunpack.c.l.b16 %v2701
        %v2793 = vunpack.c.h.b16 %v2701
        %v2794 = vunpack.c.l.b16 %v2702
        %v2795 = vunpack.c.l.b16 %v2703
        %v2796 = vunpack.c.h.b16 %v2703
        %v2797 = vunpack.c.l.b16 %v2704
        %v2798 = vunpack.c.l.b16 %v2705
        %v2799 = vunpack.c.h.b16 %v2705
        %v2800 = vunpack.c.l.b16 %v2706
        %v2801 = vunpack.c.l.b16 %v2707
        %v2802 = vunpack.c.h.b16 %v2707
        %v2803 = vunpack.c.l.b16 %v2708
        %v2804 = vunpack.c.l.b16 %v2709
        %v2805 = vunpack.c.h.b16 %v2709
        %v2806 = vunpack.c.l.b16 %v2710
        %v2807 = vunpack.c.l.b16 %v2711
        %v2808 = vunpack.c.h.b16 %v2711
        %v2809 = vunpack.c.l.b16 %v2712
        %v2810 = vpack.c.b16 %v2765, %v2762
        %v2811 = vpack.c.b16 %v2766, %v2763
        %v2812 = vpack.c.b16 %v2767, %v2764
        %v2813 = vpack.c.b16 %v2771, %v2768
        %v2814 = vpack.c.b16 %v2772, %v2769
        %v2815 = vpack.c.b16 %v2773, %v2770
        %v2816 = vpack.c.b16 %v2777, %v2774
        %v2817 = vpack.c.b16 %v2778, %v2775
        %v2818 = vpack.c.b16 %v2779, %v2776
        %v2819 = vpack.c.b16 %v2783, %v2780
        %v2820 = vpack.c.b16 %v2784, %v2781
        %v2821 = vpack.c.b16 %v2785, %v2782
        %v2822 = vpack.c.b16 %v2789, %v2786
        %v2823 = vpack.c.b16 %v2790, %v2787
        %v2824 = vpack.c.b16 %v2791, %v2788
        %v2825 = vpack.c.b16 %v2795, %v2792
        %v2826 = vpack.c.b16 %v2796, %v2793
        %v2827 = vpack.c.b16 %v2797, %v2794
        %v2828 = vpack.c.b16 %v2801, %v2798
        %v2829 = vpack.c.b16 %v2802, %v2799
        %v2830 = vpack.c.b16 %v2803, %v2800
        %v2831 = vpack.c.b16 %v2807, %v2804
        %v2832 = vpack.c.b16 %v2808, %v2805
        %v2833 = vpack.c.b16 %v2809, %v2806
        %2858 = vmatprep.subr.bf16.mxu0 %v2832
        %2859 = vmatpush1.bf16.msra.mxu0 %v2831
        %2860 = vmatprep.subr.bf16.mxu0 %v2829
        %2861 = vmatpush1.bf16.msra.mxu0 %v2828
        %2862 = vmatprep.subr.bf16.mxu0 %v2826
        %2863 = vmatpush1.bf16.msra.mxu0 %v2825
        %2864 = vmatprep.subr.bf16.mxu0 %v2823
        %2865 = vmatpush1.bf16.msra.mxu0 %v2822
        %2866 = vmatprep.subr.bf16.mxu0 %v2820
        %2867 = vmatpush1.bf16.msra.mxu0 %v2819
        %2868 = vmatprep.subr.bf16.mxu0 %v2817
        %2869 = vmatpush1.bf16.msra.mxu0 %v2816
        %2870 = vmatprep.subr.bf16.mxu0 %v2814
        %2871 = vmatpush1.bf16.msra.mxu0 %v2813
        %2872 = vmatprep.subr.bf16.mxu0 %v2811
        %2873 = vmatpush1.bf16.msra.mxu0 %v2810
        %2874 = vmatprep.subr.bf16.mxu0 0
        %2875 = vmatpush2.bf16.msra.mxu0 0
        %2876 = vmatprep.subr.bf16.mxu0 0
        %2877 = vmatpush2.bf16.msra.mxu0 0
        %2878 = vmatprep.subr.bf16.mxu0 0
        %2879 = vmatpush2.bf16.msra.mxu0 0
        %2880 = vmatprep.subr.bf16.mxu0 0
        %2881 = vmatpush2.bf16.msra.mxu0 0
        %2882 = vmatprep.subr.bf16.mxu0 0
        %2883 = vmatpush2.bf16.msra.mxu0 0
        %2884 = vmatprep.subr.bf16.mxu0 0
        %2885 = vmatpush2.bf16.msra.mxu0 0
        %2886 = vmatprep.subr.bf16.mxu0 0
        %2887 = vmatpush2.bf16.msra.mxu0 0
        %2888 = vmatprep.subr.bf16.mxu0 0
        %2889 = vmatpush2.bf16.msra.mxu0 0
        %2890 = vmatprep.mubr.bf16.mxu0 0
        %2891 = vmatmul.mubr.bf16.gmra.mxu0 %v1829
        %v2892 = vpop.f32.mrf.mxu0
        %v2893 = vadd.f32 %v2718, %v2892
        %v2894 = vpop.f32.mrf.mxu0
        %v2895 = vadd.f32 %v2722, %v2894
        %v2896 = vpop.f32.mrf.mxu0
        %v2897 = vadd.f32 %v2718, %v2896
        %v2898 = vpop.f32.mrf.mxu0
        %v2899 = vadd.f32 %v2722, %v2898
        %2900 = vmatprep.mubr.bf16.mxu0 0
        %2901 = vmatmul.mubr.bf16.gmra.mxu0 %v1830
        %v2902 = vpop.f32.mrf.mxu0
        %v2903 = vadd.f32 %v2718, %v2902
        %v2904 = vpop.f32.mrf.mxu0
        %v2905 = vadd.f32 %v2722, %v2904
        %v2906 = vpop.f32.mrf.mxu0
        %v2907 = vadd.f32 %v2718, %v2906
        %v2908 = vpop.f32.mrf.mxu0
        %v2909 = vadd.f32 %v2722, %v2908
        %2910 = vdwg.mxu0
        %2911 = vmatprep.subr.bf16.mxu0 0
        %2912 = vmatpush1.bf16.msra.mxu0 %v2833
        %2913 = vmatprep.subr.bf16.mxu0 0
        %2914 = vmatpush1.bf16.msra.mxu0 %v2830
        %2915 = vmatprep.subr.bf16.mxu0 0
        %2916 = vmatpush1.bf16.msra.mxu0 %v2827
        %2917 = vmatprep.subr.bf16.mxu0 0
        %2918 = vmatpush1.bf16.msra.mxu0 %v2824
        %2919 = vmatprep.subr.bf16.mxu0 0
        %2920 = vmatpush1.bf16.msra.mxu0 %v2821
        %2921 = vmatprep.subr.bf16.mxu0 0
        %2922 = vmatpush1.bf16.msra.mxu0 %v2818
        %2923 = vmatprep.subr.bf16.mxu0 0
        %2924 = vmatpush1.bf16.msra.mxu0 %v2815
        %2925 = vmatprep.subr.bf16.mxu0 0
        %2926 = vmatpush1.bf16.msra.mxu0 %v2812
        %2927 = vmatprep.subr.bf16.mxu0 0
        %2928 = vmatpush2.bf16.msra.mxu0 0
        %2929 = vmatprep.subr.bf16.mxu0 0
        %2930 = vmatpush2.bf16.msra.mxu0 0
        %2931 = vmatprep.subr.bf16.mxu0 0
        %2932 = vmatpush2.bf16.msra.mxu0 0
        %2933 = vmatprep.subr.bf16.mxu0 0
        %2934 = vmatpush2.bf16.msra.mxu0 0
        %2935 = vmatprep.subr.bf16.mxu0 0
        %2936 = vmatpush2.bf16.msra.mxu0 0
        %2937 = vmatprep.subr.bf16.mxu0 0
        %2938 = vmatpush2.bf16.msra.mxu0 0
        %2939 = vmatprep.subr.bf16.mxu0 0
        %2940 = vmatpush2.bf16.msra.mxu0 0
        %2941 = vmatprep.subr.bf16.mxu0 0
        %2942 = vmatpush2.bf16.msra.mxu0 0
        %2943 = vmatprep.mubr.bf16.mxu0 0
        %2944 = vmatmul.mubr.bf16.gmra.mxu0 %v1829
        %v2945 = vpop.f32.mrf.mxu0
        %v2946 = vadd.f32 %v2726, %v2945
        %v2947 = vpop.f32.mrf.mxu0
        %v2948 = vpop.f32.mrf.mxu0
        %v2949 = vadd.f32 %v2726, %v2948
        %v2950 = vpop.f32.mrf.mxu0
        %2951 = vmatprep.mubr.bf16.mxu0 0
        %2952 = vmatmul.mubr.bf16.gmra.mxu0 %v1830
        %v2953 = vpop.f32.mrf.mxu0
        %v2954 = vadd.f32 %v2726, %v2953
        %v2955 = vpop.f32.mrf.mxu0
        %v2956 = vpop.f32.mrf.mxu0
        %v2957 = vadd.f32 %v2726, %v2956
        %v2958 = vpop.f32.mrf.mxu0
        %2959 = vdwg.mxu0
        %v2960 = vadd.f32 %v2614, %v2893
        %v2961 = vadd.f32 %v2618, %v2897
        %v2962 = vadd.f32 %v2624, %v2903
        %v2963 = vadd.f32 %v2628, %v2907
        %v2964 = vxor.u32 %v2960, 2147483648
        %v2965 = vxor.u32 %v2961, 2147483648
        %v2966 = vxor.u32 %v2962, 2147483648
        %v2967 = vxor.u32 %v2963, 2147483648
        %v2968 = vmul.f32 %v2964, 1.442695
        %v2969 = vpow.pop %v2968
        %v2970 = vmul.f32 %v2965, 1.442695
        %v2971 = vpow.pop %v2970
        %v2972 = vmul.f32 %v2966, 1.442695
        %v2973 = vpow.pop %v2972
        %v2974 = vmul.f32 %v2967, 1.442695
        %v2975 = vpow.pop %v2974
        %v2976 = vadd.f32 %v2969, 1.0
        %v2977 = vadd.f32 %v2971, 1.0
        %v2978 = vadd.f32 %v2973, 1.0
        %v2979 = vadd.f32 %v2975, 1.0
        %v2980 = vrcp.pop %v2976
        %v2981 = vmul.f32 1.0, %v2980
        %v2982 = vrcp.pop %v2977
        %v2983 = vmul.f32 1.0, %v2982
        %v2984 = vrcp.pop %v2978
        %v2985 = vmul.f32 1.0, %v2984
        %v2986 = vrcp.pop %v2979
        %v2987 = vmul.f32 1.0, %v2986
        %v2988 = vadd.f32 %v2616, %v2895
        %v2989 = vadd.f32 %v2620, %v2899
        %v2990 = vadd.f32 %v2626, %v2905
        %v2991 = vadd.f32 %v2630, %v2909
        %v2992 = vxor.u32 %v2988, 2147483648
        %v2993 = vxor.u32 %v2989, 2147483648
        %v2994 = vxor.u32 %v2990, 2147483648
        %v2995 = vxor.u32 %v2991, 2147483648
        %v2996 = vmul.f32 %v2992, 1.442695
        %v2997 = vpow.pop %v2996
        %v2998 = vmul.f32 %v2993, 1.442695
        %v2999 = vpow.pop %v2998
        %v3000 = vmul.f32 %v2994, 1.442695
        %v3001 = vpow.pop %v3000
        %v3002 = vmul.f32 %v2995, 1.442695
        %v3003 = vpow.pop %v3002
        %v3004 = vadd.f32 %v2997, 1.0
        %v3005 = vadd.f32 %v2999, 1.0
        %v3006 = vadd.f32 %v3001, 1.0
        %v3007 = vadd.f32 %v3003, 1.0
        %v3008 = vrcp.pop %v3004
        %v3009 = vmul.f32 1.0, %v3008
        %v3010 = vrcp.pop %v3005
        %v3011 = vmul.f32 1.0, %v3010
        %v3012 = vrcp.pop %v3006
        %v3013 = vmul.f32 1.0, %v3012
        %v3014 = vrcp.pop %v3007
        %v3015 = vmul.f32 1.0, %v3014
        %v3016 = vmul.f32 %v2981, %v2946
        %v3017 = vmul.f32 %v2983, %v2949
        %v3018 = vmul.f32 %v2985, %v2954
        %v3019 = vmul.f32 %v2987, %v2957
        %v3020 = vadd.f32 %v2667, %v3016
        %v3021 = vadd.f32 %v2670, %v3017
        %v3022 = vadd.f32 %v2675, %v3018
        %v3023 = vadd.f32 %v2678, %v3019
        %v3024 = vtanh.pop %v3020
        %v3025 = vtanh.pop %v3021
        %v3026 = vtanh.pop %v3022
        %v3027 = vtanh.pop %v3023
        %v3028 = vsub.f32 %v1822, %v3024
        %v3029 = vsub.f32 %v1824, %v3025
        %v3030 = vsub.f32 %v1826, %v3026
        %v3031 = vsub.f32 %v1828, %v3027
        %v3032 = vmul.f32 %v3009, %v3028
        %v3033 = vmul.f32 %v3011, %v3029
        %v3034 = vmul.f32 %v3013, %v3030
        %v3035 = vmul.f32 %v3015, %v3031
        %v3036 = vadd.f32 %v3024, %v3032
        %v3037 = vadd.f32 %v3025, %v3033
        %v3038 = vadd.f32 %v3026, %v3034
        %v3039 = vadd.f32 %v3027, %v3035
        %v3040 = vpack.c.bf16 %v3037, %v3036
        %v3041 = vpack.c.bf16 %v3039, %v3038
        %3042 = vmatprep.subr.bf16.mxu0 0
        %3043 = vmatpush1.bf16.xpose.msra.mxu0 0
        %3044 = vmatprep.subr.bf16.mxu0 0
        %3045 = vmatpush1.bf16.xpose.msra.mxu0 0
        %3046 = vmatprep.subr.bf16.mxu0 0
        %3047 = vmatpush1.bf16.xpose.msra.mxu0 0
        %3048 = vmatprep.subr.bf16.mxu0 0
        %3049 = vmatpush1.bf16.xpose.msra.mxu0 0
        %3050 = vmatprep.subr.bf16.mxu0 0
        %3051 = vmatpush1.bf16.xpose.msra.mxu0 0
        %3052 = vmatprep.subr.bf16.mxu0 0
        %3053 = vmatpush1.bf16.xpose.msra.mxu0 0
        %3054 = vmatprep.subr.bf16.mxu0 0
        %3055 = vmatpush1.bf16.xpose.msra.mxu0 %v3041
        %3056 = vmatprep.subr.bf16.mxu0 0
        %3057 = vmatpush1.bf16.xpose.msra.mxu0 %v3040
        %3058 = vmatprep.subr.bf16.mxu0 0
        %3059 = vmatpush2.bf16.xpose.msra.mxu0 0
        %3060 = vmatprep.subr.bf16.mxu0 0
        %3061 = vmatpush2.bf16.xpose.msra.mxu0 0
        %3062 = vmatprep.subr.bf16.mxu0 0
        %3063 = vmatpush2.bf16.xpose.msra.mxu0 0
        %3064 = vmatprep.subr.bf16.mxu0 0
        %3065 = vmatpush2.bf16.xpose.msra.mxu0 0
        %3066 = vmatprep.subr.bf16.mxu0 0
        %3067 = vmatpush2.bf16.xpose.msra.mxu0 0
        %3068 = vmatprep.subr.bf16.mxu0 0
        %3069 = vmatpush2.bf16.xpose.msra.mxu0 0
        %3070 = vmatprep.subr.bf16.mxu0 0
        %3071 = vmatpush2.bf16.xpose.msra.mxu0 0
        %3072 = vmatprep.subr.bf16.mxu0 0
        %3073 = vmatpush2.bf16.xpose.msra.mxu0 0
        %3074 = vmatprep.mubr.bf16.mxu0 0
        %3075 = vmatmul.mubr.bf16.gmra.mxu0 %v3040
        %v3076 = vpop.f32.mrf.mxu0
        %v3077 = vadd.f32 0.0, %v3076
        %v3078 = vpop.f32.mrf.mxu0
        %v3079 = vpop.f32.mrf.mxu0
        %v3080 = vadd.f32 0.0, %v3079
        %v3081 = vpop.f32.mrf.mxu0
        %3082 = vmatprep.mubr.bf16.mxu0 0
        %3083 = vmatmul.mubr.bf16.gmra.mxu0 %v3041
        %v3084 = vpop.f32.mrf.mxu0
        %v3085 = vadd.f32 0.0, %v3084
        %v3086 = vpop.f32.mrf.mxu0
        %v3087 = vpop.f32.mrf.mxu0
        %v3088 = vadd.f32 0.0, %v3087
        %v3089 = vpop.f32.mrf.mxu0
        %3090 = vdwg.mxu0
        %v3091 = vmul.f32 %v3077, %v811
        %v3092 = vmul.f32 %v3080, %v812
        %v3093 = vmul.f32 %v3085, %v813
        %v3094 = vmul.f32 %v3088, %v814
        %v3095 = vmul.f32 %v3077, %v815
        %v3096 = vmul.f32 %v3080, %v816
        %v3097 = vmul.f32 %v3085, %v817
        %v3098 = vmul.f32 %v3088, %v818
        %v3099 = vand.u32 2147483647, %v3091
        %v3100 = vand.u32 2147483647, %v3092
        %v3101 = vand.u32 2147483647, %v3093
        %v3102 = vand.u32 2147483647, %v3094
        %v3103 = vsel %vm1892, %v3099, 0.0
        %3104 = vadd.xlane.f32.xlu0 %v3103
        %v3105 = vpop.xlane.xlu0 %3104
        %v3106 = vsel %vm1892, %v3100, 0.0
        %3107 = vadd.xlane.f32.xlu0 %v3106
        %v3108 = vpop.xlane.xlu0 %3107
        %v3109 = vsel %vm1892, %v3101, 0.0
        %3110 = vadd.xlane.f32.xlu0 %v3109
        %v3111 = vpop.xlane.xlu0 %3110
        %v3112 = vsel %vm1892, %v3102, 0.0
        %3113 = vadd.xlane.f32.xlu0 %v3112
        %v3114 = vpop.xlane.xlu0 %3113
        %v3115 = vmax.f32 %v3105, 1e-12
        %v3116 = vmax.f32 %v3108, 1e-12
        %v3117 = vmax.f32 %v3111, 1e-12
        %v3118 = vmax.f32 %v3114, 1e-12
        %v3119 = vrcp.pop %v3115
        %v3120 = vmul.f32 %v3091, %v3119
        %v3121 = vrcp.pop %v3116
        %v3122 = vmul.f32 %v3092, %v3121
        %v3123 = vrcp.pop %v3117
        %v3124 = vmul.f32 %v3093, %v3123
        %v3125 = vrcp.pop %v3118
        %v3126 = vmul.f32 %v3094, %v3125
        %v3127 = vand.u32 2147483647, %v3095
        %v3128 = vand.u32 2147483647, %v3096
        %v3129 = vand.u32 2147483647, %v3097
        %v3130 = vand.u32 2147483647, %v3098
        %v3131 = vsel %vm1892, %v3127, 0.0
        %3132 = vadd.xlane.f32.xlu0 %v3131
        %v3133 = vpop.xlane.xlu0 %3132
        %v3134 = vsel %vm1892, %v3128, 0.0
        %3135 = vadd.xlane.f32.xlu0 %v3134
        %v3136 = vpop.xlane.xlu0 %3135
        %v3137 = vsel %vm1892, %v3129, 0.0
        %3138 = vadd.xlane.f32.xlu0 %v3137
        %v3139 = vpop.xlane.xlu0 %3138
        %v3140 = vsel %vm1892, %v3130, 0.0
        %3141 = vadd.xlane.f32.xlu0 %v3140
        %v3142 = vpop.xlane.xlu0 %3141
        %v3143 = vmax.f32 %v3133, 1e-12
        %v3144 = vmax.f32 %v3136, 1e-12
        %v3145 = vmax.f32 %v3139, 1e-12
        %v3146 = vmax.f32 %v3142, 1e-12
        %v3147 = vrcp.pop %v3143
        %v3148 = vmul.f32 %v3095, %v3147
        %v3149 = vrcp.pop %v3144
        %v3150 = vmul.f32 %v3096, %v3149
        %v3151 = vrcp.pop %v3145
        %v3152 = vmul.f32 %v3097, %v3151
        %v3153 = vrcp.pop %v3146
        %v3154 = vmul.f32 %v3098, %v3153
        %3155 = vmatprep.subr.bf16.mxu0 %v2036
        %3156 = vmatpush1.bf16.msra.mxu0 %v2035
        %3157 = vmatprep.subr.bf16.mxu0 %v2034
        %3158 = vmatpush1.bf16.msra.mxu0 %v2033
        %3159 = vmatprep.subr.bf16.mxu0 %v2032
        %3160 = vmatpush1.bf16.msra.mxu0 %v2031
        %3161 = vmatprep.subr.bf16.mxu0 %v2030
        %3162 = vmatpush1.bf16.msra.mxu0 %v2029
        %3163 = vmatprep.subr.bf16.mxu0 %v2028
        %3164 = vmatpush1.bf16.msra.mxu0 %v2027
        %3165 = vmatprep.subr.bf16.mxu0 %v2026
        %3166 = vmatpush1.bf16.msra.mxu0 %v2025
        %3167 = vmatprep.subr.bf16.mxu0 %v2024
        %3168 = vmatpush1.bf16.msra.mxu0 %v2023
        %3169 = vmatprep.subr.bf16.mxu0 %v2022
        %3170 = vmatpush1.bf16.msra.mxu0 %v2021
        %3171 = vmatprep.subr.bf16.mxu0 0
        %3172 = vmatpush2.bf16.msra.mxu0 0
        %3173 = vmatprep.subr.bf16.mxu0 0
        %3174 = vmatpush2.bf16.msra.mxu0 0
        %3175 = vmatprep.subr.bf16.mxu0 0
        %3176 = vmatpush2.bf16.msra.mxu0 0
        %3177 = vmatprep.subr.bf16.mxu0 0
        %3178 = vmatpush2.bf16.msra.mxu0 0
        %3179 = vmatprep.subr.bf16.mxu0 0
        %3180 = vmatpush2.bf16.msra.mxu0 0
        %3181 = vmatprep.subr.bf16.mxu0 0
        %3182 = vmatpush2.bf16.msra.mxu0 0
        %3183 = vmatprep.subr.bf16.mxu0 0
        %3184 = vmatpush2.bf16.msra.mxu0 0
        %3185 = vmatprep.subr.bf16.mxu0 0
        %3186 = vmatpush2.bf16.msra.mxu0 0
        %3187 = vmatprep.mubr.bf16.mxu0 0
        %3188 = vmatmul.mubr.bf16.gmra.mxu0 %v3040
        %v3189 = vpop.f32.mrf.mxu0
        %v3190 = vadd.f32 %v1966, %v3189
        %v3191 = vpop.f32.mrf.mxu0
        %v3192 = vadd.f32 %v1970, %v3191
        %v3193 = vpop.f32.mrf.mxu0
        %v3194 = vadd.f32 %v1966, %v3193
        %v3195 = vpop.f32.mrf.mxu0
        %v3196 = vadd.f32 %v1970, %v3195
        %3197 = vmatprep.mubr.bf16.mxu0 0
        %3198 = vmatmul.mubr.bf16.gmra.mxu0 %v3041
        %v3199 = vpop.f32.mrf.mxu0
        %v3200 = vadd.f32 %v1966, %v3199
        %v3201 = vpop.f32.mrf.mxu0
        %v3202 = vadd.f32 %v1970, %v3201
        %v3203 = vpop.f32.mrf.mxu0
        %v3204 = vadd.f32 %v1966, %v3203
        %v3205 = vpop.f32.mrf.mxu0
        %v3206 = vadd.f32 %v1970, %v3205
        %3207 = vdwg.mxu0
        %v3208 = vpack.c.bf16 %v3122, %v3120
        %v3209 = vpack.c.bf16 %v3126, %v3124
        %v3210 = vpack.c.bf16 %v3194, %v3190
        %v3211 = vpack.c.bf16 %v3204, %v3200
        %v3213 = vsel %vm1892, %v3208, 0
        %v3216 = vsel %vm1892, %v3209, 0
        %3218 = vmatprep.subr.bf16.mxu0 0
        %3219 = vmatpush1.bf16.msra.mxu0 0
        %3220 = vmatprep.subr.bf16.mxu0 0
        %3221 = vmatpush1.bf16.msra.mxu0 0
        %3222 = vmatprep.subr.bf16.mxu0 0
        %3223 = vmatpush1.bf16.msra.mxu0 0
        %3224 = vmatprep.subr.bf16.mxu0 0
        %3225 = vmatpush1.bf16.msra.mxu0 0
        %3226 = vmatprep.subr.bf16.mxu0 0
        %3227 = vmatpush1.bf16.msra.mxu0 0
        %3228 = vmatprep.subr.bf16.mxu0 0
        %3229 = vmatpush1.bf16.msra.mxu0 0
        %3230 = vmatprep.subr.bf16.mxu0 0
        %3231 = vmatpush1.bf16.msra.mxu0 %v3211
        %3232 = vmatprep.subr.bf16.mxu0 0
        %3233 = vmatpush1.bf16.msra.mxu0 %v3210
        %3234 = vmatprep.subr.bf16.mxu0 0
        %3235 = vmatpush2.bf16.msra.mxu0 0
        %3236 = vmatprep.subr.bf16.mxu0 0
        %3237 = vmatpush2.bf16.msra.mxu0 0
        %3238 = vmatprep.subr.bf16.mxu0 0
        %3239 = vmatpush2.bf16.msra.mxu0 0
        %3240 = vmatprep.subr.bf16.mxu0 0
        %3241 = vmatpush2.bf16.msra.mxu0 0
        %3242 = vmatprep.subr.bf16.mxu0 0
        %3243 = vmatpush2.bf16.msra.mxu0 0
        %3244 = vmatprep.subr.bf16.mxu0 0
        %3245 = vmatpush2.bf16.msra.mxu0 0
        %3246 = vmatprep.subr.bf16.mxu0 0
        %3247 = vmatpush2.bf16.msra.mxu0 0
        %3248 = vmatprep.subr.bf16.mxu0 0
        %3249 = vmatpush2.bf16.msra.mxu0 0
        %3250 = vmatprep.mubr.bf16.mxu0 0
        %3251 = vmatmul.mubr.bf16.gmra.mxu0 %v3213
        %v3252 = vpop.f32.mrf.mxu0
        %v3253 = vadd.f32 %v2115, %v3252
        %v3254 = vpop.f32.mrf.mxu0
        %v3255 = vpop.f32.mrf.mxu0
        %v3256 = vadd.f32 %v2115, %v3255
        %v3257 = vpop.f32.mrf.mxu0
        %3258 = vmatprep.mubr.bf16.mxu0 0
        %3259 = vmatmul.mubr.bf16.gmra.mxu0 %v3216
        %v3260 = vpop.f32.mrf.mxu0
        %v3261 = vadd.f32 %v2115, %v3260
        %v3262 = vpop.f32.mrf.mxu0
        %v3263 = vpop.f32.mrf.mxu0
        %v3264 = vadd.f32 %v2115, %v3263
        %v3265 = vpop.f32.mrf.mxu0
        %3266 = vdwg.mxu0
        %v3267 = vpack.c.bf16 %v3150, %v3148
        %v3268 = vpack.c.bf16 %v3154, %v3152
        %v3269 = vpack.c.bf16 %v3196, %v3192
        %v3270 = vpack.c.bf16 %v3206, %v3202
        %v3272 = vsel %vm1892, %v3267, 0
        %v3275 = vsel %vm1892, %v3268, 0
        %3277 = vmatprep.subr.bf16.mxu0 0
        %3278 = vmatpush1.bf16.msra.mxu0 0
        %3279 = vmatprep.subr.bf16.mxu0 0
        %3280 = vmatpush1.bf16.msra.mxu0 0
        %3281 = vmatprep.subr.bf16.mxu0 0
        %3282 = vmatpush1.bf16.msra.mxu0 0
        %3283 = vmatprep.subr.bf16.mxu0 0
        %3284 = vmatpush1.bf16.msra.mxu0 0
        %3285 = vmatprep.subr.bf16.mxu0 0
        %3286 = vmatpush1.bf16.msra.mxu0 0
        %3287 = vmatprep.subr.bf16.mxu0 0
        %3288 = vmatpush1.bf16.msra.mxu0 0
        %3289 = vmatprep.subr.bf16.mxu0 0
        %3290 = vmatpush1.bf16.msra.mxu0 %v3270
        %3291 = vmatprep.subr.bf16.mxu0 0
        %3292 = vmatpush1.bf16.msra.mxu0 %v3269
        %3293 = vmatprep.subr.bf16.mxu0 0
        %3294 = vmatpush2.bf16.msra.mxu0 0
        %3295 = vmatprep.subr.bf16.mxu0 0
        %3296 = vmatpush2.bf16.msra.mxu0 0
        %3297 = vmatprep.subr.bf16.mxu0 0
        %3298 = vmatpush2.bf16.msra.mxu0 0
        %3299 = vmatprep.subr.bf16.mxu0 0
        %3300 = vmatpush2.bf16.msra.mxu0 0
        %3301 = vmatprep.subr.bf16.mxu0 0
        %3302 = vmatpush2.bf16.msra.mxu0 0
        %3303 = vmatprep.subr.bf16.mxu0 0
        %3304 = vmatpush2.bf16.msra.mxu0 0
        %3305 = vmatprep.subr.bf16.mxu0 0
        %3306 = vmatpush2.bf16.msra.mxu0 0
        %3307 = vmatprep.subr.bf16.mxu0 0
        %3308 = vmatpush2.bf16.msra.mxu0 0
        %3309 = vmatprep.mubr.bf16.mxu0 0
        %3310 = vmatmul.mubr.bf16.gmra.mxu0 %v3272
        %v3311 = vpop.f32.mrf.mxu0
        %v3312 = vadd.f32 %v2181, %v3311
        %v3313 = vpop.f32.mrf.mxu0
        %v3314 = vpop.f32.mrf.mxu0
        %v3315 = vadd.f32 %v2181, %v3314
        %v3316 = vpop.f32.mrf.mxu0
        %3317 = vmatprep.mubr.bf16.mxu0 0
        %3318 = vmatmul.mubr.bf16.gmra.mxu0 %v3275
        %v3319 = vpop.f32.mrf.mxu0
        %v3320 = vadd.f32 %v2181, %v3319
        %v3321 = vpop.f32.mrf.mxu0
        %v3322 = vpop.f32.mrf.mxu0
        %v3323 = vadd.f32 %v2181, %v3322
        %v3324 = vpop.f32.mrf.mxu0
        %3325 = vdwg.mxu0
        %v3326 = vpack.c.bf16 %v3256, %v3253
        %v3327 = vpack.c.bf16 %v3315, %v3312
        %v3328 = vpack.c.bf16 %v3264, %v3261
        %v3329 = vpack.c.bf16 %v3323, %v3320
        %3330 = vmatprep.subr.bf16.mxu0 %v2505
        %3331 = vmatpush1.bf16.msra.mxu0 %v2504
        %3332 = vmatprep.subr.bf16.mxu0 %v2502
        %3333 = vmatpush1.bf16.msra.mxu0 %v2501
        %3334 = vmatprep.subr.bf16.mxu0 %v2499
        %3335 = vmatpush1.bf16.msra.mxu0 %v2498
        %3336 = vmatprep.subr.bf16.mxu0 %v2496
        %3337 = vmatpush1.bf16.msra.mxu0 %v2495
        %3338 = vmatprep.subr.bf16.mxu0 %v2493
        %3339 = vmatpush1.bf16.msra.mxu0 %v2492
        %3340 = vmatprep.subr.bf16.mxu0 %v2490
        %3341 = vmatpush1.bf16.msra.mxu0 %v2489
        %3342 = vmatprep.subr.bf16.mxu0 %v2487
        %3343 = vmatpush1.bf16.msra.mxu0 %v2486
        %3344 = vmatprep.subr.bf16.mxu0 %v2484
        %3345 = vmatpush1.bf16.msra.mxu0 %v2483
        %3346 = vmatprep.subr.bf16.mxu0 %v2529
        %3347 = vmatpush2.bf16.msra.mxu0 %v2528
        %3348 = vmatprep.subr.bf16.mxu0 %v2526
        %3349 = vmatpush2.bf16.msra.mxu0 %v2525
        %3350 = vmatprep.subr.bf16.mxu0 %v2523
        %3351 = vmatpush2.bf16.msra.mxu0 %v2522
        %3352 = vmatprep.subr.bf16.mxu0 %v2520
        %3353 = vmatpush2.bf16.msra.mxu0 %v2519
        %3354 = vmatprep.subr.bf16.mxu0 %v2517
        %3355 = vmatpush2.bf16.msra.mxu0 %v2516
        %3356 = vmatprep.subr.bf16.mxu0 %v2514
        %3357 = vmatpush2.bf16.msra.mxu0 %v2513
        %3358 = vmatprep.subr.bf16.mxu0 %v2511
        %3359 = vmatpush2.bf16.msra.mxu0 %v2510
        %3360 = vmatprep.subr.bf16.mxu0 %v2508
        %3361 = vmatpush2.bf16.msra.mxu0 %v2507
        %3362 = vmatprep.mubr.bf16.mxu0 %v3327
        %3363 = vmatmul.mubr.bf16.gmra.mxu0 %v3326
        %v3364 = vpop.f32.mrf.mxu0
        %v3365 = vadd.f32 %v2311, %v3364
        %v3366 = vpop.f32.mrf.mxu0
        %v3367 = vadd.f32 %v2315, %v3366
        %v3368 = vpop.f32.mrf.mxu0
        %v3369 = vadd.f32 %v2311, %v3368
        %v3370 = vpop.f32.mrf.mxu0
        %v3371 = vadd.f32 %v2315, %v3370
        %3372 = vmatprep.mubr.bf16.mxu0 %v3329
        %3373 = vmatmul.mubr.bf16.gmra.mxu0 %v3328
        %v3374 = vpop.f32.mrf.mxu0
        %v3375 = vadd.f32 %v2311, %v3374
        %v3376 = vpop.f32.mrf.mxu0
        %v3377 = vadd.f32 %v2315, %v3376
        %v3378 = vpop.f32.mrf.mxu0
        %v3379 = vadd.f32 %v2311, %v3378
        %v3380 = vpop.f32.mrf.mxu0
        %v3381 = vadd.f32 %v2315, %v3380
        %3382 = vdwg.mxu0
        %3383 = vmatprep.subr.bf16.mxu0 0
        %3384 = vmatpush1.bf16.msra.mxu0 %v2506
        %3385 = vmatprep.subr.bf16.mxu0 0
        %3386 = vmatpush1.bf16.msra.mxu0 %v2503
        %3387 = vmatprep.subr.bf16.mxu0 0
        %3388 = vmatpush1.bf16.msra.mxu0 %v2500
        %3389 = vmatprep.subr.bf16.mxu0 0
        %3390 = vmatpush1.bf16.msra.mxu0 %v2497
        %3391 = vmatprep.subr.bf16.mxu0 0
        %3392 = vmatpush1.bf16.msra.mxu0 %v2494
        %3393 = vmatprep.subr.bf16.mxu0 0
        %3394 = vmatpush1.bf16.msra.mxu0 %v2491
        %3395 = vmatprep.subr.bf16.mxu0 0
        %3396 = vmatpush1.bf16.msra.mxu0 %v2488
        %3397 = vmatprep.subr.bf16.mxu0 0
        %3398 = vmatpush1.bf16.msra.mxu0 %v2485
        %3399 = vmatprep.subr.bf16.mxu0 0
        %3400 = vmatpush2.bf16.msra.mxu0 %v2530
        %3401 = vmatprep.subr.bf16.mxu0 0
        %3402 = vmatpush2.bf16.msra.mxu0 %v2527
        %3403 = vmatprep.subr.bf16.mxu0 0
        %3404 = vmatpush2.bf16.msra.mxu0 %v2524
        %3405 = vmatprep.subr.bf16.mxu0 0
        %3406 = vmatpush2.bf16.msra.mxu0 %v2521
        %3407 = vmatprep.subr.bf16.mxu0 0
        %3408 = vmatpush2.bf16.msra.mxu0 %v2518
        %3409 = vmatprep.subr.bf16.mxu0 0
        %3410 = vmatpush2.bf16.msra.mxu0 %v2515
        %3411 = vmatprep.subr.bf16.mxu0 0
        %3412 = vmatpush2.bf16.msra.mxu0 %v2512
        %3413 = vmatprep.subr.bf16.mxu0 0
        %3414 = vmatpush2.bf16.msra.mxu0 %v2509
        %3415 = vmatprep.mubr.bf16.mxu0 %v3327
        %3416 = vmatmul.mubr.bf16.gmra.mxu0 %v3326
        %v3417 = vpop.f32.mrf.mxu0
        %v3418 = vadd.f32 %v2319, %v3417
        %v3419 = vpop.f32.mrf.mxu0
        %v3420 = vpop.f32.mrf.mxu0
        %v3421 = vadd.f32 %v2319, %v3420
        %v3422 = vpop.f32.mrf.mxu0
        %3423 = vmatprep.mubr.bf16.mxu0 %v3329
        %3424 = vmatmul.mubr.bf16.gmra.mxu0 %v3328
        %v3425 = vpop.f32.mrf.mxu0
        %v3426 = vadd.f32 %v2319, %v3425
        %v3427 = vpop.f32.mrf.mxu0
        %v3428 = vpop.f32.mrf.mxu0
        %v3429 = vadd.f32 %v2319, %v3428
        %v3430 = vpop.f32.mrf.mxu0
        %3431 = vdwg.mxu0
        %3432 = vmatprep.subr.bf16.mxu0 %v2832
        %3433 = vmatpush1.bf16.msra.mxu0 %v2831
        %3434 = vmatprep.subr.bf16.mxu0 %v2829
        %3435 = vmatpush1.bf16.msra.mxu0 %v2828
        %3436 = vmatprep.subr.bf16.mxu0 %v2826
        %3437 = vmatpush1.bf16.msra.mxu0 %v2825
        %3438 = vmatprep.subr.bf16.mxu0 %v2823
        %3439 = vmatpush1.bf16.msra.mxu0 %v2822
        %3440 = vmatprep.subr.bf16.mxu0 %v2820
        %3441 = vmatpush1.bf16.msra.mxu0 %v2819
        %3442 = vmatprep.subr.bf16.mxu0 %v2817
        %3443 = vmatpush1.bf16.msra.mxu0 %v2816
        %3444 = vmatprep.subr.bf16.mxu0 %v2814
        %3445 = vmatpush1.bf16.msra.mxu0 %v2813
        %3446 = vmatprep.subr.bf16.mxu0 %v2811
        %3447 = vmatpush1.bf16.msra.mxu0 %v2810
        %3448 = vmatprep.subr.bf16.mxu0 0
        %3449 = vmatpush2.bf16.msra.mxu0 0
        %3450 = vmatprep.subr.bf16.mxu0 0
        %3451 = vmatpush2.bf16.msra.mxu0 0
        %3452 = vmatprep.subr.bf16.mxu0 0
        %3453 = vmatpush2.bf16.msra.mxu0 0
        %3454 = vmatprep.subr.bf16.mxu0 0
        %3455 = vmatpush2.bf16.msra.mxu0 0
        %3456 = vmatprep.subr.bf16.mxu0 0
        %3457 = vmatpush2.bf16.msra.mxu0 0
        %3458 = vmatprep.subr.bf16.mxu0 0
        %3459 = vmatpush2.bf16.msra.mxu0 0
        %3460 = vmatprep.subr.bf16.mxu0 0
        %3461 = vmatpush2.bf16.msra.mxu0 0
        %3462 = vmatprep.subr.bf16.mxu0 0
        %3463 = vmatpush2.bf16.msra.mxu0 0
        %3464 = vmatprep.mubr.bf16.mxu0 0
        %3465 = vmatmul.mubr.bf16.gmra.mxu0 %v3040
        %v3466 = vpop.f32.mrf.mxu0
        %v3467 = vadd.f32 %v2718, %v3466
        %v3468 = vpop.f32.mrf.mxu0
        %v3469 = vadd.f32 %v2722, %v3468
        %v3470 = vpop.f32.mrf.mxu0
        %v3471 = vadd.f32 %v2718, %v3470
        %v3472 = vpop.f32.mrf.mxu0
        %v3473 = vadd.f32 %v2722, %v3472
        %3474 = vmatprep.mubr.bf16.mxu0 0
        %3475 = vmatmul.mubr.bf16.gmra.mxu0 %v3041
        %v3476 = vpop.f32.mrf.mxu0
        %v3477 = vadd.f32 %v2718, %v3476
        %v3478 = vpop.f32.mrf.mxu0
        %v3479 = vadd.f32 %v2722, %v3478
        %v3480 = vpop.f32.mrf.mxu0
        %v3481 = vadd.f32 %v2718, %v3480
        %v3482 = vpop.f32.mrf.mxu0
        %v3483 = vadd.f32 %v2722, %v3482
        %3484 = vdwg.mxu0
        %3485 = vmatprep.subr.bf16.mxu0 0
        %3486 = vmatpush1.bf16.msra.mxu0 %v2833
        %3487 = vmatprep.subr.bf16.mxu0 0
        %3488 = vmatpush1.bf16.msra.mxu0 %v2830
        %3489 = vmatprep.subr.bf16.mxu0 0
        %3490 = vmatpush1.bf16.msra.mxu0 %v2827
        %3491 = vmatprep.subr.bf16.mxu0 0
        %3492 = vmatpush1.bf16.msra.mxu0 %v2824
        %3493 = vmatprep.subr.bf16.mxu0 0
        %3494 = vmatpush1.bf16.msra.mxu0 %v2821
        %3495 = vmatprep.subr.bf16.mxu0 0
        %3496 = vmatpush1.bf16.msra.mxu0 %v2818
        %3497 = vmatprep.subr.bf16.mxu0 0
        %3498 = vmatpush1.bf16.msra.mxu0 %v2815
        %3499 = vmatprep.subr.bf16.mxu0 0
        %3500 = vmatpush1.bf16.msra.mxu0 %v2812
        %3501 = vmatprep.subr.bf16.mxu0 0
        %3502 = vmatpush2.bf16.msra.mxu0 0
        %3503 = vmatprep.subr.bf16.mxu0 0
        %3504 = vmatpush2.bf16.msra.mxu0 0
        %3505 = vmatprep.subr.bf16.mxu0 0
        %3506 = vmatpush2.bf16.msra.mxu0 0
        %3507 = vmatprep.subr.bf16.mxu0 0
        %3508 = vmatpush2.bf16.msra.mxu0 0
        %3509 = vmatprep.subr.bf16.mxu0 0
        %3510 = vmatpush2.bf16.msra.mxu0 0
        %3511 = vmatprep.subr.bf16.mxu0 0
        %3512 = vmatpush2.bf16.msra.mxu0 0
        %3513 = vmatprep.subr.bf16.mxu0 0
        %3514 = vmatpush2.bf16.msra.mxu0 0
        %3515 = vmatprep.subr.bf16.mxu0 0
        %3516 = vmatpush2.bf16.msra.mxu0 0
        %3517 = vmatprep.mubr.bf16.mxu0 0
        %3518 = vmatmul.mubr.bf16.gmra.mxu0 %v3040
        %v3519 = vpop.f32.mrf.mxu0
        %v3520 = vadd.f32 %v2726, %v3519
        %v3521 = vpop.f32.mrf.mxu0
        %v3522 = vpop.f32.mrf.mxu0
        %v3523 = vadd.f32 %v2726, %v3522
        %v3524 = vpop.f32.mrf.mxu0
        %3525 = vmatprep.mubr.bf16.mxu0 0
        %3526 = vmatmul.mubr.bf16.gmra.mxu0 %v3041
        %v3527 = vpop.f32.mrf.mxu0
        %v3528 = vadd.f32 %v2726, %v3527
        %v3529 = vpop.f32.mrf.mxu0
        %v3530 = vpop.f32.mrf.mxu0
        %v3531 = vadd.f32 %v2726, %v3530
        %v3532 = vpop.f32.mrf.mxu0
        %3533 = vdwg.mxu0
        %v3534 = vadd.f32 %v3365, %v3467
        %v3535 = vadd.f32 %v3369, %v3471
        %v3536 = vadd.f32 %v3375, %v3477
        %v3537 = vadd.f32 %v3379, %v3481
        %v3538 = vxor.u32 %v3534, 2147483648
        %v3539 = vxor.u32 %v3535, 2147483648
        %v3540 = vxor.u32 %v3536, 2147483648
        %v3541 = vxor.u32 %v3537, 2147483648
        %v3542 = vmul.f32 %v3538, 1.442695
        %v3543 = vpow.pop %v3542
        %v3544 = vmul.f32 %v3539, 1.442695
        %v3545 = vpow.pop %v3544
        %v3546 = vmul.f32 %v3540, 1.442695
        %v3547 = vpow.pop %v3546
        %v3548 = vmul.f32 %v3541, 1.442695
        %v3549 = vpow.pop %v3548
        %v3550 = vadd.f32 %v3543, 1.0
        %v3551 = vadd.f32 %v3545, 1.0
        %v3552 = vadd.f32 %v3547, 1.0
        %v3553 = vadd.f32 %v3549, 1.0
        %v3554 = vrcp.pop %v3550
        %v3555 = vmul.f32 1.0, %v3554
        %v3556 = vrcp.pop %v3551
        %v3557 = vmul.f32 1.0, %v3556
        %v3558 = vrcp.pop %v3552
        %v3559 = vmul.f32 1.0, %v3558
        %v3560 = vrcp.pop %v3553
        %v3561 = vmul.f32 1.0, %v3560
        %v3562 = vadd.f32 %v3367, %v3469
        %v3563 = vadd.f32 %v3371, %v3473
        %v3564 = vadd.f32 %v3377, %v3479
        %v3565 = vadd.f32 %v3381, %v3483
        %v3566 = vxor.u32 %v3562, 2147483648
        %v3567 = vxor.u32 %v3563, 2147483648
        %v3568 = vxor.u32 %v3564, 2147483648
        %v3569 = vxor.u32 %v3565, 2147483648
        %v3570 = vmul.f32 %v3566, 1.442695
        %v3571 = vpow.pop %v3570
        %v3572 = vmul.f32 %v3567, 1.442695
        %v3573 = vpow.pop %v3572
        %v3574 = vmul.f32 %v3568, 1.442695
        %v3575 = vpow.pop %v3574
        %v3576 = vmul.f32 %v3569, 1.442695
        %v3577 = vpow.pop %v3576
        %v3578 = vadd.f32 %v3571, 1.0
        %v3579 = vadd.f32 %v3573, 1.0
        %v3580 = vadd.f32 %v3575, 1.0
        %v3581 = vadd.f32 %v3577, 1.0
        %v3582 = vrcp.pop %v3578
        %v3583 = vmul.f32 1.0, %v3582
        %v3584 = vrcp.pop %v3579
        %v3585 = vmul.f32 1.0, %v3584
        %v3586 = vrcp.pop %v3580
        %v3587 = vmul.f32 1.0, %v3586
        %v3588 = vrcp.pop %v3581
        %v3589 = vmul.f32 1.0, %v3588
        %v3590 = vmul.f32 %v3555, %v3520
        %v3591 = vmul.f32 %v3557, %v3523
        %v3592 = vmul.f32 %v3559, %v3528
        %v3593 = vmul.f32 %v3561, %v3531
        %v3594 = vadd.f32 %v3418, %v3590
        %v3595 = vadd.f32 %v3421, %v3591
        %v3596 = vadd.f32 %v3426, %v3592
        %v3597 = vadd.f32 %v3429, %v3593
        %v3598 = vtanh.pop %v3594
        %v3599 = vtanh.pop %v3595
        %v3600 = vtanh.pop %v3596
        %v3601 = vtanh.pop %v3597
        %v3602 = vsub.f32 %v3036, %v3598
        %v3603 = vsub.f32 %v3037, %v3599
        %v3604 = vsub.f32 %v3038, %v3600
        %v3605 = vsub.f32 %v3039, %v3601
        %v3606 = vmul.f32 %v3583, %v3602
        %v3607 = vmul.f32 %v3585, %v3603
        %v3608 = vmul.f32 %v3587, %v3604
        %v3609 = vmul.f32 %v3589, %v3605
        %v3610 = vadd.f32 %v3598, %v3606
        %v3611 = vadd.f32 %v3599, %v3607
        %v3612 = vadd.f32 %v3600, %v3608
        %v3613 = vadd.f32 %v3601, %v3609
        %v3614 = vld [vmem:[#allocation20] sm:$0xff]
        %v3615 = vld [vmem:[#allocation20 + $0x8] sm:$0xff]
        %v3616 = vld [vmem:[#allocation20 + $0x10] sm:$0xff]
        %v3617 = vld [vmem:[#allocation20 + $0x18] sm:$0xff]
        %v3618 = vld [vmem:[#allocation20 + $0x20] sm:$0xff]
        %v3619 = vld [vmem:[#allocation20 + $0x28] sm:$0xff]
        %v3620 = vld [vmem:[#allocation20 + $0x30] sm:$0xff]
        %v3621 = vld [vmem:[#allocation20 + $0x38] sm:$0xff]
        %v3622 = vld [vmem:[#allocation20 + $0x40] sm:$0xff]
        %v3623 = vld [vmem:[#allocation20 + $0x48] sm:$0xff]
        %v3624 = vld [vmem:[#allocation20 + $0x50] sm:$0xff]
        %v3625 = vld [vmem:[#allocation20 + $0x58] sm:$0xff]
        %v3626 = vld [vmem:[#allocation20 + $0x60] sm:$0xff]
        %v3627 = vld [vmem:[#allocation20 + $0x68] sm:$0xff]
        %v3628 = vld [vmem:[#allocation20 + $0x70] sm:$0xff]
        %v3629 = vld [vmem:[#allocation20 + $0x78] sm:$0xff]
        %v3630 = vld [vmem:[#allocation20 + $0x80] sm:$0xff]
        %v3631 = vld [vmem:[#allocation20 + $0x88] sm:$0xff]
        %v3632 = vld [vmem:[#allocation20 + $0x90] sm:$0xff]
        %v3633 = vld [vmem:[#allocation20 + $0x98] sm:$0xff]
        %v3634 = vld [vmem:[#allocation20 + $0xa0] sm:$0xff]
        %v3635 = vld [vmem:[#allocation20 + $0xa8] sm:$0xff]
        %v3636 = vld [vmem:[#allocation20 + $0xb0] sm:$0xff]
        %v3637 = vld [vmem:[#allocation20 + $0xb8] sm:$0xff]
        %v3638 = vld [vmem:[#allocation20 + $0xc0] sm:$0xff]
        %v3639 = vld [vmem:[#allocation20 + $0xc8] sm:$0xff]
        %v3640 = vld [vmem:[#allocation20 + $0xd0] sm:$0xff]
        %v3641 = vld [vmem:[#allocation20 + $0xd8] sm:$0xff]
        %v3642 = vld [vmem:[#allocation20 + $0xe0] sm:$0xff]
        %v3643 = vld [vmem:[#allocation20 + $0xe8] sm:$0xff]
        %v3644 = vld [vmem:[#allocation20 + $0xf0] sm:$0xff]
        %v3645 = vld [vmem:[#allocation20 + $0xf8] sm:$0xff]
        %v3646 = vld [vmem:[#allocation20 + $0x100] sm:$0xff]
        %v3647 = vld [vmem:[#allocation20 + $0x108] sm:$0xff]
        %v3648 = vld [vmem:[#allocation20 + $0x110] sm:$0xff]
        %v3649 = vld [vmem:[#allocation20 + $0x118] sm:$0xff]
        %v3650 = vld [vmem:[#allocation20 + $0x120] sm:$0xff]
        %v3651 = vld [vmem:[#allocation20 + $0x128] sm:$0xff]
        %v3652 = vld [vmem:[#allocation20 + $0x130] sm:$0xff]
        %v3653 = vld [vmem:[#allocation20 + $0x138] sm:$0xff]
        %v3654 = vld [vmem:[#allocation20 + $0x140] sm:$0xff]
        %v3655 = vld [vmem:[#allocation20 + $0x148] sm:$0xff]
        %v3656 = vld [vmem:[#allocation20 + $0x150] sm:$0xff]
        %v3657 = vld [vmem:[#allocation20 + $0x158] sm:$0xff]
        %v3658 = vld [vmem:[#allocation20 + $0x160] sm:$0xff]
        %v3659 = vld [vmem:[#allocation20 + $0x168] sm:$0xff]
        %v3660 = vld [vmem:[#allocation20 + $0x170] sm:$0xff]
        %v3661 = vld [vmem:[#allocation20 + $0x178] sm:$0xff]
        %v3662 = vld [vmem:[#allocation20 + $0x180] sm:$0xff]
        %v3663 = vld [vmem:[#allocation20 + $0x188] sm:$0xff]
        %v3664 = vld [vmem:[#allocation20 + $0x190] sm:$0xff]
        %v3665 = vld [vmem:[#allocation20 + $0x198] sm:$0xff]
        %v3666 = vld [vmem:[#allocation20 + $0x1a0] sm:$0xff]
        %v3667 = vld [vmem:[#allocation20 + $0x1a8] sm:$0xff]
        %v3668 = vld [vmem:[#allocation20 + $0x1b0] sm:$0xff]
        %v3669 = vld [vmem:[#allocation20 + $0x1b8] sm:$0xff]
        %v3670 = vld [vmem:[#allocation20 + $0x1c0] sm:$0xff]
        %v3671 = vld [vmem:[#allocation20 + $0x1c8] sm:$0xff]
        %v3672 = vld [vmem:[#allocation20 + $0x1d0] sm:$0xff]
        %v3673 = vld [vmem:[#allocation20 + $0x1d8] sm:$0xff]
        %v3674 = vld [vmem:[#allocation20 + $0x1e0] sm:$0xff]
        %v3675 = vld [vmem:[#allocation20 + $0x1e8] sm:$0xff]
        %v3676 = vld [vmem:[#allocation20 + $0x1f0] sm:$0xff]
        %v3677 = vld [vmem:[#allocation20 + $0x1f8] sm:$0xff]
        %v3678 = vld [vmem:[#allocation20 + $0x200] sm:$0xff]
        %v3679 = vld [vmem:[#allocation20 + $0x208] sm:$0xff]
        %v3680 = vld [vmem:[#allocation20 + $0x210] sm:$0xff]
        %v3681 = vld [vmem:[#allocation20 + $0x218] sm:$0xff]
        %v3682 = vld [vmem:[#allocation20 + $0x220] sm:$0xff]
        %v3683 = vld [vmem:[#allocation20 + $0x228] sm:$0xff]
        %v3684 = vld [vmem:[#allocation20 + $0x230] sm:$0xff]
        %v3685 = vld [vmem:[#allocation20 + $0x238] sm:$0xff]
        %v3686 = vld [vmem:[#allocation20 + $0x240] sm:$0xff]
        %v3687 = vld [vmem:[#allocation20 + $0x248] sm:$0xff]
        %v3688 = vld [vmem:[#allocation20 + $0x250] sm:$0xff]
        %v3689 = vld [vmem:[#allocation20 + $0x258] sm:$0xff]
        %v3690 = vld [vmem:[#allocation20 + $0x260] sm:$0xff]
        %v3691 = vld [vmem:[#allocation20 + $0x268] sm:$0xff]
        %v3692 = vld [vmem:[#allocation20 + $0x270] sm:$0xff]
        %v3693 = vld [vmem:[#allocation20 + $0x278] sm:$0xff]
        %v3694 = vld [vmem:[#allocation20 + $0x280] sm:$0xff]
        %v3695 = vld [vmem:[#allocation20 + $0x288] sm:$0xff]
        %v3696 = vld [vmem:[#allocation20 + $0x290] sm:$0xff]
        %v3697 = vld [vmem:[#allocation20 + $0x298] sm:$0xff]
        %v3698 = vld [vmem:[#allocation20 + $0x2a0] sm:$0xff]
        %v3699 = vld [vmem:[#allocation20 + $0x2a8] sm:$0xff]
        %v3700 = vld [vmem:[#allocation20 + $0x2b0] sm:$0xff]
        %v3701 = vld [vmem:[#allocation20 + $0x2b8] sm:$0xff]
        %v3702 = vld [vmem:[#allocation20 + $0x2c0] sm:$0xff]
        %v3703 = vld [vmem:[#allocation20 + $0x2c8] sm:$0xff]
        %v3704 = vld [vmem:[#allocation20 + $0x2d0] sm:$0xff]
        %v3705 = vld [vmem:[#allocation20 + $0x2d8] sm:$0xff]
        %v3706 = vld [vmem:[#allocation20 + $0x2e0] sm:$0xff]
        %v3707 = vld [vmem:[#allocation20 + $0x2e8] sm:$0xff]
        %v3708 = vld [vmem:[#allocation20 + $0x2f0] sm:$0xff]
        %v3709 = vld [vmem:[#allocation20 + $0x2f8] sm:$0xff]
        %v3710 = vld [vmem:[#allocation20 + $0x300] sm:$0xff]
        %v3711 = vld [vmem:[#allocation20 + $0x308] sm:$0xff]
        %v3712 = vld [vmem:[#allocation20 + $0x310] sm:$0xff]
        %v3713 = vld [vmem:[#allocation20 + $0x318] sm:$0xff]
        %v3714 = vld [vmem:[#allocation20 + $0x320] sm:$0xff]
        %v3715 = vld [vmem:[#allocation20 + $0x328] sm:$0xff]
        %v3716 = vld [vmem:[#allocation20 + $0x330] sm:$0xff]
        %v3717 = vld [vmem:[#allocation20 + $0x338] sm:$0xff]
        %v3718 = vld [vmem:[#allocation20 + $0x340] sm:$0xff]
        %v3719 = vld [vmem:[#allocation20 + $0x348] sm:$0xff]
        %v3720 = vld [vmem:[#allocation20 + $0x350] sm:$0xff]
        %v3721 = vld [vmem:[#allocation20 + $0x358] sm:$0xff]
        %v3722 = vld [vmem:[#allocation20 + $0x360] sm:$0xff]
        %v3723 = vld [vmem:[#allocation20 + $0x368] sm:$0xff]
        %v3724 = vld [vmem:[#allocation20 + $0x370] sm:$0xff]
        %v3725 = vld [vmem:[#allocation20 + $0x378] sm:$0xff]
        %v3726 = vld [vmem:[#allocation20 + $0x380] sm:$0xff]
        %v3727 = vld [vmem:[#allocation20 + $0x388] sm:$0xff]
        %v3728 = vld [vmem:[#allocation20 + $0x390] sm:$0xff]
        %v3729 = vld [vmem:[#allocation20 + $0x398] sm:$0xff]
        %v3730 = vld [vmem:[#allocation20 + $0x3a0] sm:$0xff]
        %v3731 = vld [vmem:[#allocation20 + $0x3a8] sm:$0xff]
        %v3732 = vld [vmem:[#allocation20 + $0x3b0] sm:$0xff]
        %v3733 = vld [vmem:[#allocation20 + $0x3b8] sm:$0xff]
        %v3734 = vld [vmem:[#allocation20 + $0x3c0] sm:$0xff]
        %v3735 = vld [vmem:[#allocation20 + $0x3c8] sm:$0xff]
        %v3736 = vld [vmem:[#allocation20 + $0x3d0] sm:$0xff]
        %v3737 = vld [vmem:[#allocation20 + $0x3d8] sm:$0xff]
        %v3738 = vld [vmem:[#allocation20 + $0x3e0] sm:$0xff]
        %v3739 = vld [vmem:[#allocation20 + $0x3e8] sm:$0xff]
        %v3740 = vld [vmem:[#allocation20 + $0x3f0] sm:$0xff]
        %v3741 = vld [vmem:[#allocation20 + $0x3f8] sm:$0xff]
        %v3742 = vld [vmem:[%s14] sm:$0xf]
        %v3744 = vlaneseq
        %v3745 = vshrl.u32 %v3744, 7
        %v3746 = vsub.s32 0, %v3745
        %v3747 = vrot.slane %v3742, %v3746
        %v3748 = vlaneseq
        %v3749 = vshrl.u32 %v3748, 7
        %v3750 = vsub.s32 1, %v3749
        %v3751 = vrot.slane %v3742, %v3750
        %v3752 = vlaneseq
        %v3753 = vshrl.u32 %v3752, 7
        %v3754 = vsub.s32 2, %v3753
        %v3755 = vrot.slane %v3742, %v3754
        %v3756 = vlaneseq
        %v3757 = vshrl.u32 %v3756, 7
        %v3758 = vsub.s32 3, %v3757
        %v3759 = vrot.slane %v3742, %v3758
        %v3892 = vunpack.c.l.b16 %v3614
        %v3893 = vunpack.c.h.b16 %v3614
        %v3894 = vunpack.c.l.b16 %v3615
        %v3895 = vunpack.c.h.b16 %v3615
        %v3896 = vunpack.c.l.b16 %v3616
        %v3897 = vunpack.c.h.b16 %v3616
        %v3898 = vunpack.c.l.b16 %v3617
        %v3899 = vunpack.c.h.b16 %v3617
        %v3900 = vunpack.c.l.b16 %v3618
        %v3901 = vunpack.c.h.b16 %v3618
        %v3902 = vunpack.c.l.b16 %v3619
        %v3903 = vunpack.c.h.b16 %v3619
        %v3904 = vunpack.c.l.b16 %v3620
        %v3905 = vunpack.c.h.b16 %v3620
        %v3906 = vunpack.c.l.b16 %v3621
        %v3907 = vunpack.c.h.b16 %v3621
        %v3908 = vunpack.c.l.b16 %v3622
        %v3909 = vunpack.c.h.b16 %v3622
        %v3910 = vunpack.c.l.b16 %v3623
        %v3911 = vunpack.c.h.b16 %v3623
        %v3912 = vunpack.c.l.b16 %v3624
        %v3913 = vunpack.c.h.b16 %v3624
        %v3914 = vunpack.c.l.b16 %v3625
        %v3915 = vunpack.c.h.b16 %v3625
        %v3916 = vunpack.c.l.b16 %v3626
        %v3917 = vunpack.c.h.b16 %v3626
        %v3918 = vunpack.c.l.b16 %v3627
        %v3919 = vunpack.c.h.b16 %v3627
        %v3920 = vunpack.c.l.b16 %v3628
        %v3921 = vunpack.c.h.b16 %v3628
        %v3922 = vunpack.c.l.b16 %v3629
        %v3923 = vunpack.c.h.b16 %v3629
        %v3924 = vunpack.c.l.b16 %v3630
        %v3925 = vunpack.c.h.b16 %v3630
        %v3926 = vunpack.c.l.b16 %v3631
        %v3927 = vunpack.c.h.b16 %v3631
        %v3928 = vunpack.c.l.b16 %v3632
        %v3929 = vunpack.c.h.b16 %v3632
        %v3930 = vunpack.c.l.b16 %v3633
        %v3931 = vunpack.c.h.b16 %v3633
        %v3932 = vunpack.c.l.b16 %v3634
        %v3933 = vunpack.c.h.b16 %v3634
        %v3934 = vunpack.c.l.b16 %v3635
        %v3935 = vunpack.c.h.b16 %v3635
        %v3936 = vunpack.c.l.b16 %v3636
        %v3937 = vunpack.c.h.b16 %v3636
        %v3938 = vunpack.c.l.b16 %v3637
        %v3939 = vunpack.c.h.b16 %v3637
        %v3940 = vunpack.c.l.b16 %v3638
        %v3941 = vunpack.c.h.b16 %v3638
        %v3942 = vunpack.c.l.b16 %v3639
        %v3943 = vunpack.c.h.b16 %v3639
        %v3944 = vunpack.c.l.b16 %v3640
        %v3945 = vunpack.c.h.b16 %v3640
        %v3946 = vunpack.c.l.b16 %v3641
        %v3947 = vunpack.c.h.b16 %v3641
        %v3948 = vunpack.c.l.b16 %v3642
        %v3949 = vunpack.c.h.b16 %v3642
        %v3950 = vunpack.c.l.b16 %v3643
        %v3951 = vunpack.c.h.b16 %v3643
        %v3952 = vunpack.c.l.b16 %v3644
        %v3953 = vunpack.c.h.b16 %v3644
        %v3954 = vunpack.c.l.b16 %v3645
        %v3955 = vunpack.c.h.b16 %v3645
        %v3956 = vunpack.c.l.b16 %v3646
        %v3957 = vunpack.c.h.b16 %v3646
        %v3958 = vunpack.c.l.b16 %v3647
        %v3959 = vunpack.c.h.b16 %v3647
        %v3960 = vunpack.c.l.b16 %v3648
        %v3961 = vunpack.c.h.b16 %v3648
        %v3962 = vunpack.c.l.b16 %v3649
        %v3963 = vunpack.c.h.b16 %v3649
        %v3964 = vunpack.c.l.b16 %v3650
        %v3965 = vunpack.c.h.b16 %v3650
        %v3966 = vunpack.c.l.b16 %v3651
        %v3967 = vunpack.c.h.b16 %v3651
        %v3968 = vunpack.c.l.b16 %v3652
        %v3969 = vunpack.c.h.b16 %v3652
        %v3970 = vunpack.c.l.b16 %v3653
        %v3971 = vunpack.c.h.b16 %v3653
        %v3972 = vunpack.c.l.b16 %v3654
        %v3973 = vunpack.c.h.b16 %v3654
        %v3974 = vunpack.c.l.b16 %v3655
        %v3975 = vunpack.c.h.b16 %v3655
        %v3976 = vunpack.c.l.b16 %v3656
        %v3977 = vunpack.c.h.b16 %v3656
        %v3978 = vunpack.c.l.b16 %v3657
        %v3979 = vunpack.c.h.b16 %v3657
        %v3980 = vunpack.c.l.b16 %v3658
        %v3981 = vunpack.c.h.b16 %v3658
        %v3982 = vunpack.c.l.b16 %v3659
        %v3983 = vunpack.c.h.b16 %v3659
        %v3984 = vunpack.c.l.b16 %v3660
        %v3985 = vunpack.c.h.b16 %v3660
        %v3986 = vunpack.c.l.b16 %v3661
        %v3987 = vunpack.c.h.b16 %v3661
        %v3988 = vunpack.c.l.b16 %v3662
        %v3989 = vunpack.c.h.b16 %v3662
        %v3990 = vunpack.c.l.b16 %v3663
        %v3991 = vunpack.c.h.b16 %v3663
        %v3992 = vunpack.c.l.b16 %v3664
        %v3993 = vunpack.c.h.b16 %v3664
        %v3994 = vunpack.c.l.b16 %v3665
        %v3995 = vunpack.c.h.b16 %v3665
        %v3996 = vunpack.c.l.b16 %v3666
        %v3997 = vunpack.c.h.b16 %v3666
        %v3998 = vunpack.c.l.b16 %v3667
        %v3999 = vunpack.c.h.b16 %v3667
        %v4000 = vunpack.c.l.b16 %v3668
        %v4001 = vunpack.c.h.b16 %v3668
        %v4002 = vunpack.c.l.b16 %v3669
        %v4003 = vunpack.c.h.b16 %v3669
        %v4004 = vunpack.c.l.b16 %v3670
        %v4005 = vunpack.c.h.b16 %v3670
        %v4006 = vunpack.c.l.b16 %v3671
        %v4007 = vunpack.c.h.b16 %v3671
        %v4008 = vunpack.c.l.b16 %v3672
        %v4009 = vunpack.c.h.b16 %v3672
        %v4010 = vunpack.c.l.b16 %v3673
        %v4011 = vunpack.c.h.b16 %v3673
        %v4012 = vunpack.c.l.b16 %v3674
        %v4013 = vunpack.c.h.b16 %v3674
        %v4014 = vunpack.c.l.b16 %v3675
        %v4015 = vunpack.c.h.b16 %v3675
        %v4016 = vunpack.c.l.b16 %v3676
        %v4017 = vunpack.c.h.b16 %v3676
        %v4018 = vunpack.c.l.b16 %v3677
        %v4019 = vunpack.c.h.b16 %v3677
        %v4020 = vunpack.c.l.b16 %v3678
        %v4021 = vunpack.c.h.b16 %v3678
        %v4022 = vunpack.c.l.b16 %v3679
        %v4023 = vunpack.c.h.b16 %v3679
        %v4024 = vunpack.c.l.b16 %v3680
        %v4025 = vunpack.c.h.b16 %v3680
        %v4026 = vunpack.c.l.b16 %v3681
        %v4027 = vunpack.c.h.b16 %v3681
        %v4028 = vunpack.c.l.b16 %v3682
        %v4029 = vunpack.c.h.b16 %v3682
        %v4030 = vunpack.c.l.b16 %v3683
        %v4031 = vunpack.c.h.b16 %v3683
        %v4032 = vunpack.c.l.b16 %v3684
        %v4033 = vunpack.c.h.b16 %v3684
        %v4034 = vunpack.c.l.b16 %v3685
        %v4035 = vunpack.c.h.b16 %v3685
        %v4036 = vunpack.c.l.b16 %v3686
        %v4037 = vunpack.c.h.b16 %v3686
        %v4038 = vunpack.c.l.b16 %v3687
        %v4039 = vunpack.c.h.b16 %v3687
        %v4040 = vunpack.c.l.b16 %v3688
        %v4041 = vunpack.c.h.b16 %v3688
        %v4042 = vunpack.c.l.b16 %v3689
        %v4043 = vunpack.c.h.b16 %v3689
        %v4044 = vunpack.c.l.b16 %v3690
        %v4045 = vunpack.c.h.b16 %v3690
        %v4046 = vunpack.c.l.b16 %v3691
        %v4047 = vunpack.c.h.b16 %v3691
        %v4048 = vunpack.c.l.b16 %v3692
        %v4049 = vunpack.c.h.b16 %v3692
        %v4050 = vunpack.c.l.b16 %v3693
        %v4051 = vunpack.c.h.b16 %v3693
        %v4052 = vunpack.c.l.b16 %v3694
        %v4053 = vunpack.c.h.b16 %v3694
        %v4054 = vunpack.c.l.b16 %v3695
        %v4055 = vunpack.c.h.b16 %v3695
        %v4056 = vunpack.c.l.b16 %v3696
        %v4057 = vunpack.c.h.b16 %v3696
        %v4058 = vunpack.c.l.b16 %v3697
        %v4059 = vunpack.c.h.b16 %v3697
        %v4060 = vunpack.c.l.b16 %v3698
        %v4061 = vunpack.c.h.b16 %v3698
        %v4062 = vunpack.c.l.b16 %v3699
        %v4063 = vunpack.c.h.b16 %v3699
        %v4064 = vunpack.c.l.b16 %v3700
        %v4065 = vunpack.c.h.b16 %v3700
        %v4066 = vunpack.c.l.b16 %v3701
        %v4067 = vunpack.c.h.b16 %v3701
        %v4068 = vunpack.c.l.b16 %v3702
        %v4069 = vunpack.c.h.b16 %v3702
        %v4070 = vunpack.c.l.b16 %v3703
        %v4071 = vunpack.c.h.b16 %v3703
        %v4072 = vunpack.c.l.b16 %v3704
        %v4073 = vunpack.c.h.b16 %v3704
        %v4074 = vunpack.c.l.b16 %v3705
        %v4075 = vunpack.c.h.b16 %v3705
        %v4076 = vunpack.c.l.b16 %v3706
        %v4077 = vunpack.c.h.b16 %v3706
        %v4078 = vunpack.c.l.b16 %v3707
        %v4079 = vunpack.c.h.b16 %v3707
        %v4080 = vunpack.c.l.b16 %v3708
        %v4081 = vunpack.c.h.b16 %v3708
        %v4082 = vunpack.c.l.b16 %v3709
        %v4083 = vunpack.c.h.b16 %v3709
        %v4084 = vunpack.c.l.b16 %v3710
        %v4085 = vunpack.c.h.b16 %v3710
        %v4086 = vunpack.c.l.b16 %v3711
        %v4087 = vunpack.c.h.b16 %v3711
        %v4088 = vunpack.c.l.b16 %v3712
        %v4089 = vunpack.c.h.b16 %v3712
        %v4090 = vunpack.c.l.b16 %v3713
        %v4091 = vunpack.c.h.b16 %v3713
        %v4092 = vunpack.c.l.b16 %v3714
        %v4093 = vunpack.c.h.b16 %v3714
        %v4094 = vunpack.c.l.b16 %v3715
        %v4095 = vunpack.c.h.b16 %v3715
        %v4096 = vunpack.c.l.b16 %v3716
        %v4097 = vunpack.c.h.b16 %v3716
        %v4098 = vunpack.c.l.b16 %v3717
        %v4099 = vunpack.c.h.b16 %v3717
        %v4100 = vunpack.c.l.b16 %v3718
        %v4101 = vunpack.c.h.b16 %v3718
        %v4102 = vunpack.c.l.b16 %v3719
        %v4103 = vunpack.c.h.b16 %v3719
        %v4104 = vunpack.c.l.b16 %v3720
        %v4105 = vunpack.c.h.b16 %v3720
        %v4106 = vunpack.c.l.b16 %v3721
        %v4107 = vunpack.c.h.b16 %v3721
        %v4108 = vunpack.c.l.b16 %v3722
        %v4109 = vunpack.c.h.b16 %v3722
        %v4110 = vunpack.c.l.b16 %v3723
        %v4111 = vunpack.c.h.b16 %v3723
        %v4112 = vunpack.c.l.b16 %v3724
        %v4113 = vunpack.c.h.b16 %v3724
        %v4114 = vunpack.c.l.b16 %v3725
        %v4115 = vunpack.c.h.b16 %v3725
        %v4116 = vunpack.c.l.b16 %v3726
        %v4117 = vunpack.c.h.b16 %v3726
        %v4118 = vunpack.c.l.b16 %v3727
        %v4119 = vunpack.c.h.b16 %v3727
        %v4120 = vunpack.c.l.b16 %v3728
        %v4121 = vunpack.c.h.b16 %v3728
        %v4122 = vunpack.c.l.b16 %v3729
        %v4123 = vunpack.c.h.b16 %v3729
        %v4124 = vunpack.c.l.b16 %v3730
        %v4125 = vunpack.c.h.b16 %v3730
        %v4126 = vunpack.c.l.b16 %v3731
        %v4127 = vunpack.c.h.b16 %v3731
        %v4128 = vunpack.c.l.b16 %v3732
        %v4129 = vunpack.c.h.b16 %v3732
        %v4130 = vunpack.c.l.b16 %v3733
        %v4131 = vunpack.c.h.b16 %v3733
        %v4132 = vunpack.c.l.b16 %v3734
        %v4133 = vunpack.c.h.b16 %v3734
        %v4134 = vunpack.c.l.b16 %v3735
        %v4135 = vunpack.c.h.b16 %v3735
        %v4136 = vunpack.c.l.b16 %v3736
        %v4137 = vunpack.c.h.b16 %v3736
        %v4138 = vunpack.c.l.b16 %v3737
        %v4139 = vunpack.c.h.b16 %v3737
        %v4140 = vunpack.c.l.b16 %v3738
        %v4141 = vunpack.c.h.b16 %v3738
        %v4142 = vunpack.c.l.b16 %v3739
        %v4143 = vunpack.c.h.b16 %v3739
        %v4144 = vunpack.c.l.b16 %v3740
        %v4145 = vunpack.c.h.b16 %v3740
        %v4146 = vunpack.c.l.b16 %v3741
        %v4147 = vunpack.c.h.b16 %v3741
        %v4148 = vpack.c.b16 %v3896, %v3892
        %v4149 = vpack.c.b16 %v3897, %v3893
        %v4150 = vpack.c.b16 %v3898, %v3894
        %v4151 = vpack.c.b16 %v3899, %v3895
        %v4152 = vpack.c.b16 %v3904, %v3900
        %v4153 = vpack.c.b16 %v3905, %v3901
        %v4154 = vpack.c.b16 %v3906, %v3902
        %v4155 = vpack.c.b16 %v3907, %v3903
        %v4156 = vpack.c.b16 %v3912, %v3908
        %v4157 = vpack.c.b16 %v3913, %v3909
        %v4158 = vpack.c.b16 %v3914, %v3910
        %v4159 = vpack.c.b16 %v3915, %v3911
        %v4160 = vpack.c.b16 %v3920, %v3916
        %v4161 = vpack.c.b16 %v3921, %v3917
        %v4162 = vpack.c.b16 %v3922, %v3918
        %v4163 = vpack.c.b16 %v3923, %v3919
        %v4164 = vpack.c.b16 %v3928, %v3924
        %v4165 = vpack.c.b16 %v3929, %v3925
        %v4166 = vpack.c.b16 %v3930, %v3926
        %v4167 = vpack.c.b16 %v3931, %v3927
        %v4168 = vpack.c.b16 %v3936, %v3932
        %v4169 = vpack.c.b16 %v3937, %v3933
        %v4170 = vpack.c.b16 %v3938, %v3934
        %v4171 = vpack.c.b16 %v3939, %v3935
        %v4172 = vpack.c.b16 %v3944, %v3940
        %v4173 = vpack.c.b16 %v3945, %v3941
        %v4174 = vpack.c.b16 %v3946, %v3942
        %v4175 = vpack.c.b16 %v3947, %v3943
        %v4176 = vpack.c.b16 %v3952, %v3948
        %v4177 = vpack.c.b16 %v3953, %v3949
        %v4178 = vpack.c.b16 %v3954, %v3950
        %v4179 = vpack.c.b16 %v3955, %v3951
        %v4180 = vpack.c.b16 %v3960, %v3956
        %v4181 = vpack.c.b16 %v3961, %v3957
        %v4182 = vpack.c.b16 %v3962, %v3958
        %v4183 = vpack.c.b16 %v3963, %v3959
        %v4184 = vpack.c.b16 %v3968, %v3964
        %v4185 = vpack.c.b16 %v3969, %v3965
        %v4186 = vpack.c.b16 %v3970, %v3966
        %v4187 = vpack.c.b16 %v3971, %v3967
        %v4188 = vpack.c.b16 %v3976, %v3972
        %v4189 = vpack.c.b16 %v3977, %v3973
        %v4190 = vpack.c.b16 %v3978, %v3974
        %v4191 = vpack.c.b16 %v3979, %v3975
        %v4192 = vpack.c.b16 %v3984, %v3980
        %v4193 = vpack.c.b16 %v3985, %v3981
        %v4194 = vpack.c.b16 %v3986, %v3982
        %v4195 = vpack.c.b16 %v3987, %v3983
        %v4196 = vpack.c.b16 %v3992, %v3988
        %v4197 = vpack.c.b16 %v3993, %v3989
        %v4198 = vpack.c.b16 %v3994, %v3990
        %v4199 = vpack.c.b16 %v3995, %v3991
        %v4200 = vpack.c.b16 %v4000, %v3996
        %v4201 = vpack.c.b16 %v4001, %v3997
        %v4202 = vpack.c.b16 %v4002, %v3998
        %v4203 = vpack.c.b16 %v4003, %v3999
        %v4204 = vpack.c.b16 %v4008, %v4004
        %v4205 = vpack.c.b16 %v4009, %v4005
        %v4206 = vpack.c.b16 %v4010, %v4006
        %v4207 = vpack.c.b16 %v4011, %v4007
        %v4208 = vpack.c.b16 %v4016, %v4012
        %v4209 = vpack.c.b16 %v4017, %v4013
        %v4210 = vpack.c.b16 %v4018, %v4014
        %v4211 = vpack.c.b16 %v4019, %v4015
        %v4212 = vpack.c.b16 %v4024, %v4020
        %v4213 = vpack.c.b16 %v4025, %v4021
        %v4214 = vpack.c.b16 %v4026, %v4022
        %v4215 = vpack.c.b16 %v4027, %v4023
        %v4216 = vpack.c.b16 %v4032, %v4028
        %v4217 = vpack.c.b16 %v4033, %v4029
        %v4218 = vpack.c.b16 %v4034, %v4030
        %v4219 = vpack.c.b16 %v4035, %v4031
        %v4220 = vpack.c.b16 %v4040, %v4036
        %v4221 = vpack.c.b16 %v4041, %v4037
        %v4222 = vpack.c.b16 %v4042, %v4038
        %v4223 = vpack.c.b16 %v4043, %v4039
        %v4224 = vpack.c.b16 %v4048, %v4044
        %v4225 = vpack.c.b16 %v4049, %v4045
        %v4226 = vpack.c.b16 %v4050, %v4046
        %v4227 = vpack.c.b16 %v4051, %v4047
        %v4228 = vpack.c.b16 %v4056, %v4052
        %v4229 = vpack.c.b16 %v4057, %v4053
        %v4230 = vpack.c.b16 %v4058, %v4054
        %v4231 = vpack.c.b16 %v4059, %v4055
        %v4232 = vpack.c.b16 %v4064, %v4060
        %v4233 = vpack.c.b16 %v4065, %v4061
        %v4234 = vpack.c.b16 %v4066, %v4062
        %v4235 = vpack.c.b16 %v4067, %v4063
        %v4236 = vpack.c.b16 %v4072, %v4068
        %v4237 = vpack.c.b16 %v4073, %v4069
        %v4238 = vpack.c.b16 %v4074, %v4070
        %v4239 = vpack.c.b16 %v4075, %v4071
        %v4240 = vpack.c.b16 %v4080, %v4076
        %v4241 = vpack.c.b16 %v4081, %v4077
        %v4242 = vpack.c.b16 %v4082, %v4078
        %v4243 = vpack.c.b16 %v4083, %v4079
        %v4244 = vpack.c.b16 %v4088, %v4084
        %v4245 = vpack.c.b16 %v4089, %v4085
        %v4246 = vpack.c.b16 %v4090, %v4086
        %v4247 = vpack.c.b16 %v4091, %v4087
        %v4248 = vpack.c.b16 %v4096, %v4092
        %v4249 = vpack.c.b16 %v4097, %v4093
        %v4250 = vpack.c.b16 %v4098, %v4094
        %v4251 = vpack.c.b16 %v4099, %v4095
        %v4252 = vpack.c.b16 %v4104, %v4100
        %v4253 = vpack.c.b16 %v4105, %v4101
        %v4254 = vpack.c.b16 %v4106, %v4102
        %v4255 = vpack.c.b16 %v4107, %v4103
        %v4256 = vpack.c.b16 %v4112, %v4108
        %v4257 = vpack.c.b16 %v4113, %v4109
        %v4258 = vpack.c.b16 %v4114, %v4110
        %v4259 = vpack.c.b16 %v4115, %v4111
        %v4260 = vpack.c.b16 %v4120, %v4116
        %v4261 = vpack.c.b16 %v4121, %v4117
        %v4262 = vpack.c.b16 %v4122, %v4118
        %v4263 = vpack.c.b16 %v4123, %v4119
        %v4264 = vpack.c.b16 %v4128, %v4124
        %v4265 = vpack.c.b16 %v4129, %v4125
        %v4266 = vpack.c.b16 %v4130, %v4126
        %v4267 = vpack.c.b16 %v4131, %v4127
        %v4268 = vpack.c.b16 %v4136, %v4132
        %v4269 = vpack.c.b16 %v4137, %v4133
        %v4270 = vpack.c.b16 %v4138, %v4134
        %v4271 = vpack.c.b16 %v4139, %v4135
        %v4272 = vpack.c.b16 %v4144, %v4140
        %v4273 = vpack.c.b16 %v4145, %v4141
        %v4274 = vpack.c.b16 %v4146, %v4142
        %v4275 = vpack.c.b16 %v4147, %v4143
        %4404 = vmatprep.subr.bf16.mxu0 %v4177
        %4405 = vmatpush1.bf16.msra.mxu0 %v4176
        %4406 = vmatprep.subr.bf16.mxu0 %v4173
        %4407 = vmatpush1.bf16.msra.mxu0 %v4172
        %4408 = vmatprep.subr.bf16.mxu0 %v4169
        %4409 = vmatpush1.bf16.msra.mxu0 %v4168
        %4410 = vmatprep.subr.bf16.mxu0 %v4165
        %4411 = vmatpush1.bf16.msra.mxu0 %v4164
        %4412 = vmatprep.subr.bf16.mxu0 %v4161
        %4413 = vmatpush1.bf16.msra.mxu0 %v4160
        %4414 = vmatprep.subr.bf16.mxu0 %v4157
        %4415 = vmatpush1.bf16.msra.mxu0 %v4156
        %4416 = vmatprep.subr.bf16.mxu0 %v4153
        %4417 = vmatpush1.bf16.msra.mxu0 %v4152
        %4418 = vmatprep.subr.bf16.mxu0 %v4149
        %4419 = vmatpush1.bf16.msra.mxu0 %v4148
        %4420 = vmatprep.subr.bf16.mxu0 %v4209
        %4421 = vmatpush2.bf16.msra.mxu0 %v4208
        %4422 = vmatprep.subr.bf16.mxu0 %v4205
        %4423 = vmatpush2.bf16.msra.mxu0 %v4204
        %4424 = vmatprep.subr.bf16.mxu0 %v4201
        %4425 = vmatpush2.bf16.msra.mxu0 %v4200
        %4426 = vmatprep.subr.bf16.mxu0 %v4197
        %4427 = vmatpush2.bf16.msra.mxu0 %v4196
        %4428 = vmatprep.subr.bf16.mxu0 %v4193
        %4429 = vmatpush2.bf16.msra.mxu0 %v4192
        %4430 = vmatprep.subr.bf16.mxu0 %v4189
        %4431 = vmatpush2.bf16.msra.mxu0 %v4188
        %4432 = vmatprep.subr.bf16.mxu0 %v4185
        %4433 = vmatpush2.bf16.msra.mxu0 %v4184
        %4434 = vmatprep.subr.bf16.mxu0 %v4181
        %4435 = vmatpush2.bf16.msra.mxu0 %v4180
        %4436 = vmatprep.mubr.bf16.mxu0 %v820
        %4437 = vmatmul.mubr.bf16.gmra.mxu0 %v819
        %v4438 = vpop.f32.mrf.mxu0
        %v4439 = vadd.f32 %v3747, %v4438
        %v4440 = vpop.f32.mrf.mxu0
        %v4441 = vadd.f32 %v3751, %v4440
        %v4442 = vpop.f32.mrf.mxu0
        %v4443 = vpop.f32.mrf.mxu0
        %4444 = vdwg.mxu0
        %4445 = vmatprep.subr.bf16.mxu0 %v4241
        %4446 = vmatpush1.bf16.msra.mxu0 %v4240
        %4447 = vmatprep.subr.bf16.mxu0 %v4237
        %4448 = vmatpush1.bf16.msra.mxu0 %v4236
        %4449 = vmatprep.subr.bf16.mxu0 %v4233
        %4450 = vmatpush1.bf16.msra.mxu0 %v4232
        %4451 = vmatprep.subr.bf16.mxu0 %v4229
        %4452 = vmatpush1.bf16.msra.mxu0 %v4228
        %4453 = vmatprep.subr.bf16.mxu0 %v4225
        %4454 = vmatpush1.bf16.msra.mxu0 %v4224
        %4455 = vmatprep.subr.bf16.mxu0 %v4221
        %4456 = vmatpush1.bf16.msra.mxu0 %v4220
        %4457 = vmatprep.subr.bf16.mxu0 %v4217
        %4458 = vmatpush1.bf16.msra.mxu0 %v4216
        %4459 = vmatprep.subr.bf16.mxu0 %v4213
        %4460 = vmatpush1.bf16.msra.mxu0 %v4212
        %4461 = vmatprep.subr.bf16.mxu0 %v4273
        %4462 = vmatpush2.bf16.msra.mxu0 %v4272
        %4463 = vmatprep.subr.bf16.mxu0 %v4269
        %4464 = vmatpush2.bf16.msra.mxu0 %v4268
        %4465 = vmatprep.subr.bf16.mxu0 %v4265
        %4466 = vmatpush2.bf16.msra.mxu0 %v4264
        %4467 = vmatprep.subr.bf16.mxu0 %v4261
        %4468 = vmatpush2.bf16.msra.mxu0 %v4260
        %4469 = vmatprep.subr.bf16.mxu0 %v4257
        %4470 = vmatpush2.bf16.msra.mxu0 %v4256
        %4471 = vmatprep.subr.bf16.mxu0 %v4253
        %4472 = vmatpush2.bf16.msra.mxu0 %v4252
        %4473 = vmatprep.subr.bf16.mxu0 %v4249
        %4474 = vmatpush2.bf16.msra.mxu0 %v4248
        %4475 = vmatprep.subr.bf16.mxu0 %v4245
        %4476 = vmatpush2.bf16.msra.mxu0 %v4244
        %4477 = vmatprep.mubr.bf16.mxu0 %v822
        %4478 = vmatmul.mubr.bf16.gmra.mxu0 %v821
        %v4479 = vpop.f32.mrf.mxu0
        %v4480 = vadd.f32 %v4439, %v4479
        %v4481 = vpop.f32.mrf.mxu0
        %v4482 = vadd.f32 %v4441, %v4481
        %v4483 = vpop.f32.mrf.mxu0
        %v4484 = vpop.f32.mrf.mxu0
        %4485 = vdwg.mxu0
        %4486 = vmatprep.subr.bf16.mxu0 %v4179
        %4487 = vmatpush1.bf16.msra.mxu0 %v4178
        %4488 = vmatprep.subr.bf16.mxu0 %v4175
        %4489 = vmatpush1.bf16.msra.mxu0 %v4174
        %4490 = vmatprep.subr.bf16.mxu0 %v4171
        %4491 = vmatpush1.bf16.msra.mxu0 %v4170
        %4492 = vmatprep.subr.bf16.mxu0 %v4167
        %4493 = vmatpush1.bf16.msra.mxu0 %v4166
        %4494 = vmatprep.subr.bf16.mxu0 %v4163
        %4495 = vmatpush1.bf16.msra.mxu0 %v4162
        %4496 = vmatprep.subr.bf16.mxu0 %v4159
        %4497 = vmatpush1.bf16.msra.mxu0 %v4158
        %4498 = vmatprep.subr.bf16.mxu0 %v4155
        %4499 = vmatpush1.bf16.msra.mxu0 %v4154
        %4500 = vmatprep.subr.bf16.mxu0 %v4151
        %4501 = vmatpush1.bf16.msra.mxu0 %v4150
        %4502 = vmatprep.subr.bf16.mxu0 %v4211
        %4503 = vmatpush2.bf16.msra.mxu0 %v4210
        %4504 = vmatprep.subr.bf16.mxu0 %v4207
        %4505 = vmatpush2.bf16.msra.mxu0 %v4206
        %4506 = vmatprep.subr.bf16.mxu0 %v4203
        %4507 = vmatpush2.bf16.msra.mxu0 %v4202
        %4508 = vmatprep.subr.bf16.mxu0 %v4199
        %4509 = vmatpush2.bf16.msra.mxu0 %v4198
        %4510 = vmatprep.subr.bf16.mxu0 %v4195
        %4511 = vmatpush2.bf16.msra.mxu0 %v4194
        %4512 = vmatprep.subr.bf16.mxu0 %v4191
        %4513 = vmatpush2.bf16.msra.mxu0 %v4190
        %4514 = vmatprep.subr.bf16.mxu0 %v4187
        %4515 = vmatpush2.bf16.msra.mxu0 %v4186
        %4516 = vmatprep.subr.bf16.mxu0 %v4183
        %4517 = vmatpush2.bf16.msra.mxu0 %v4182
        %4518 = vmatprep.mubr.bf16.mxu0 %v820
        %4519 = vmatmul.mubr.bf16.gmra.mxu0 %v819
        %v4520 = vpop.f32.mrf.mxu0
        %v4521 = vadd.f32 %v3755, %v4520
        %v4522 = vpop.f32.mrf.mxu0
        %v4523 = vadd.f32 %v3759, %v4522
        %v4524 = vpop.f32.mrf.mxu0
        %v4525 = vpop.f32.mrf.mxu0
        %4526 = vdwg.mxu0
        %4527 = vmatprep.subr.bf16.mxu0 %v4243
        %4528 = vmatpush1.bf16.msra.mxu0 %v4242
        %4529 = vmatprep.subr.bf16.mxu0 %v4239
        %4530 = vmatpush1.bf16.msra.mxu0 %v4238
        %4531 = vmatprep.subr.bf16.mxu0 %v4235
        %4532 = vmatpush1.bf16.msra.mxu0 %v4234
        %4533 = vmatprep.subr.bf16.mxu0 %v4231
        %4534 = vmatpush1.bf16.msra.mxu0 %v4230
        %4535 = vmatprep.subr.bf16.mxu0 %v4227
        %4536 = vmatpush1.bf16.msra.mxu0 %v4226
        %4537 = vmatprep.subr.bf16.mxu0 %v4223
        %4538 = vmatpush1.bf16.msra.mxu0 %v4222
        %4539 = vmatprep.subr.bf16.mxu0 %v4219
        %4540 = vmatpush1.bf16.msra.mxu0 %v4218
        %4541 = vmatprep.subr.bf16.mxu0 %v4215
        %4542 = vmatpush1.bf16.msra.mxu0 %v4214
        %4543 = vmatprep.subr.bf16.mxu0 %v4275
        %4544 = vmatpush2.bf16.msra.mxu0 %v4274
        %4545 = vmatprep.subr.bf16.mxu0 %v4271
        %4546 = vmatpush2.bf16.msra.mxu0 %v4270
        %4547 = vmatprep.subr.bf16.mxu0 %v4267
        %4548 = vmatpush2.bf16.msra.mxu0 %v4266
        %4549 = vmatprep.subr.bf16.mxu0 %v4263
        %4550 = vmatpush2.bf16.msra.mxu0 %v4262
        %4551 = vmatprep.subr.bf16.mxu0 %v4259
        %4552 = vmatpush2.bf16.msra.mxu0 %v4258
        %4553 = vmatprep.subr.bf16.mxu0 %v4255
        %4554 = vmatpush2.bf16.msra.mxu0 %v4254
        %4555 = vmatprep.subr.bf16.mxu0 %v4251
        %4556 = vmatpush2.bf16.msra.mxu0 %v4250
        %4557 = vmatprep.subr.bf16.mxu0 %v4247
        %4558 = vmatpush2.bf16.msra.mxu0 %v4246
        %4559 = vmatprep.mubr.bf16.mxu0 %v822
        %4560 = vmatmul.mubr.bf16.gmra.mxu0 %v821
        %v4561 = vpop.f32.mrf.mxu0
        %v4562 = vadd.f32 %v4521, %v4561
        %v4563 = vpop.f32.mrf.mxu0
        %v4564 = vadd.f32 %v4523, %v4563
        %v4565 = vpop.f32.mrf.mxu0
        %v4566 = vpop.f32.mrf.mxu0
        %4567 = vdwg.mxu0
        %v4568 = vpack.c.bf16 %v3610, %v3610
        %v4569 = vpack.c.bf16 %v3611, %v3611
        %v4570 = vpack.c.bf16 %v3612, %v3612
        %v4571 = vpack.c.bf16 %v3613, %v3613
        %v4572 = vld [vmem:[#allocation22] sm:$0xff]
        %v4573 = vld [vmem:[#allocation22 + $0x8] sm:$0xff]
        %v4574 = vld [vmem:[#allocation22 + $0x10] sm:$0xff]
        %v4575 = vld [vmem:[#allocation22 + $0x18] sm:$0xff]
        %v4576 = vld [vmem:[#allocation22 + $0x20] sm:$0xff]
        %v4577 = vld [vmem:[#allocation22 + $0x28] sm:$0xff]
        %v4578 = vld [vmem:[#allocation22 + $0x30] sm:$0xff]
        %v4579 = vld [vmem:[#allocation22 + $0x38] sm:$0xff]
        %v4580 = vld [vmem:[#allocation22 + $0x40] sm:$0xff]
        %v4581 = vld [vmem:[#allocation22 + $0x48] sm:$0xff]
        %v4582 = vld [vmem:[#allocation22 + $0x50] sm:$0xff]
        %v4583 = vld [vmem:[#allocation22 + $0x58] sm:$0xff]
        %v4584 = vld [vmem:[#allocation22 + $0x60] sm:$0xff]
        %v4585 = vld [vmem:[#allocation22 + $0x68] sm:$0xff]
        %v4586 = vld [vmem:[#allocation22 + $0x70] sm:$0xff]
        %v4587 = vld [vmem:[#allocation22 + $0x78] sm:$0xff]
        %v4588 = vld [vmem:[#allocation22 + $0x80] sm:$0xff]
        %v4589 = vld [vmem:[#allocation22 + $0x88] sm:$0xff]
        %v4590 = vld [vmem:[#allocation22 + $0x90] sm:$0xff]
        %v4591 = vld [vmem:[#allocation22 + $0x98] sm:$0xff]
        %v4592 = vld [vmem:[#allocation22 + $0xa0] sm:$0xff]
        %v4593 = vld [vmem:[#allocation22 + $0xa8] sm:$0xff]
        %v4594 = vld [vmem:[#allocation22 + $0xb0] sm:$0xff]
        %v4595 = vld [vmem:[#allocation22 + $0xb8] sm:$0xff]
        %v4596 = vld [vmem:[#allocation22 + $0xc0] sm:$0xff]
        %v4597 = vld [vmem:[#allocation22 + $0xc8] sm:$0xff]
        %v4598 = vld [vmem:[#allocation22 + $0xd0] sm:$0xff]
        %v4599 = vld [vmem:[#allocation22 + $0xd8] sm:$0xff]
        %v4600 = vld [vmem:[#allocation22 + $0xe0] sm:$0xff]
        %v4601 = vld [vmem:[#allocation22 + $0xe8] sm:$0xff]
        %v4602 = vld [vmem:[#allocation22 + $0xf0] sm:$0xff]
        %v4603 = vld [vmem:[#allocation22 + $0xf8] sm:$0xff]
        %v4604 = vld [vmem:[#allocation22 + $0x100] sm:$0xff]
        %v4605 = vld [vmem:[#allocation22 + $0x108] sm:$0xff]
        %v4606 = vld [vmem:[#allocation22 + $0x110] sm:$0xff]
        %v4607 = vld [vmem:[#allocation22 + $0x118] sm:$0xff]
        %v4608 = vld [vmem:[#allocation22 + $0x120] sm:$0xff]
        %v4609 = vld [vmem:[#allocation22 + $0x128] sm:$0xff]
        %v4610 = vld [vmem:[#allocation22 + $0x130] sm:$0xff]
        %v4611 = vld [vmem:[#allocation22 + $0x138] sm:$0xff]
        %v4612 = vld [vmem:[#allocation22 + $0x140] sm:$0xff]
        %v4613 = vld [vmem:[#allocation22 + $0x148] sm:$0xff]
        %v4614 = vld [vmem:[#allocation22 + $0x150] sm:$0xff]
        %v4615 = vld [vmem:[#allocation22 + $0x158] sm:$0xff]
        %v4616 = vld [vmem:[#allocation22 + $0x160] sm:$0xff]
        %v4617 = vld [vmem:[#allocation22 + $0x168] sm:$0xff]
        %v4618 = vld [vmem:[#allocation22 + $0x170] sm:$0xff]
        %v4619 = vld [vmem:[#allocation22 + $0x178] sm:$0xff]
        %v4620 = vld [vmem:[#allocation22 + $0x180] sm:$0xff]
        %v4621 = vld [vmem:[#allocation22 + $0x188] sm:$0xff]
        %v4622 = vld [vmem:[#allocation22 + $0x190] sm:$0xff]
        %v4623 = vld [vmem:[#allocation22 + $0x198] sm:$0xff]
        %v4624 = vld [vmem:[#allocation22 + $0x1a0] sm:$0xff]
        %v4625 = vld [vmem:[#allocation22 + $0x1a8] sm:$0xff]
        %v4626 = vld [vmem:[#allocation22 + $0x1b0] sm:$0xff]
        %v4627 = vld [vmem:[#allocation22 + $0x1b8] sm:$0xff]
        %v4628 = vld [vmem:[#allocation22 + $0x1c0] sm:$0xff]
        %v4629 = vld [vmem:[#allocation22 + $0x1c8] sm:$0xff]
        %v4630 = vld [vmem:[#allocation22 + $0x1d0] sm:$0xff]
        %v4631 = vld [vmem:[#allocation22 + $0x1d8] sm:$0xff]
        %v4632 = vld [vmem:[#allocation22 + $0x1e0] sm:$0xff]
        %v4633 = vld [vmem:[#allocation22 + $0x1e8] sm:$0xff]
        %v4634 = vld [vmem:[#allocation22 + $0x1f0] sm:$0xff]
        %v4635 = vld [vmem:[#allocation22 + $0x1f8] sm:$0xff]
        %v4636 = vld [vmem:[#allocation22 + $0x200] sm:$0xff]
        %v4637 = vld [vmem:[#allocation22 + $0x208] sm:$0xff]
        %v4638 = vld [vmem:[#allocation22 + $0x210] sm:$0xff]
        %v4639 = vld [vmem:[#allocation22 + $0x218] sm:$0xff]
        %v4640 = vld [vmem:[#allocation22 + $0x220] sm:$0xff]
        %v4641 = vld [vmem:[#allocation22 + $0x228] sm:$0xff]
        %v4642 = vld [vmem:[#allocation22 + $0x230] sm:$0xff]
        %v4643 = vld [vmem:[#allocation22 + $0x238] sm:$0xff]
        %v4644 = vld [vmem:[#allocation22 + $0x240] sm:$0xff]
        %v4645 = vld [vmem:[#allocation22 + $0x248] sm:$0xff]
        %v4646 = vld [vmem:[#allocation22 + $0x250] sm:$0xff]
        %v4647 = vld [vmem:[#allocation22 + $0x258] sm:$0xff]
        %v4648 = vld [vmem:[#allocation22 + $0x260] sm:$0xff]
        %v4649 = vld [vmem:[#allocation22 + $0x268] sm:$0xff]
        %v4650 = vld [vmem:[#allocation22 + $0x270] sm:$0xff]
        %v4651 = vld [vmem:[#allocation22 + $0x278] sm:$0xff]
        %v4652 = vld [vmem:[#allocation22 + $0x280] sm:$0xff]
        %v4653 = vld [vmem:[#allocation22 + $0x288] sm:$0xff]
        %v4654 = vld [vmem:[#allocation22 + $0x290] sm:$0xff]
        %v4655 = vld [vmem:[#allocation22 + $0x298] sm:$0xff]
        %v4656 = vld [vmem:[#allocation22 + $0x2a0] sm:$0xff]
        %v4657 = vld [vmem:[#allocation22 + $0x2a8] sm:$0xff]
        %v4658 = vld [vmem:[#allocation22 + $0x2b0] sm:$0xff]
        %v4659 = vld [vmem:[#allocation22 + $0x2b8] sm:$0xff]
        %v4660 = vld [vmem:[#allocation22 + $0x2c0] sm:$0xff]
        %v4661 = vld [vmem:[#allocation22 + $0x2c8] sm:$0xff]
        %v4662 = vld [vmem:[#allocation22 + $0x2d0] sm:$0xff]
        %v4663 = vld [vmem:[#allocation22 + $0x2d8] sm:$0xff]
        %v4664 = vld [vmem:[#allocation22 + $0x2e0] sm:$0xff]
        %v4665 = vld [vmem:[#allocation22 + $0x2e8] sm:$0xff]
        %v4666 = vld [vmem:[#allocation22 + $0x2f0] sm:$0xff]
        %v4667 = vld [vmem:[#allocation22 + $0x2f8] sm:$0xff]
        %v4668 = vld [vmem:[#allocation22 + $0x300] sm:$0xff]
        %v4669 = vld [vmem:[#allocation22 + $0x308] sm:$0xff]
        %v4670 = vld [vmem:[#allocation22 + $0x310] sm:$0xff]
        %v4671 = vld [vmem:[#allocation22 + $0x318] sm:$0xff]
        %v4672 = vld [vmem:[#allocation22 + $0x320] sm:$0xff]
        %v4673 = vld [vmem:[#allocation22 + $0x328] sm:$0xff]
        %v4674 = vld [vmem:[#allocation22 + $0x330] sm:$0xff]
        %v4675 = vld [vmem:[#allocation22 + $0x338] sm:$0xff]
        %v4676 = vld [vmem:[#allocation22 + $0x340] sm:$0xff]
        %v4677 = vld [vmem:[#allocation22 + $0x348] sm:$0xff]
        %v4678 = vld [vmem:[#allocation22 + $0x350] sm:$0xff]
        %v4679 = vld [vmem:[#allocation22 + $0x358] sm:$0xff]
        %v4680 = vld [vmem:[#allocation22 + $0x360] sm:$0xff]
        %v4681 = vld [vmem:[#allocation22 + $0x368] sm:$0xff]
        %v4682 = vld [vmem:[#allocation22 + $0x370] sm:$0xff]
        %v4683 = vld [vmem:[#allocation22 + $0x378] sm:$0xff]
        %v4684 = vld [vmem:[#allocation22 + $0x380] sm:$0xff]
        %v4685 = vld [vmem:[#allocation22 + $0x388] sm:$0xff]
        %v4686 = vld [vmem:[#allocation22 + $0x390] sm:$0xff]
        %v4687 = vld [vmem:[#allocation22 + $0x398] sm:$0xff]
        %v4688 = vld [vmem:[#allocation22 + $0x3a0] sm:$0xff]
        %v4689 = vld [vmem:[#allocation22 + $0x3a8] sm:$0xff]
        %v4690 = vld [vmem:[#allocation22 + $0x3b0] sm:$0xff]
        %v4691 = vld [vmem:[#allocation22 + $0x3b8] sm:$0xff]
        %v4692 = vld [vmem:[#allocation22 + $0x3c0] sm:$0xff]
        %v4693 = vld [vmem:[#allocation22 + $0x3c8] sm:$0xff]
        %v4694 = vld [vmem:[#allocation22 + $0x3d0] sm:$0xff]
        %v4695 = vld [vmem:[#allocation22 + $0x3d8] sm:$0xff]
        %v4696 = vld [vmem:[#allocation22 + $0x3e0] sm:$0xff]
        %v4697 = vld [vmem:[#allocation22 + $0x3e8] sm:$0xff]
        %v4698 = vld [vmem:[#allocation22 + $0x3f0] sm:$0xff]
        %v4699 = vld [vmem:[#allocation22 + $0x3f8] sm:$0xff]
        %v4700 = vld [vmem:[%s16] sm:$0xf]
        %v4702 = vlaneseq
        %v4703 = vshrl.u32 %v4702, 7
        %v4704 = vsub.s32 0, %v4703
        %v4705 = vrot.slane %v4700, %v4704
        %v4706 = vlaneseq
        %v4707 = vshrl.u32 %v4706, 7
        %v4708 = vsub.s32 1, %v4707
        %v4709 = vrot.slane %v4700, %v4708
        %v4710 = vlaneseq
        %v4711 = vshrl.u32 %v4710, 7
        %v4712 = vsub.s32 2, %v4711
        %v4713 = vrot.slane %v4700, %v4712
        %v4714 = vlaneseq
        %v4715 = vshrl.u32 %v4714, 7
        %v4716 = vsub.s32 3, %v4715
        %v4717 = vrot.slane %v4700, %v4716
        %v4850 = vunpack.c.l.b16 %v4572
        %v4851 = vunpack.c.h.b16 %v4572
        %v4852 = vunpack.c.l.b16 %v4573
        %v4853 = vunpack.c.h.b16 %v4573
        %v4854 = vunpack.c.l.b16 %v4574
        %v4855 = vunpack.c.h.b16 %v4574
        %v4856 = vunpack.c.l.b16 %v4575
        %v4857 = vunpack.c.h.b16 %v4575
        %v4858 = vunpack.c.l.b16 %v4576
        %v4859 = vunpack.c.h.b16 %v4576
        %v4860 = vunpack.c.l.b16 %v4577
        %v4861 = vunpack.c.h.b16 %v4577
        %v4862 = vunpack.c.l.b16 %v4578
        %v4863 = vunpack.c.h.b16 %v4578
        %v4864 = vunpack.c.l.b16 %v4579
        %v4865 = vunpack.c.h.b16 %v4579
        %v4866 = vunpack.c.l.b16 %v4580
        %v4867 = vunpack.c.h.b16 %v4580
        %v4868 = vunpack.c.l.b16 %v4581
        %v4869 = vunpack.c.h.b16 %v4581
        %v4870 = vunpack.c.l.b16 %v4582
        %v4871 = vunpack.c.h.b16 %v4582
        %v4872 = vunpack.c.l.b16 %v4583
        %v4873 = vunpack.c.h.b16 %v4583
        %v4874 = vunpack.c.l.b16 %v4584
        %v4875 = vunpack.c.h.b16 %v4584
        %v4876 = vunpack.c.l.b16 %v4585
        %v4877 = vunpack.c.h.b16 %v4585
        %v4878 = vunpack.c.l.b16 %v4586
        %v4879 = vunpack.c.h.b16 %v4586
        %v4880 = vunpack.c.l.b16 %v4587
        %v4881 = vunpack.c.h.b16 %v4587
        %v4882 = vunpack.c.l.b16 %v4588
        %v4883 = vunpack.c.h.b16 %v4588
        %v4884 = vunpack.c.l.b16 %v4589
        %v4885 = vunpack.c.h.b16 %v4589
        %v4886 = vunpack.c.l.b16 %v4590
        %v4887 = vunpack.c.h.b16 %v4590
        %v4888 = vunpack.c.l.b16 %v4591
        %v4889 = vunpack.c.h.b16 %v4591
        %v4890 = vunpack.c.l.b16 %v4592
        %v4891 = vunpack.c.h.b16 %v4592
        %v4892 = vunpack.c.l.b16 %v4593
        %v4893 = vunpack.c.h.b16 %v4593
        %v4894 = vunpack.c.l.b16 %v4594
        %v4895 = vunpack.c.h.b16 %v4594
        %v4896 = vunpack.c.l.b16 %v4595
        %v4897 = vunpack.c.h.b16 %v4595
        %v4898 = vunpack.c.l.b16 %v4596
        %v4899 = vunpack.c.h.b16 %v4596
        %v4900 = vunpack.c.l.b16 %v4597
        %v4901 = vunpack.c.h.b16 %v4597
        %v4902 = vunpack.c.l.b16 %v4598
        %v4903 = vunpack.c.h.b16 %v4598
        %v4904 = vunpack.c.l.b16 %v4599
        %v4905 = vunpack.c.h.b16 %v4599
        %v4906 = vunpack.c.l.b16 %v4600
        %v4907 = vunpack.c.h.b16 %v4600
        %v4908 = vunpack.c.l.b16 %v4601
        %v4909 = vunpack.c.h.b16 %v4601
        %v4910 = vunpack.c.l.b16 %v4602
        %v4911 = vunpack.c.h.b16 %v4602
        %v4912 = vunpack.c.l.b16 %v4603
        %v4913 = vunpack.c.h.b16 %v4603
        %v4914 = vunpack.c.l.b16 %v4604
        %v4915 = vunpack.c.h.b16 %v4604
        %v4916 = vunpack.c.l.b16 %v4605
        %v4917 = vunpack.c.h.b16 %v4605
        %v4918 = vunpack.c.l.b16 %v4606
        %v4919 = vunpack.c.h.b16 %v4606
        %v4920 = vunpack.c.l.b16 %v4607
        %v4921 = vunpack.c.h.b16 %v4607
        %v4922 = vunpack.c.l.b16 %v4608
        %v4923 = vunpack.c.h.b16 %v4608
        %v4924 = vunpack.c.l.b16 %v4609
        %v4925 = vunpack.c.h.b16 %v4609
        %v4926 = vunpack.c.l.b16 %v4610
        %v4927 = vunpack.c.h.b16 %v4610
        %v4928 = vunpack.c.l.b16 %v4611
        %v4929 = vunpack.c.h.b16 %v4611
        %v4930 = vunpack.c.l.b16 %v4612
        %v4931 = vunpack.c.h.b16 %v4612
        %v4932 = vunpack.c.l.b16 %v4613
        %v4933 = vunpack.c.h.b16 %v4613
        %v4934 = vunpack.c.l.b16 %v4614
        %v4935 = vunpack.c.h.b16 %v4614
        %v4936 = vunpack.c.l.b16 %v4615
        %v4937 = vunpack.c.h.b16 %v4615
        %v4938 = vunpack.c.l.b16 %v4616
        %v4939 = vunpack.c.h.b16 %v4616
        %v4940 = vunpack.c.l.b16 %v4617
        %v4941 = vunpack.c.h.b16 %v4617
        %v4942 = vunpack.c.l.b16 %v4618
        %v4943 = vunpack.c.h.b16 %v4618
        %v4944 = vunpack.c.l.b16 %v4619
        %v4945 = vunpack.c.h.b16 %v4619
        %v4946 = vunpack.c.l.b16 %v4620
        %v4947 = vunpack.c.h.b16 %v4620
        %v4948 = vunpack.c.l.b16 %v4621
        %v4949 = vunpack.c.h.b16 %v4621
        %v4950 = vunpack.c.l.b16 %v4622
        %v4951 = vunpack.c.h.b16 %v4622
        %v4952 = vunpack.c.l.b16 %v4623
        %v4953 = vunpack.c.h.b16 %v4623
        %v4954 = vunpack.c.l.b16 %v4624
        %v4955 = vunpack.c.h.b16 %v4624
        %v4956 = vunpack.c.l.b16 %v4625
        %v4957 = vunpack.c.h.b16 %v4625
        %v4958 = vunpack.c.l.b16 %v4626
        %v4959 = vunpack.c.h.b16 %v4626
        %v4960 = vunpack.c.l.b16 %v4627
        %v4961 = vunpack.c.h.b16 %v4627
        %v4962 = vunpack.c.l.b16 %v4628
        %v4963 = vunpack.c.h.b16 %v4628
        %v4964 = vunpack.c.l.b16 %v4629
        %v4965 = vunpack.c.h.b16 %v4629
        %v4966 = vunpack.c.l.b16 %v4630
        %v4967 = vunpack.c.h.b16 %v4630
        %v4968 = vunpack.c.l.b16 %v4631
        %v4969 = vunpack.c.h.b16 %v4631
        %v4970 = vunpack.c.l.b16 %v4632
        %v4971 = vunpack.c.h.b16 %v4632
        %v4972 = vunpack.c.l.b16 %v4633
        %v4973 = vunpack.c.h.b16 %v4633
        %v4974 = vunpack.c.l.b16 %v4634
        %v4975 = vunpack.c.h.b16 %v4634
        %v4976 = vunpack.c.l.b16 %v4635
        %v4977 = vunpack.c.h.b16 %v4635
        %v4978 = vunpack.c.l.b16 %v4636
        %v4979 = vunpack.c.h.b16 %v4636
        %v4980 = vunpack.c.l.b16 %v4637
        %v4981 = vunpack.c.h.b16 %v4637
        %v4982 = vunpack.c.l.b16 %v4638
        %v4983 = vunpack.c.h.b16 %v4638
        %v4984 = vunpack.c.l.b16 %v4639
        %v4985 = vunpack.c.h.b16 %v4639
        %v4986 = vunpack.c.l.b16 %v4640
        %v4987 = vunpack.c.h.b16 %v4640
        %v4988 = vunpack.c.l.b16 %v4641
        %v4989 = vunpack.c.h.b16 %v4641
        %v4990 = vunpack.c.l.b16 %v4642
        %v4991 = vunpack.c.h.b16 %v4642
        %v4992 = vunpack.c.l.b16 %v4643
        %v4993 = vunpack.c.h.b16 %v4643
        %v4994 = vunpack.c.l.b16 %v4644
        %v4995 = vunpack.c.h.b16 %v4644
        %v4996 = vunpack.c.l.b16 %v4645
        %v4997 = vunpack.c.h.b16 %v4645
        %v4998 = vunpack.c.l.b16 %v4646
        %v4999 = vunpack.c.h.b16 %v4646
        %v5000 = vunpack.c.l.b16 %v4647
        %v5001 = vunpack.c.h.b16 %v4647
        %v5002 = vunpack.c.l.b16 %v4648
        %v5003 = vunpack.c.h.b16 %v4648
        %v5004 = vunpack.c.l.b16 %v4649
        %v5005 = vunpack.c.h.b16 %v4649
        %v5006 = vunpack.c.l.b16 %v4650
        %v5007 = vunpack.c.h.b16 %v4650
        %v5008 = vunpack.c.l.b16 %v4651
        %v5009 = vunpack.c.h.b16 %v4651
        %v5010 = vunpack.c.l.b16 %v4652
        %v5011 = vunpack.c.h.b16 %v4652
        %v5012 = vunpack.c.l.b16 %v4653
        %v5013 = vunpack.c.h.b16 %v4653
        %v5014 = vunpack.c.l.b16 %v4654
        %v5015 = vunpack.c.h.b16 %v4654
        %v5016 = vunpack.c.l.b16 %v4655
        %v5017 = vunpack.c.h.b16 %v4655
        %v5018 = vunpack.c.l.b16 %v4656
        %v5019 = vunpack.c.h.b16 %v4656
        %v5020 = vunpack.c.l.b16 %v4657
        %v5021 = vunpack.c.h.b16 %v4657
        %v5022 = vunpack.c.l.b16 %v4658
        %v5023 = vunpack.c.h.b16 %v4658
        %v5024 = vunpack.c.l.b16 %v4659
        %v5025 = vunpack.c.h.b16 %v4659
        %v5026 = vunpack.c.l.b16 %v4660
        %v5027 = vunpack.c.h.b16 %v4660
        %v5028 = vunpack.c.l.b16 %v4661
        %v5029 = vunpack.c.h.b16 %v4661
        %v5030 = vunpack.c.l.b16 %v4662
        %v5031 = vunpack.c.h.b16 %v4662
        %v5032 = vunpack.c.l.b16 %v4663
        %v5033 = vunpack.c.h.b16 %v4663
        %v5034 = vunpack.c.l.b16 %v4664
        %v5035 = vunpack.c.h.b16 %v4664
        %v5036 = vunpack.c.l.b16 %v4665
        %v5037 = vunpack.c.h.b16 %v4665
        %v5038 = vunpack.c.l.b16 %v4666
        %v5039 = vunpack.c.h.b16 %v4666
        %v5040 = vunpack.c.l.b16 %v4667
        %v5041 = vunpack.c.h.b16 %v4667
        %v5042 = vunpack.c.l.b16 %v4668
        %v5043 = vunpack.c.h.b16 %v4668
        %v5044 = vunpack.c.l.b16 %v4669
        %v5045 = vunpack.c.h.b16 %v4669
        %v5046 = vunpack.c.l.b16 %v4670
        %v5047 = vunpack.c.h.b16 %v4670
        %v5048 = vunpack.c.l.b16 %v4671
        %v5049 = vunpack.c.h.b16 %v4671
        %v5050 = vunpack.c.l.b16 %v4672
        %v5051 = vunpack.c.h.b16 %v4672
        %v5052 = vunpack.c.l.b16 %v4673
        %v5053 = vunpack.c.h.b16 %v4673
        %v5054 = vunpack.c.l.b16 %v4674
        %v5055 = vunpack.c.h.b16 %v4674
        %v5056 = vunpack.c.l.b16 %v4675
        %v5057 = vunpack.c.h.b16 %v4675
        %v5058 = vunpack.c.l.b16 %v4676
        %v5059 = vunpack.c.h.b16 %v4676
        %v5060 = vunpack.c.l.b16 %v4677
        %v5061 = vunpack.c.h.b16 %v4677
        %v5062 = vunpack.c.l.b16 %v4678
        %v5063 = vunpack.c.h.b16 %v4678
        %v5064 = vunpack.c.l.b16 %v4679
        %v5065 = vunpack.c.h.b16 %v4679
        %v5066 = vunpack.c.l.b16 %v4680
        %v5067 = vunpack.c.h.b16 %v4680
        %v5068 = vunpack.c.l.b16 %v4681
        %v5069 = vunpack.c.h.b16 %v4681
        %v5070 = vunpack.c.l.b16 %v4682
        %v5071 = vunpack.c.h.b16 %v4682
        %v5072 = vunpack.c.l.b16 %v4683
        %v5073 = vunpack.c.h.b16 %v4683
        %v5074 = vunpack.c.l.b16 %v4684
        %v5075 = vunpack.c.h.b16 %v4684
        %v5076 = vunpack.c.l.b16 %v4685
        %v5077 = vunpack.c.h.b16 %v4685
        %v5078 = vunpack.c.l.b16 %v4686
        %v5079 = vunpack.c.h.b16 %v4686
        %v5080 = vunpack.c.l.b16 %v4687
        %v5081 = vunpack.c.h.b16 %v4687
        %v5082 = vunpack.c.l.b16 %v4688
        %v5083 = vunpack.c.h.b16 %v4688
        %v5084 = vunpack.c.l.b16 %v4689
        %v5085 = vunpack.c.h.b16 %v4689
        %v5086 = vunpack.c.l.b16 %v4690
        %v5087 = vunpack.c.h.b16 %v4690
        %v5088 = vunpack.c.l.b16 %v4691
        %v5089 = vunpack.c.h.b16 %v4691
        %v5090 = vunpack.c.l.b16 %v4692
        %v5091 = vunpack.c.h.b16 %v4692
        %v5092 = vunpack.c.l.b16 %v4693
        %v5093 = vunpack.c.h.b16 %v4693
        %v5094 = vunpack.c.l.b16 %v4694
        %v5095 = vunpack.c.h.b16 %v4694
        %v5096 = vunpack.c.l.b16 %v4695
        %v5097 = vunpack.c.h.b16 %v4695
        %v5098 = vunpack.c.l.b16 %v4696
        %v5099 = vunpack.c.h.b16 %v4696
        %v5100 = vunpack.c.l.b16 %v4697
        %v5101 = vunpack.c.h.b16 %v4697
        %v5102 = vunpack.c.l.b16 %v4698
        %v5103 = vunpack.c.h.b16 %v4698
        %v5104 = vunpack.c.l.b16 %v4699
        %v5105 = vunpack.c.h.b16 %v4699
        %v5106 = vpack.c.b16 %v4854, %v4850
        %v5107 = vpack.c.b16 %v4855, %v4851
        %v5108 = vpack.c.b16 %v4856, %v4852
        %v5109 = vpack.c.b16 %v4857, %v4853
        %v5110 = vpack.c.b16 %v4862, %v4858
        %v5111 = vpack.c.b16 %v4863, %v4859
        %v5112 = vpack.c.b16 %v4864, %v4860
        %v5113 = vpack.c.b16 %v4865, %v4861
        %v5114 = vpack.c.b16 %v4870, %v4866
        %v5115 = vpack.c.b16 %v4871, %v4867
        %v5116 = vpack.c.b16 %v4872, %v4868
        %v5117 = vpack.c.b16 %v4873, %v4869
        %v5118 = vpack.c.b16 %v4878, %v4874
        %v5119 = vpack.c.b16 %v4879, %v4875
        %v5120 = vpack.c.b16 %v4880, %v4876
        %v5121 = vpack.c.b16 %v4881, %v4877
        %v5122 = vpack.c.b16 %v4886, %v4882
        %v5123 = vpack.c.b16 %v4887, %v4883
        %v5124 = vpack.c.b16 %v4888, %v4884
        %v5125 = vpack.c.b16 %v4889, %v4885
        %v5126 = vpack.c.b16 %v4894, %v4890
        %v5127 = vpack.c.b16 %v4895, %v4891
        %v5128 = vpack.c.b16 %v4896, %v4892
        %v5129 = vpack.c.b16 %v4897, %v4893
        %v5130 = vpack.c.b16 %v4902, %v4898
        %v5131 = vpack.c.b16 %v4903, %v4899
        %v5132 = vpack.c.b16 %v4904, %v4900
        %v5133 = vpack.c.b16 %v4905, %v4901
        %v5134 = vpack.c.b16 %v4910, %v4906
        %v5135 = vpack.c.b16 %v4911, %v4907
        %v5136 = vpack.c.b16 %v4912, %v4908
        %v5137 = vpack.c.b16 %v4913, %v4909
        %v5138 = vpack.c.b16 %v4918, %v4914
        %v5139 = vpack.c.b16 %v4919, %v4915
        %v5140 = vpack.c.b16 %v4920, %v4916
        %v5141 = vpack.c.b16 %v4921, %v4917
        %v5142 = vpack.c.b16 %v4926, %v4922
        %v5143 = vpack.c.b16 %v4927, %v4923
        %v5144 = vpack.c.b16 %v4928, %v4924
        %v5145 = vpack.c.b16 %v4929, %v4925
        %v5146 = vpack.c.b16 %v4934, %v4930
        %v5147 = vpack.c.b16 %v4935, %v4931
        %v5148 = vpack.c.b16 %v4936, %v4932
        %v5149 = vpack.c.b16 %v4937, %v4933
        %v5150 = vpack.c.b16 %v4942, %v4938
        %v5151 = vpack.c.b16 %v4943, %v4939
        %v5152 = vpack.c.b16 %v4944, %v4940
        %v5153 = vpack.c.b16 %v4945, %v4941
        %v5154 = vpack.c.b16 %v4950, %v4946
        %v5155 = vpack.c.b16 %v4951, %v4947
        %v5156 = vpack.c.b16 %v4952, %v4948
        %v5157 = vpack.c.b16 %v4953, %v4949
        %v5158 = vpack.c.b16 %v4958, %v4954
        %v5159 = vpack.c.b16 %v4959, %v4955
        %v5160 = vpack.c.b16 %v4960, %v4956
        %v5161 = vpack.c.b16 %v4961, %v4957
        %v5162 = vpack.c.b16 %v4966, %v4962
        %v5163 = vpack.c.b16 %v4967, %v4963
        %v5164 = vpack.c.b16 %v4968, %v4964
        %v5165 = vpack.c.b16 %v4969, %v4965
        %v5166 = vpack.c.b16 %v4974, %v4970
        %v5167 = vpack.c.b16 %v4975, %v4971
        %v5168 = vpack.c.b16 %v4976, %v4972
        %v5169 = vpack.c.b16 %v4977, %v4973
        %v5170 = vpack.c.b16 %v4982, %v4978
        %v5171 = vpack.c.b16 %v4983, %v4979
        %v5172 = vpack.c.b16 %v4984, %v4980
        %v5173 = vpack.c.b16 %v4985, %v4981
        %v5174 = vpack.c.b16 %v4990, %v4986
        %v5175 = vpack.c.b16 %v4991, %v4987
        %v5176 = vpack.c.b16 %v4992, %v4988
        %v5177 = vpack.c.b16 %v4993, %v4989
        %v5178 = vpack.c.b16 %v4998, %v4994
        %v5179 = vpack.c.b16 %v4999, %v4995
        %v5180 = vpack.c.b16 %v5000, %v4996
        %v5181 = vpack.c.b16 %v5001, %v4997
        %v5182 = vpack.c.b16 %v5006, %v5002
        %v5183 = vpack.c.b16 %v5007, %v5003
        %v5184 = vpack.c.b16 %v5008, %v5004
        %v5185 = vpack.c.b16 %v5009, %v5005
        %v5186 = vpack.c.b16 %v5014, %v5010
        %v5187 = vpack.c.b16 %v5015, %v5011
        %v5188 = vpack.c.b16 %v5016, %v5012
        %v5189 = vpack.c.b16 %v5017, %v5013
        %v5190 = vpack.c.b16 %v5022, %v5018
        %v5191 = vpack.c.b16 %v5023, %v5019
        %v5192 = vpack.c.b16 %v5024, %v5020
        %v5193 = vpack.c.b16 %v5025, %v5021
        %v5194 = vpack.c.b16 %v5030, %v5026
        %v5195 = vpack.c.b16 %v5031, %v5027
        %v5196 = vpack.c.b16 %v5032, %v5028
        %v5197 = vpack.c.b16 %v5033, %v5029
        %v5198 = vpack.c.b16 %v5038, %v5034
        %v5199 = vpack.c.b16 %v5039, %v5035
        %v5200 = vpack.c.b16 %v5040, %v5036
        %v5201 = vpack.c.b16 %v5041, %v5037
        %v5202 = vpack.c.b16 %v5046, %v5042
        %v5203 = vpack.c.b16 %v5047, %v5043
        %v5204 = vpack.c.b16 %v5048, %v5044
        %v5205 = vpack.c.b16 %v5049, %v5045
        %v5206 = vpack.c.b16 %v5054, %v5050
        %v5207 = vpack.c.b16 %v5055, %v5051
        %v5208 = vpack.c.b16 %v5056, %v5052
        %v5209 = vpack.c.b16 %v5057, %v5053
        %v5210 = vpack.c.b16 %v5062, %v5058
        %v5211 = vpack.c.b16 %v5063, %v5059
        %v5212 = vpack.c.b16 %v5064, %v5060
        %v5213 = vpack.c.b16 %v5065, %v5061
        %v5214 = vpack.c.b16 %v5070, %v5066
        %v5215 = vpack.c.b16 %v5071, %v5067
        %v5216 = vpack.c.b16 %v5072, %v5068
        %v5217 = vpack.c.b16 %v5073, %v5069
        %v5218 = vpack.c.b16 %v5078, %v5074
        %v5219 = vpack.c.b16 %v5079, %v5075
        %v5220 = vpack.c.b16 %v5080, %v5076
        %v5221 = vpack.c.b16 %v5081, %v5077
        %v5222 = vpack.c.b16 %v5086, %v5082
        %v5223 = vpack.c.b16 %v5087, %v5083
        %v5224 = vpack.c.b16 %v5088, %v5084
        %v5225 = vpack.c.b16 %v5089, %v5085
        %v5226 = vpack.c.b16 %v5094, %v5090
        %v5227 = vpack.c.b16 %v5095, %v5091
        %v5228 = vpack.c.b16 %v5096, %v5092
        %v5229 = vpack.c.b16 %v5097, %v5093
        %v5230 = vpack.c.b16 %v5102, %v5098
        %v5231 = vpack.c.b16 %v5103, %v5099
        %v5232 = vpack.c.b16 %v5104, %v5100
        %v5233 = vpack.c.b16 %v5105, %v5101
        %5362 = vmatprep.subr.bf16.mxu0 %v5135
        %5363 = vmatpush1.bf16.msra.mxu0 %v5134
        %5364 = vmatprep.subr.bf16.mxu0 %v5131
        %5365 = vmatpush1.bf16.msra.mxu0 %v5130
        %5366 = vmatprep.subr.bf16.mxu0 %v5127
        %5367 = vmatpush1.bf16.msra.mxu0 %v5126
        %5368 = vmatprep.subr.bf16.mxu0 %v5123
        %5369 = vmatpush1.bf16.msra.mxu0 %v5122
        %5370 = vmatprep.subr.bf16.mxu0 %v5119
        %5371 = vmatpush1.bf16.msra.mxu0 %v5118
        %5372 = vmatprep.subr.bf16.mxu0 %v5115
        %5373 = vmatpush1.bf16.msra.mxu0 %v5114
        %5374 = vmatprep.subr.bf16.mxu0 %v5111
        %5375 = vmatpush1.bf16.msra.mxu0 %v5110
        %5376 = vmatprep.subr.bf16.mxu0 %v5107
        %5377 = vmatpush1.bf16.msra.mxu0 %v5106
        %5378 = vmatprep.subr.bf16.mxu0 %v5167
        %5379 = vmatpush2.bf16.msra.mxu0 %v5166
        %5380 = vmatprep.subr.bf16.mxu0 %v5163
        %5381 = vmatpush2.bf16.msra.mxu0 %v5162
        %5382 = vmatprep.subr.bf16.mxu0 %v5159
        %5383 = vmatpush2.bf16.msra.mxu0 %v5158
        %5384 = vmatprep.subr.bf16.mxu0 %v5155
        %5385 = vmatpush2.bf16.msra.mxu0 %v5154
        %5386 = vmatprep.subr.bf16.mxu0 %v5151
        %5387 = vmatpush2.bf16.msra.mxu0 %v5150
        %5388 = vmatprep.subr.bf16.mxu0 %v5147
        %5389 = vmatpush2.bf16.msra.mxu0 %v5146
        %5390 = vmatprep.subr.bf16.mxu0 %v5143
        %5391 = vmatpush2.bf16.msra.mxu0 %v5142
        %5392 = vmatprep.subr.bf16.mxu0 %v5139
        %5393 = vmatpush2.bf16.msra.mxu0 %v5138
        %5394 = vmatprep.mubr.bf16.mxu0 %v4569
        %5395 = vmatmul.mubr.bf16.gmra.mxu0 %v4568
        %v5396 = vpop.f32.mrf.mxu0
        %v5397 = vadd.f32 %v4705, %v5396
        %v5398 = vpop.f32.mrf.mxu0
        %v5399 = vadd.f32 %v4709, %v5398
        %v5400 = vpop.f32.mrf.mxu0
        %v5401 = vpop.f32.mrf.mxu0
        %5402 = vdwg.mxu0
        %5403 = vmatprep.subr.bf16.mxu0 %v5199
        %5404 = vmatpush1.bf16.msra.mxu0 %v5198
        %5405 = vmatprep.subr.bf16.mxu0 %v5195
        %5406 = vmatpush1.bf16.msra.mxu0 %v5194
        %5407 = vmatprep.subr.bf16.mxu0 %v5191
        %5408 = vmatpush1.bf16.msra.mxu0 %v5190
        %5409 = vmatprep.subr.bf16.mxu0 %v5187
        %5410 = vmatpush1.bf16.msra.mxu0 %v5186
        %5411 = vmatprep.subr.bf16.mxu0 %v5183
        %5412 = vmatpush1.bf16.msra.mxu0 %v5182
        %5413 = vmatprep.subr.bf16.mxu0 %v5179
        %5414 = vmatpush1.bf16.msra.mxu0 %v5178
        %5415 = vmatprep.subr.bf16.mxu0 %v5175
        %5416 = vmatpush1.bf16.msra.mxu0 %v5174
        %5417 = vmatprep.subr.bf16.mxu0 %v5171
        %5418 = vmatpush1.bf16.msra.mxu0 %v5170
        %5419 = vmatprep.subr.bf16.mxu0 %v5231
        %5420 = vmatpush2.bf16.msra.mxu0 %v5230
        %5421 = vmatprep.subr.bf16.mxu0 %v5227
        %5422 = vmatpush2.bf16.msra.mxu0 %v5226
        %5423 = vmatprep.subr.bf16.mxu0 %v5223
        %5424 = vmatpush2.bf16.msra.mxu0 %v5222
        %5425 = vmatprep.subr.bf16.mxu0 %v5219
        %5426 = vmatpush2.bf16.msra.mxu0 %v5218
        %5427 = vmatprep.subr.bf16.mxu0 %v5215
        %5428 = vmatpush2.bf16.msra.mxu0 %v5214
        %5429 = vmatprep.subr.bf16.mxu0 %v5211
        %5430 = vmatpush2.bf16.msra.mxu0 %v5210
        %5431 = vmatprep.subr.bf16.mxu0 %v5207
        %5432 = vmatpush2.bf16.msra.mxu0 %v5206
        %5433 = vmatprep.subr.bf16.mxu0 %v5203
        %5434 = vmatpush2.bf16.msra.mxu0 %v5202
        %5435 = vmatprep.mubr.bf16.mxu0 %v4571
        %5436 = vmatmul.mubr.bf16.gmra.mxu0 %v4570
        %v5437 = vpop.f32.mrf.mxu0
        %v5438 = vadd.f32 %v5397, %v5437
        %v5439 = vpop.f32.mrf.mxu0
        %v5440 = vadd.f32 %v5399, %v5439
        %v5441 = vpop.f32.mrf.mxu0
        %v5442 = vpop.f32.mrf.mxu0
        %5443 = vdwg.mxu0
        %5444 = vmatprep.subr.bf16.mxu0 %v5137
        %5445 = vmatpush1.bf16.msra.mxu0 %v5136
        %5446 = vmatprep.subr.bf16.mxu0 %v5133
        %5447 = vmatpush1.bf16.msra.mxu0 %v5132
        %5448 = vmatprep.subr.bf16.mxu0 %v5129
        %5449 = vmatpush1.bf16.msra.mxu0 %v5128
        %5450 = vmatprep.subr.bf16.mxu0 %v5125
        %5451 = vmatpush1.bf16.msra.mxu0 %v5124
        %5452 = vmatprep.subr.bf16.mxu0 %v5121
        %5453 = vmatpush1.bf16.msra.mxu0 %v5120
        %5454 = vmatprep.subr.bf16.mxu0 %v5117
        %5455 = vmatpush1.bf16.msra.mxu0 %v5116
        %5456 = vmatprep.subr.bf16.mxu0 %v5113
        %5457 = vmatpush1.bf16.msra.mxu0 %v5112
        %5458 = vmatprep.subr.bf16.mxu0 %v5109
        %5459 = vmatpush1.bf16.msra.mxu0 %v5108
        %5460 = vmatprep.subr.bf16.mxu0 %v5169
        %5461 = vmatpush2.bf16.msra.mxu0 %v5168
        %5462 = vmatprep.subr.bf16.mxu0 %v5165
        %5463 = vmatpush2.bf16.msra.mxu0 %v5164
        %5464 = vmatprep.subr.bf16.mxu0 %v5161
        %5465 = vmatpush2.bf16.msra.mxu0 %v5160
        %5466 = vmatprep.subr.bf16.mxu0 %v5157
        %5467 = vmatpush2.bf16.msra.mxu0 %v5156
        %5468 = vmatprep.subr.bf16.mxu0 %v5153
        %5469 = vmatpush2.bf16.msra.mxu0 %v5152
        %5470 = vmatprep.subr.bf16.mxu0 %v5149
        %5471 = vmatpush2.bf16.msra.mxu0 %v5148
        %5472 = vmatprep.subr.bf16.mxu0 %v5145
        %5473 = vmatpush2.bf16.msra.mxu0 %v5144
        %5474 = vmatprep.subr.bf16.mxu0 %v5141
        %5475 = vmatpush2.bf16.msra.mxu0 %v5140
        %5476 = vmatprep.mubr.bf16.mxu0 %v4569
        %5477 = vmatmul.mubr.bf16.gmra.mxu0 %v4568
        %v5478 = vpop.f32.mrf.mxu0
        %v5479 = vadd.f32 %v4713, %v5478
        %v5480 = vpop.f32.mrf.mxu0
        %v5481 = vadd.f32 %v4717, %v5480
        %v5482 = vpop.f32.mrf.mxu0
        %v5483 = vpop.f32.mrf.mxu0
        %5484 = vdwg.mxu0
        %5485 = vmatprep.subr.bf16.mxu0 %v5201
        %5486 = vmatpush1.bf16.msra.mxu0 %v5200
        %5487 = vmatprep.subr.bf16.mxu0 %v5197
        %5488 = vmatpush1.bf16.msra.mxu0 %v5196
        %5489 = vmatprep.subr.bf16.mxu0 %v5193
        %5490 = vmatpush1.bf16.msra.mxu0 %v5192
        %5491 = vmatprep.subr.bf16.mxu0 %v5189
        %5492 = vmatpush1.bf16.msra.mxu0 %v5188
        %5493 = vmatprep.subr.bf16.mxu0 %v5185
        %5494 = vmatpush1.bf16.msra.mxu0 %v5184
        %5495 = vmatprep.subr.bf16.mxu0 %v5181
        %5496 = vmatpush1.bf16.msra.mxu0 %v5180
        %5497 = vmatprep.subr.bf16.mxu0 %v5177
        %5498 = vmatpush1.bf16.msra.mxu0 %v5176
        %5499 = vmatprep.subr.bf16.mxu0 %v5173
        %5500 = vmatpush1.bf16.msra.mxu0 %v5172
        %5501 = vmatprep.subr.bf16.mxu0 %v5233
        %5502 = vmatpush2.bf16.msra.mxu0 %v5232
        %5503 = vmatprep.subr.bf16.mxu0 %v5229
        %5504 = vmatpush2.bf16.msra.mxu0 %v5228
        %5505 = vmatprep.subr.bf16.mxu0 %v5225
        %5506 = vmatpush2.bf16.msra.mxu0 %v5224
        %5507 = vmatprep.subr.bf16.mxu0 %v5221
        %5508 = vmatpush2.bf16.msra.mxu0 %v5220
        %5509 = vmatprep.subr.bf16.mxu0 %v5217
        %5510 = vmatpush2.bf16.msra.mxu0 %v5216
        %5511 = vmatprep.subr.bf16.mxu0 %v5213
        %5512 = vmatpush2.bf16.msra.mxu0 %v5212
        %5513 = vmatprep.subr.bf16.mxu0 %v5209
        %5514 = vmatpush2.bf16.msra.mxu0 %v5208
        %5515 = vmatprep.subr.bf16.mxu0 %v5205
        %5516 = vmatpush2.bf16.msra.mxu0 %v5204
        %5517 = vmatprep.mubr.bf16.mxu0 %v4571
        %5518 = vmatmul.mubr.bf16.gmra.mxu0 %v4570
        %v5519 = vpop.f32.mrf.mxu0
        %v5520 = vadd.f32 %v5479, %v5519
        %v5521 = vpop.f32.mrf.mxu0
        %v5522 = vadd.f32 %v5481, %v5521
        %v5523 = vpop.f32.mrf.mxu0
        %v5524 = vpop.f32.mrf.mxu0
        %5525 = vdwg.mxu0
        %v5526 = vadd.f32 %v4480, %v5438
        %v5527 = vadd.f32 %v4482, %v5440
        %v5528 = vadd.f32 %v4562, %v5520
        %v5529 = vadd.f32 %v4564, %v5522
        %v5530 = vxor.u32 %v5526, 2147483648
        %v5531 = vxor.u32 %v5527, 2147483648
        %v5532 = vxor.u32 %v5528, 2147483648
        %v5533 = vxor.u32 %v5529, 2147483648
        %v5534 = vmul.f32 %v5530, 1.442695
        %v5535 = vpow.pop %v5534
        %v5536 = vmul.f32 %v5531, 1.442695
        %v5537 = vpow.pop %v5536
        %v5538 = vmul.f32 %v5532, 1.442695
        %v5539 = vpow.pop %v5538
        %v5540 = vmul.f32 %v5533, 1.442695
        %v5541 = vpow.pop %v5540
        %v5542 = vadd.f32 %v5535, 1.0
        %v5543 = vadd.f32 %v5537, 1.0
        %v5544 = vadd.f32 %v5539, 1.0
        %v5545 = vadd.f32 %v5541, 1.0
        %v5546 = vrcp.pop %v5542
        %v5547 = vmul.f32 1.0, %v5546
        %v5548 = vrcp.pop %v5543
        %v5549 = vmul.f32 1.0, %v5548
        %v5550 = vrcp.pop %v5544
        %v5551 = vmul.f32 1.0, %v5550
        %v5552 = vrcp.pop %v5545
        %v5553 = vmul.f32 1.0, %v5552
        %v5554 = vld [vmem:[%s17] sm:$0xf]
        %v5556 = vlaneseq
        %v5557 = vshrl.u32 %v5556, 7
        %v5558 = vsub.s32 0, %v5557
        %v5559 = vrot.slane %v5554, %v5558
        %v5560 = vlaneseq
        %v5561 = vshrl.u32 %v5560, 7
        %v5562 = vsub.s32 1, %v5561
        %v5563 = vrot.slane %v5554, %v5562
        %v5564 = vlaneseq
        %v5565 = vshrl.u32 %v5564, 7
        %v5566 = vsub.s32 2, %v5565
        %v5567 = vrot.slane %v5554, %v5566
        %v5568 = vlaneseq
        %v5569 = vshrl.u32 %v5568, 7
        %v5570 = vsub.s32 3, %v5569
        %v5571 = vrot.slane %v5554, %v5570
        %v5576 = vmul.f32 %v5547, %v5559
        %v5577 = vmul.f32 %v5549, %v5563
        %v5578 = vmul.f32 %v5551, %v5567
        %v5579 = vmul.f32 %v5553, %v5571
        %v5580 = vadd.f32 %v5576, %v5577
        %v5581 = vadd.f32 %v5580, %v5578
        %v5582 = vadd.f32 %v5581, %v5579
        %5583 = vadd.xlane.f32.xlu0 %v5582
        %v5584 = vpop.xlane.xlu0 %5583
        %v5585 = vmul.f32 %v5584, %v807
        %v5586 = vmul.f32 %v5584, %v808
        %v5587 = vmul.f32 %v5584, %v809
        %v5588 = vmul.f32 %v5584, %v810
        %v5589 = vsub.f32 1.0, %v5584
        %v5590 = vmul.f32 %v5589, %v3610
        %v5591 = vmul.f32 %v5589, %v3611
        %v5592 = vmul.f32 %v5589, %v3612
        %v5593 = vmul.f32 %v5589, %v3613
        %v5594 = vadd.f32 %v5585, %v5590
        %v5595 = vadd.f32 %v5586, %v5591
        %v5596 = vadd.f32 %v5587, %v5592
        %v5597 = vadd.f32 %v5588, %v5593
        %5598 = vst [vmem:[%s805] sm:$0xff] %v5594
        %5599 = vst [vmem:[%s805 + $0x8] sm:$0xff] %v5595
        %5600 = vst [vmem:[%s805 + $0x10] sm:$0xff] %v5596
        %5601 = vst [vmem:[%s805 + $0x18] sm:$0xff] %v5597
        %s5602 = sand.u32 %s444, 1
        %s5603 = scalar_lea.sflag [#allocation4], %s5602
        %s5604 = sand.u32 %s444, 1
        %s5605 = smul.addr %s5604, 32
        %s5606 = scalar_lea.vmem [#allocation23], %s5605
        // Predicated region
        $region145: #{tpu_custom_call.1} parent=91 // pred_check
          %p5607 = pneg %p454
        $region146: #{tpu_custom_call.1} parent=91 // pred_check_branch
          %5609 = sbr.rel (%p5607) target = $region148
        $region147: #{tpu_custom_call.1} parent=91 // pred_region
          %s5611 = ssub.s32 512, 512
          %5612 = vsyncadd %s5603, %s5611
          %s5613 = smul.addr %s43, 4
          %s5614 = smul.addr %s5613, 128
          %s5615 = scalar_lea.hbm %s18, %s5614
          %s5617 = sshll.u32 %s5606, 4
          %s5618 = int_to_ptr.vmem [resolvable:$true] %s5617
          %5620 = dma.vmem_to_hbm [thread:$0]  %s5618, 512, %s5615, %s5603
        $region148: #{tpu_custom_call.1} parent=91 // pred_fallthru
          _
      $region92: #{tpu_custom_call.1} parent=5 // pred_fallthru
        _
      %p5621 = scmp.le.s32.totalorder 2, %s38
      // Predicated region
      $region149: #{tpu_custom_call.1} parent=5 // pred_check
        %p5622 = pneg %p5621
      $region150: #{tpu_custom_call.1} parent=5 // pred_check_branch
        %5624 = sbr.rel (%p5622) target = $region152
      $region151: #{tpu_custom_call.1} parent=5 // pred_region
        %s5625 = ssub.s32 %s38, 2
        // Predicated region
        $region153: #{tpu_custom_call.1} parent=151 // pred_check
          %p5626 = pneg %p460
        $region154: #{tpu_custom_call.1} parent=151 // pred_check_branch
          %5628 = sbr.rel (%p5626) target = $region156
        $region155: #{tpu_custom_call.1} parent=151 // pred_region
          %s5629 = sand.u32 %s445, 1
          %s5630 = scalar_lea.sflag [#allocation4], %s5629
          %s5631 = sand.u32 %s445, 1
          %s5632 = smul.addr %s5631, 32
          %s5633 = scalar_lea.vmem [#allocation23], %s5632
          %5634 = dma.done %s5630, 512
        $region156: #{tpu_custom_call.1} parent=151 // pred_fallthru
          _
      $region152: #{tpu_custom_call.1} parent=5 // pred_fallthru
        _
    $region6: #{tpu_custom_call.1} parent=1 // loop_footer
      %s42 = sadd.s32 1, %s38
    $region7: #{tpu_custom_call.1} parent=1 // loop_footer_branch
      %37 = sbr.rel target = $region3
    $region8: #{tpu_custom_call.1} parent=1 // loop_exit
      _
    %5635 = vsyncpa [#allocation3], 1
    %s5636 = scalar_lea.sflag [#allocation3], 1
    %5637 = vsyncpa %s5636, 1
    %5638 = vsyncpa [#allocation6], 1
    %s5639 = scalar_lea.sflag [#allocation6], 1
    %5640 = vsyncpa %s5639, 1
    %5641 = vsyncpa [#allocation9], 1
    %5642 = vsyncpa [#allocation12], 1
    %5643 = vsyncpa [#allocation15], 1
    %5644 = vsyncpa [#allocation18], 1
    %5645 = vsyncpa [#allocation21], 1
    %5646 = vsyncpa [#allocation4], 1
    %s5647 = scalar_lea.sflag [#allocation4], 1
    %5648 = vsyncpa %s5647, 1

</llo_original>
